<compile_context>
chip_gen: v6e
topology: v6e:2x2x1
jax: 0.10.0
libtpu: 0.0.40
codegen_flags: <defaults>
</compile_context>

<pallas_src>
import functools
import math

import numpy as np

import jax
import jax.numpy as jnp
from jax.experimental import pallas as pl
from jax.experimental.pallas import tpu as pltpu

N_TIME = 320            # see note above
GROUPS = 32
GROUPS_PAD = 128        # one-hot group matrices padded to 128 lanes (exact)
_MM_VMEM = 48 * 1024 * 1024


# ----------------------------------------------------------------------------
# tiling helpers
# ----------------------------------------------------------------------------
def _round_up(x, m):
    return (x + m - 1) // m * m


def _choose_tk(k):
    """K tile: single tile when small, else the largest tile whose padding is
    within ~10% of the best achievable (fewer K steps > tiny padding)."""
    kp = _round_up(k, 128)
    if kp <= 1024:
        return kp
    cands = [(tk, _round_up(k, tk))
             for tk in (1024, 896, 768, 640, 512, 384, 256, 128)]
    best = min(p for _, p in cands)
    slack = max(128, kp // 10)
    for tk, p in cands:                         # descending tk
        if p <= best + slack:
            return tk
    return 128


def _choose_tn(n):
    """N tile: a single full-extent (lane-dense) tile up to 1536, otherwise the
    largest 128-multiple that divides the padded N."""
    np128 = _round_up(n, 128)
    if np128 <= 1536:
        return np128
    for tn in (1280, 1024, 896, 768, 640, 512, 384, 256, 128):
        if np128 % tn == 0:
            return tn
    return 128


def _choose_tm(m):
    """M tile: as large as reasonable (weights stream ceil(M/tm) times)."""
    if m <= 256:
        return _round_up(m, 8)
    return min(512, _round_up(m, 128))


def _pick_rows(rows, cols, max_elems=512 * 1024):
    if rows <= 1024 and rows * cols <= max_elems:
        return rows
    for t in (512, 256, 128, 64, 32, 16, 8):
        if rows % t == 0 and t * cols <= max_elems:
            return t
    return rows


# ----------------------------------------------------------------------------
# Pallas kernel: tiled bf16 matmul with fused bias + optional SiLU epilogue
# ----------------------------------------------------------------------------
def _matmul_kernel(a_ref, b_ref, bias_ref, o_ref, acc_ref, *, activation):
    @pl.when(pl.program_id(2) == 0)
    def _():
        acc_ref[...] = jnp.zeros_like(acc_ref)

    acc_ref[...] += jnp.dot(a_ref[...], b_ref[...],
                            preferred_element_type=jnp.float32)

    @pl.when(pl.program_id(2) == pl.num_programs(2) - 1)
    def _():
        y = acc_ref[...] + bias_ref[...]
        if activation == "silu":
            y = y * jax.nn.sigmoid(y)
        o_ref[...] = y.astype(o_ref.dtype)


def matmul_prep(a, p, activation="none"):
    """a: [M, K] activations (any float dtype), p: prepared weights
    {'w': bf16 [Kp, Np], 'b': f32 [1, N]} -> f32 [M, N]."""
    m, k = a.shape
    kp, np_ = p["w"].shape
    n = p["b"].shape[1]
    tk, tn, tm = _choose_tk(k), _choose_tn(n), _choose_tm(m)
    mp = _round_up(m, tm)
    assert kp == _round_up(k, tk) and np_ == _round_up(n, tn), (k, n, kp, np_)

    a_p = a.astype(jnp.bfloat16)
    if mp != m or kp != k:
        a_p = jnp.pad(a_p, ((0, mp - m), (0, kp - k)))
    bias_p = p["b"] if np_ == n else jnp.pad(p["b"], ((0, 0), (0, np_ - n)))

    out = pl.pallas_call(
        functools.partial(_matmul_kernel, activation=activation),
        out_shape=jax.ShapeDtypeStruct((mp, np_), jnp.float32),
        grid=(mp // tm, np_ // tn, kp // tk),
        in_specs=[
            pl.BlockSpec((tm, tk), lambda i, j, kk: (i, kk)),
            pl.BlockSpec((tk, tn), lambda i, j, kk: (kk, j)),
            pl.BlockSpec((1, tn), lambda i, j, kk: (0, j)),
        ],
        out_specs=pl.BlockSpec((tm, tn), lambda i, j, kk: (i, j)),
        scratch_shapes=[pltpu.VMEM((tm, tn), jnp.float32)],
        compiler_params=pltpu.CompilerParams(
            dimension_semantics=("parallel", "parallel", "arbitrary"),
            vmem_limit_bytes=_MM_VMEM),
    )(a_p, p["w"], bias_p)
    if mp != m or np_ != n:
        out = out[:m, :n]
    return out


# ----------------------------------------------------------------------------
# Pallas kernel: fused GeGLU  (x @ Wa + ba) * GELU(x @ Wg + bg)
# ----------------------------------------------------------------------------
def _erf_approx(x):
    a1, a2, a3, a4, a5 = (0.254829592, -0.284496736, 1.421413741,
                          -1.453152027, 1.061405429)
    pp = 0.3275911
    sgn = jnp.where(x >= 0.0, 1.0, -1.0)
    ax = jnp.abs(x)
    t = 1.0 / (1.0 + pp * ax)
    poly = ((((a5 * t + a4) * t + a3) * t + a2) * t + a1) * t
    return sgn * (1.0 - poly * jnp.exp(-ax * ax))


def _geglu_kernel(a_ref, wa_ref, wg_ref, ba_ref, bg_ref, o_ref, acc_a, acc_g):
    @pl.when(pl.program_id(2) == 0)
    def _():
        acc_a[...] = jnp.zeros_like(acc_a)
        acc_g[...] = jnp.zeros_like(acc_g)

    a = a_ref[...]
    acc_a[...] += jnp.dot(a, wa_ref[...], preferred_element_type=jnp.float32)
    acc_g[...] += jnp.dot(a, wg_ref[...], preferred_element_type=jnp.float32)

    @pl.when(pl.program_id(2) == pl.num_programs(2) - 1)
    def _():
        val = acc_a[...] + ba_ref[...]
        gate = acc_g[...] + bg_ref[...]
        gelu_gate = 0.5 * gate * (1.0 + _erf_approx(gate * 0.7071067811865476))
        o_ref[...] = (val * gelu_gate).astype(o_ref.dtype)


def geglu(a, p):
    m, k = a.shape
    kp, np_ = p["wa"].shape
    n = p["ba"].shape[1]
    tk, tn, tm = _choose_tk(k), _choose_tn(n), _choose_tm(m)
    mp = _round_up(m, tm)
    assert kp == _round_up(k, tk) and np_ == _round_up(n, tn)

    a_p = a.astype(jnp.bfloat16)
    if mp != m or kp != k:
        a_p = jnp.pad(a_p, ((0, mp - m), (0, kp - k)))
    ba = p["ba"] if np_ == n else jnp.pad(p["ba"], ((0, 0), (0, np_ - n)))
    bg = p["bg"] if np_ == n else jnp.pad(p["bg"], ((0, 0), (0, np_ - n)))

    out = pl.pallas_call(
        _geglu_kernel,
        out_shape=jax.ShapeDtypeStruct((mp, np_), jnp.float32),
        grid=(mp // tm, np_ // tn, kp // tk),
        in_specs=[
            pl.BlockSpec((tm, tk), lambda i, j, kk: (i, kk)),
            pl.BlockSpec((tk, tn), lambda i, j, kk: (kk, j)),
            pl.BlockSpec((tk, tn), lambda i, j, kk: (kk, j)),
            pl.BlockSpec((1, tn), lambda i, j, kk: (0, j)),
            pl.BlockSpec((1, tn), lambda i, j, kk: (0, j)),
        ],
        out_specs=pl.BlockSpec((tm, tn), lambda i, j, kk: (i, j)),
        scratch_shapes=[pltpu.VMEM((tm, tn), jnp.float32),
                        pltpu.VMEM((tm, tn), jnp.float32)],
        compiler_params=pltpu.CompilerParams(
            dimension_semantics=("parallel", "parallel", "arbitrary"),
            vmem_limit_bytes=_MM_VMEM),
    )(a_p, p["wa"], p["wg"], ba, bg)
    if mp != m or np_ != n:
        out = out[:m, :n]
    return out


# ----------------------------------------------------------------------------
# Pallas kernel: fused single-pass GroupNorm (+ optional SiLU), bf16 output.
# Group stats via one-hot channel->group matmuls (no in-kernel reshape);
# variance uses the subtract-mean form (slab is VMEM resident so it is cheap).
# ----------------------------------------------------------------------------
def _gn_fused_kernel(x_ref, gmat_ref, gmatt_ref, g_ref, b_ref, o_ref, *,
                     eps, count, apply_silu):
    x = x_ref[0].astype(jnp.float32)                          # [HW, C]
    s = jnp.sum(x, axis=0, keepdims=True)                     # [1, C]
    gsum = jnp.dot(s, gmat_ref[...], preferred_element_type=jnp.float32)
    mean_c = jnp.dot(gsum * (1.0 / count), gmatt_ref[...],
                     preferred_element_type=jnp.float32)      # [1, C]
    d = x - mean_c
    ssd = jnp.sum(d * d, axis=0, keepdims=True)               # [1, C]
    gvar = jnp.dot(ssd, gmat_ref[...],
                   preferred_element_type=jnp.float32) * (1.0 / count)
    inv_c = jnp.dot(jax.lax.rsqrt(gvar + eps), gmatt_ref[...],
                    preferred_element_type=jnp.float32)       # [1, C]
    y = d * inv_c * g_ref[...] + b_ref[...]
    if apply_silu:
        y = y * jax.nn.sigmoid(y)
    o_ref[0] = y.astype(o_ref.dtype)


def group_norm(p, x, eps=1e-5, silu=False):
    n, h, w, c = x.shape
    hw = h * w
    x2 = x.reshape(n, hw, c)
    count = float(hw * (c // GROUPS))
    vmem = (2 * hw * c * x2.dtype.itemsize + 2 * hw * c * 2
            + 2 * c * GROUPS_PAD * 4 + (4 << 20))

    y = pl.pallas_call(
        functools.partial(_gn_fused_kernel, eps=eps, count=count,
                          apply_silu=silu),
        out_shape=jax.ShapeDtypeStruct((n, hw, c), jnp.bfloat16),
        grid=(n,),
        in_specs=[
            pl.BlockSpec((1, hw, c), lambda b: (b, 0, 0)),
            pl.BlockSpec((c, GROUPS_PAD), lambda b: (0, 0)),
            pl.BlockSpec((GROUPS_PAD, c), lambda b: (0, 0)),
            pl.BlockSpec((1, c), lambda b: (0, 0)),
            pl.BlockSpec((1, c), lambda b: (0, 0)),
        ],
        out_specs=pl.BlockSpec((1, hw, c), lambda b: (b, 0, 0)),
        compiler_params=pltpu.CompilerParams(
            dimension_semantics=("parallel",),
            vmem_limit_bytes=max(vmem, 16 << 20)),
    )(x2, p["gmat"], p["gmatt"], p["gamma"], p["beta"])
    return y.reshape(n, h, w, c)


# ----------------------------------------------------------------------------
# Pallas kernel: LayerNorm over last axis of [B, S, C], tiled over tokens
# ----------------------------------------------------------------------------
def _ln_kernel(x_ref, g_ref, b_ref, o_ref, *, eps):
    x = x_ref[0].astype(jnp.float32)                          # [ts, C]
    mean = jnp.mean(x, axis=-1, keepdims=True)
    d = x - mean
    var = jnp.mean(d * d, axis=-1, keepdims=True)
    y = d * jax.lax.rsqrt(var + eps)
    o_ref[0] = (y * g_ref[...] + b_ref[...]).astype(o_ref.dtype)


def layer_norm(p, x, eps=1e-5):
    b, s, c = x.shape
    ts = _pick_rows(s, c)
    return pl.pallas_call(
        functools.partial(_ln_kernel, eps=eps),
        out_shape=jax.ShapeDtypeStruct((b, s, c), jnp.bfloat16),
        grid=(b, s // ts),
        in_specs=[
            pl.BlockSpec((1, ts, c), lambda i, j: (i, j, 0)),
            pl.BlockSpec((1, c), lambda i, j: (0, 0)),
            pl.BlockSpec((1, c), lambda i, j: (0, 0)),
        ],
        out_specs=pl.BlockSpec((1, ts, c), lambda i, j: (i, j, 0)),
        compiler_params=pltpu.CompilerParams(
            dimension_semantics=("parallel", "parallel")),
    )(x, p["gamma"], p["beta"])


# ----------------------------------------------------------------------------
# Pallas kernel: attention tiled over (batch*head, q_block); full (padded,
# masked) KV per step, K pre-transposed, head dim zero-padded to 128 lanes.
# ----------------------------------------------------------------------------
def _attn_kernel(q_ref, kt_ref, v_ref, o_ref, *, scale, l_actual, l_padded):
    q = q_ref[0]                                              # [tq, Dp] bf16
    s = jnp.dot(q, kt_ref[0], preferred_element_type=jnp.float32) * scale
    if l_actual < l_padded:
        mask = jax.lax.broadcasted_iota(jnp.int32, s.shape, 1) < l_actual
        s = jnp.where(mask, s, -1e30)
    m = jnp.max(s, axis=-1, keepdims=True)
    e = jnp.exp(s - m)
    denom = jnp.sum(e, axis=-1, keepdims=True)
    p = e * pl.reciprocal(denom, approx=True)
    o_ref[0] = jnp.dot(p.astype(v_ref.dtype), v_ref[0],
                       preferred_element_type=jnp.float32)


def _attention_heads(q, k, v, n_head):
    b, s, c = q.shape
    l = k.shape[1]
    d = c // n_head
    dp = _round_up(d, 128)
    lp = _round_up(l, 128)
    tq = min(256, _round_up(s, 8))
    sp = _round_up(s, tq)

    qh = q.reshape(b, s, n_head, d).transpose(0, 2, 1, 3).reshape(
        b * n_head, s, d)
    kt = k.reshape(b, l, n_head, d).transpose(0, 2, 3, 1).reshape(
        b * n_head, d, l)                                     # K pre-transposed
    vh = v.reshape(b, l, n_head, d).transpose(0, 2, 1, 3).reshape(
        b * n_head, l, d)
    qh = jnp.pad(qh.astype(jnp.bfloat16), ((0, 0), (0, sp - s), (0, dp - d)))
    kt = jnp.pad(kt.astype(jnp.bfloat16), ((0, 0), (0, dp - d), (0, lp - l)))
    vh = jnp.pad(vh.astype(jnp.bfloat16), ((0, 0), (0, lp - l), (0, dp - d)))

    out = pl.pallas_call(
        functools.partial(_attn_kernel, scale=1.0 / math.sqrt(d),
                          l_actual=l, l_padded=lp),
        out_shape=jax.ShapeDtypeStruct((b * n_head, sp, dp), jnp.float32),
        grid=(b * n_head, sp // tq),
        in_specs=[pl.BlockSpec((1, tq, dp), lambda h, i: (h, i, 0)),
                  pl.BlockSpec((1, dp, lp), lambda h, i: (h, 0, 0)),
                  pl.BlockSpec((1, lp, dp), lambda h, i: (h, 0, 0))],
        out_specs=pl.BlockSpec((1, tq, dp), lambda h, i: (h, i, 0)),
        compiler_params=pltpu.CompilerParams(
            dimension_semantics=("parallel", "parallel"),
            vmem_limit_bytes=_MM_VMEM),
    )(qh, kt, vh)
    out = out[:, :s, :d]
    return out.reshape(b, n_head, s, d).transpose(0, 2, 1, 3).reshape(b, s, c)


# ----------------------------------------------------------------------------
# conv2d = bf16 im2col (fused under per-block jit) + Pallas matmul
# TODO(synk): tap-indexed K grid (manual DMA of shifted slabs) instead of
# materializing the k*k-expanded patch tensor.
# ----------------------------------------------------------------------------
def _conv2d(p, x, *, ksize, stride, padding):
    b, h, w, cin = x.shape
    cout = p["b"].shape[1]
    xb = x.astype(jnp.bfloat16)
    oh = (h + 2 * padding - ksize) // stride + 1
    ow = (w + 2 * padding - ksize) // stride + 1
    if ksize == 1 and stride == 1 and padding == 0:
        patches = xb
    else:
        xp = jnp.pad(xb, ((0, 0), (padding, padding), (padding, padding),
                          (0, 0)))
        cols = []
        for kh in range(ksize):
            for kw in range(ksize):
                cols.append(xp[:, kh:kh + oh * stride:stride,
                               kw:kw + ow * stride:stride, :])
        patches = jnp.concatenate(cols, axis=-1)      # [B, OH, OW, k*k*Cin] bf16
    out = matmul_prep(patches.reshape(b * oh * ow, ksize * ksize * cin), p)
    return out.reshape(b, oh, ow, cout)


# ----------------------------------------------------------------------------
# model blocks (wiring in JAX, heavy math in the Pallas kernels above)
# ----------------------------------------------------------------------------
def _self_attention(p, x, n_head):
    b, s, c = x.shape
    qkv = matmul_prep(x.reshape(b * s, c), p["in"])
    q, k, v = jnp.split(qkv.reshape(b, s, 3 * c), 3, axis=-1)
    out = _attention_heads(q, k, v, n_head)
    return matmul_prep(out.reshape(b * s, c), p["out"]).reshape(b, s, c)


def _cross_attention(p, x, context, n_head):
    b, s, c = x.shape
    l, dc = context.shape[1], context.shape[2]
    q = matmul_prep(x.reshape(b * s, c), p["q"]).reshape(b, s, c)
    k = matmul_prep(context.reshape(b * l, dc), p["k"]).reshape(b, l, c)
    v = matmul_prep(context.reshape(b * l, dc), p["v"]).reshape(b, l, c)
    out = _attention_heads(q, k, v, n_head)
    return matmul_prep(out.reshape(b * s, c), p["out"]).reshape(b, s, c)


def _attention_block(p, x, context, *, n_head):
    residue_long = x
    h = group_norm(p["gn"], x, eps=1e-6, silu=False)
    h = _conv2d(p["conv_input"], h, ksize=1, stride=1, padding=0)
    n, hh, ww, c = h.shape
    h = h.reshape(n, hh * ww, c)
    res_short = h
    h = layer_norm(p["ln1"], h)
    h = _self_attention(p["attn1"], h, n_head)
    h = h + res_short
    res_short = h
    h = layer_norm(p["ln2"], h)
    h = _cross_attention(p["attn2"], h, context, n_head)
    h = h + res_short
    res_short = h
    h = layer_norm(p["ln3"], h)
    h = geglu(h.reshape(n * hh * ww, c), p["geglu1"])   # fused a*GELU(gate)
    h = matmul_prep(h, p["geglu2"]).reshape(n, hh * ww, c)
    h = h + res_short
    h = h.reshape(n, hh, ww, c)
    h = _conv2d(p["conv_output"], h, ksize=1, stride=1, padding=0)
    return h + residue_long


def _residual_block(p, feature, time_emb):
    residue = feature
    h = group_norm(p["gn_feat"], feature, eps=1e-5, silu=True)
    h = _conv2d(p["conv_feature"], h, ksize=3, stride=1, padding=1)
    t = jax.nn.silu(time_emb)                           # [1, n_time]
    t = matmul_prep(t, p["lin_time"])                   # [1, Cout]
    h = h + t[:, None, None, :]
    h = group_norm(p["gn_merged"], h, eps=1e-5, silu=True)
    h = _conv2d(p["conv_merged"], h, ksize=3, stride=1, padding=1)
    if "res_conv" in p:
        residue = _conv2d(p["res_conv"], residue, ksize=1, stride=1, padding=0)
    return h + residue


def _upsample(p, x):
    # TODO(synk): fold the nearest-2x upsample into the conv's tap indexing.
    x = jnp.repeat(jnp.repeat(x, 2, axis=1), 2, axis=2)
    return _conv2d(p, x, ksize=3, stride=1, padding=1)


def _time_embedding(p, t):
    h = matmul_prep(t, p["lin1"], activation="silu")
    return matmul_prep(h, p["lin2"], activation="silu")


def _final_layer(p, x):
    h = group_norm(p["gn"], x, eps=1e-5, silu=True)
    return _conv2d(p["conv"], h, ksize=3, stride=1, padding=1)


# per-block jit: fuses all glue inside a block; jit's shape cache dedups
# compilation across repeated identical blocks.
conv2d_jit = jax.jit(_conv2d, static_argnames=("ksize", "stride", "padding"))
residual_block_jit = jax.jit(_residual_block)
attention_block_jit = jax.jit(_attention_block, static_argnames=("n_head",))
upsample_jit = jax.jit(_upsample)
time_embedding_jit = jax.jit(_time_embedding)
final_layer_jit = jax.jit(_final_layer)


def apply_switch(layers, x, context, time_emb):
    for kind, p, cfg in layers:
        if kind == "conv":
            x = conv2d_jit(p, x, ksize=cfg["ksize"], stride=cfg["stride"],
                           padding=cfg["padding"])
        elif kind == "res":
            x = residual_block_jit(p, x, time_emb)
        elif kind == "attn":
            x = attention_block_jit(p, x, context, n_head=cfg["n_head"])
        elif kind == "up":
            x = upsample_jit(p, x)
    return x


def diffusion_forward(params, latent, context, time):
    # public API takes NCHW latent (PyTorch); internally NHWC.
    x = jnp.transpose(latent, (0, 2, 3, 1)).astype(jnp.float32)
    context = context.astype(jnp.float32)
    t_emb = time_embedding_jit(params["time_embedding"],
                               time.astype(jnp.float32))
    skips = []
    for layers in params["unet"]["encoders"]:
        x = apply_switch(layers, x, context, t_emb)
        skips.append(x)
    x = apply_switch(params["unet"]["bottleneck"], x, context, t_emb)
    for layers in params["unet"]["decoders"]:
        x = jnp.concatenate([x, skips.pop()], axis=-1)
        x = apply_switch(layers, x, context, t_emb)
    out = final_layer_jit(params["final"], x)
    return jnp.transpose(out, (0, 3, 1, 2))


# ----------------------------------------------------------------------------
# deterministic parameter initialization (synthetic; shapes from __init__).
# Weights are reshaped -> padded to tile multiples -> cast to bf16 ONCE here.
# GroupNorm one-hot matrices are built EAGERLY (numpy) — no tracer leaks.
# ----------------------------------------------------------------------------
class ParamGen:
    def __init__(self, key):
        self._key = key
        self._i = 0

    def normal(self, shape, scale=1.0):
        self._i += 1
        k = jax.random.fold_in(self._key, self._i)
        return scale * jax.random.normal(k, shape, jnp.float32)


def _prep_matmul_weights(w, b):
    k, n = w.shape
    tk, tn = _choose_tk(k), _choose_tn(n)
    kp, np_ = _round_up(k, tk), _round_up(n, tn)
    wp = jnp.pad(w, ((0, kp - k), (0, np_ - n))).astype(jnp.bfloat16)
    return {"w": wp, "b": b.reshape(1, n).astype(jnp.float32)}


def init_linear(pg, d_in, d_out, bias=True):
    w = pg.normal((d_in, d_out), scale=1.0 / math.sqrt(d_in))
    b = (pg.normal((d_out,), scale=0.02) if bias
         else jnp.zeros((d_out,), jnp.float32))
    return _prep_matmul_weights(w, b)


def init_conv(pg, cin, cout, k):
    w = pg.normal((k, k, cin, cout),
                  scale=1.0 / math.sqrt(cin * k * k)).reshape(k * k * cin, cout)
    b = pg.normal((cout,), scale=0.02)
    return _prep_matmul_weights(w, b)


def init_geglu(pg, c):
    pa = _prep_matmul_weights(pg.normal((c, 4 * c), scale=1.0 / math.sqrt(c)),
                              pg.normal((4 * c,), scale=0.02))
    pgt = _prep_matmul_weights(pg.normal((c, 4 * c), scale=1.0 / math.sqrt(c)),
                               pg.normal((4 * c,), scale=0.02))
    return {"wa": pa["w"], "ba": pa["b"], "wg": pgt["w"], "bg": pgt["b"]}


def init_norm(c):
    return {"gamma": jnp.ones((1, c), jnp.float32),
            "beta": jnp.zeros((1, c), jnp.float32)}


_GMAT_CACHE = {}


def _group_mats(c):
    """Eagerly-built one-hot channel->group matrices (padded to 128 groups)."""
    if c not in _GMAT_CACHE:
        grp = np.arange(c) // (c // GROUPS)
        gm = (grp[:, None] == np.arange(GROUPS_PAD)[None, :]).astype(np.float32)
        _GMAT_CACHE[c] = (jnp.asarray(gm), jnp.asarray(np.ascontiguousarray(gm.T)))
    return _GMAT_CACHE[c]


def init_group_norm(c):
    p = init_norm(c)
    gmat, gmatt = _group_mats(c)
    p["gmat"] = gmat
    p["gmatt"] = gmatt
    return p


def init_residual_block(pg, cin, cout, n_time=N_TIME):
    p = {"gn_feat": init_group_norm(cin),
         "conv_feature": init_conv(pg, cin, cout, 3),
         "lin_time": init_linear(pg, n_time, cout),
         "gn_merged": init_group_norm(cout),
         "conv_merged": init_conv(pg, cout, cout, 3)}
    if cin != cout:
        p["res_conv"] = init_conv(pg, cin, cout, 1)
    return p


def init_attention_block(pg, n_head, n_embd, d_ctx=768):
    c = n_head * n_embd
    return {"gn": init_group_norm(c),
            "conv_input": init_conv(pg, c, c, 1),
            "ln1": init_norm(c),
            "attn1": {"in": init_linear(pg, c, 3 * c, bias=False),
                      "out": init_linear(pg, c, c, bias=True)},
            "ln2": init_norm(c),
            "attn2": {"q": init_linear(pg, c, c, bias=False),
                      "k": init_linear(pg, d_ctx, c, bias=False),
                      "v": init_linear(pg, d_ctx, c, bias=False),
                      "out": init_linear(pg, c, c, bias=True)},
            "ln3": init_norm(c),
            "geglu1": init_geglu(pg, c),
            "geglu2": init_linear(pg, 4 * c, c),
            "conv_output": init_conv(pg, c, c, 1)}


def init_unet(pg):
    def res(cin, cout):
        return ("res", init_residual_block(pg, cin, cout), None)

    def attn(h, e):
        return ("attn", init_attention_block(pg, h, e), {"n_head": h})

    def conv(cin, cout, stride):
        return ("conv", init_conv(pg, cin, cout, 3),
                {"ksize": 3, "stride": stride, "padding": 1})

    def up(c):
        return ("up", init_conv(pg, c, c, 3), None)

    encoders = [
        [conv(4, 320, 1)],
        [res(320, 320), attn(8, 40)],
        [res(320, 320), attn(8, 40)],
        [conv(320, 320, 2)],
        [res(320, 640), attn(8, 80)],
        [res(640, 640), attn(8, 80)],
        [conv(640, 640, 2)],
        [res(640, 1280), attn(8, 160)],
        [res(1280, 1280), attn(8, 160)],
        [conv(1280, 1280, 2)],
        [res(1280, 1280)],
        [res(1280, 1280)],
    ]
    bottleneck = [res(1280, 1280), attn(8, 160), res(1280, 1280)]
    decoders = [
        [res(2560, 1280)],
        [res(2560, 1280)],
        [res(2560, 1280), up(1280)],
        [res(2560, 1280), attn(8, 160)],
        [res(2560, 1280), attn(8, 160)],
        [res(1920, 1280), attn(8, 160), up(1280)],
        [res(1920, 640), attn(8, 80)],
        [res(1280, 640), attn(8, 80)],
        [res(960, 640), attn(8, 80), up(640)],
        [res(960, 320), attn(8, 40)],
        [res(640, 320), attn(8, 40)],
        [res(640, 320), attn(8, 40)],
    ]
    return {"encoders": encoders, "bottleneck": bottleneck, "decoders": decoders}


def init_diffusion(key):
    pg = ParamGen(key)
    return {"time_embedding": {"lin1": init_linear(pg, 320, 4 * 320),
                               "lin2": init_linear(pg, 4 * 320, 320)},
            "unet": init_unet(pg),
            "final": {"gn": init_group_norm(320),
                      "conv": init_conv(pg, 320, 4, 3)}}


# ----------------------------------------------------------------------------
if __name__ == "__main__":
    key = jax.random.PRNGKey(0)
    k_lat, k_ctx, k_t, k_params = jax.random.split(key, 4)

    params = init_diffusion(k_params)

    B, H8, W8 = 1, 16, 16          # latent is [B, 4, H/8, W/8]
    latent = jax.random.normal(k_lat, (B, 4, H8, W8), jnp.float32)
    context = jax.random.normal(k_ctx, (B, 8, 768), jnp.float32)   # [B, seq, 768]
    time = jax.random.normal(k_t, (1, 320), jnp.float32)           # [1, 320]

    out = diffusion_forward(params, latent, context, time)
    out = jax.block_until_ready(out)

    assert out.shape == (B, 4, H8, W8), out.shape
    assert bool(jnp.all(jnp.isfinite(out)))
    print("KERNEL_OK")
</pallas_src>

<mosaic_0001>
module attributes {stable_mosaic.version = 11 : i64} {
  func.func @_matmul_kernel(%arg0: i32, %arg1: i32, %arg2: i32, %arg3: memref<8x384xbf16, #tpu.memory_space<vmem>>, %arg4: memref<384x1280xbf16, #tpu.memory_space<vmem>>, %arg5: memref<1x1280xf32, #tpu.memory_space<vmem>>, %arg6: memref<8x1280xf32, #tpu.memory_space<vmem>>, %arg7: memref<8x1280xf32, #tpu.memory_space<vmem>>) attributes {dimension_semantics = [#tpu.dimension_semantics<parallel>, #tpu.dimension_semantics<parallel>, #tpu.dimension_semantics<arbitrary>], iteration_bounds = array<i64: 1, 1, 1>, scalar_prefetch = 0 : i64, scratch_operands = 1 : i64, tpu.core_type = #tpu.core_type<tc>, window_params = [{transform_indices = @transform_0, window_bounds = array<i64: 8, 384>}, {transform_indices = @transform_1, window_bounds = array<i64: 384, 1280>}, {transform_indices = @transform_2, window_bounds = array<i64: 1, 1280>}, {transform_indices = @transform_3, window_bounds = array<i64: 8, 1280>}]} {
    %c0_i32 = arith.constant 0 : i32
    %0 = arith.cmpi eq, %arg2, %c0_i32 : i32
    %1 = arith.extui %0 : i1 to i32
    %c0_i32_0 = arith.constant 0 : i32
    %2 = arith.cmpi ne, %1, %c0_i32_0 : i32
    scf.if %2 {
      %cst_10 = arith.constant 0.000000e+00 : f32
      %12 = vector.broadcast %cst_10 : f32 to vector<8x1280xf32>
      %c0_11 = arith.constant 0 : index
      %c0_12 = arith.constant 0 : index
      %13 = vector.load %arg7[%c0_11, %c0_12] : memref<8x1280xf32, #tpu.memory_space<vmem>>, vector<8x1280xf32>
      tpu.vector_store %arg7[%c0_11, %c0_12], %12 {strides = array<i32>} : memref<8x1280xf32, #tpu.memory_space<vmem>>, vector<8x1280xf32>,
    } else {
    }
    %c0 = arith.constant 0 : index
    %c0_1 = arith.constant 0 : index
    %3 = vector.load %arg7[%c0, %c0_1] : memref<8x1280xf32, #tpu.memory_space<vmem>>, vector<8x1280xf32>
    %c0_2 = arith.constant 0 : index
    %c0_3 = arith.constant 0 : index
    %4 = vector.load %arg3[%c0_2, %c0_3] : memref<8x384xbf16, #tpu.memory_space<vmem>>, vector<8x384xbf16>
    %c0_4 = arith.constant 0 : index
    %c0_5 = arith.constant 0 : index
    %5 = vector.load %arg4[%c0_4, %c0_5] : memref<384x1280xbf16, #tpu.memory_space<vmem>>, vector<384x1280xbf16>
    %cst = arith.constant dense<0.000000e+00> : vector<8x1280xf32>
    %6 = tpu.matmul %4, %5, %cst {dimension_numbers = #tpu.dot_dimension_numbers<[1], [0], [0], [1], [0, 0, 1, 1], [], []>} : vector<8x384xbf16>, vector<384x1280xbf16>, vector<8x1280xf32> -> vector<8x1280xf32>
    %7 = arith.addf %3, %6 : vector<8x1280xf32>
    %c0_6 = arith.constant 0 : index
    %c0_7 = arith.constant 0 : index
    %8 = vector.load %arg7[%c0_6, %c0_7] : memref<8x1280xf32, #tpu.memory_space<vmem>>, vector<8x1280xf32>
    tpu.vector_store %arg7[%c0_6, %c0_7], %7 {strides = array<i32>} : memref<8x1280xf32, #tpu.memory_space<vmem>>, vector<8x1280xf32>,
    %c0_i32_8 = arith.constant 0 : i32
    %9 = arith.cmpi eq, %arg2, %c0_i32_8 : i32
    %10 = arith.extui %9 : i1 to i32
    %c0_i32_9 = arith.constant 0 : i32
    %11 = arith.cmpi ne, %10, %c0_i32_9 : i32
    scf.if %11 {
      %c0_10 = arith.constant 0 : index
      %c0_11 = arith.constant 0 : index
      %12 = vector.load %arg7[%c0_10, %c0_11] : memref<8x1280xf32, #tpu.memory_space<vmem>>, vector<8x1280xf32>
      %c0_12 = arith.constant 0 : index
      %c0_13 = arith.constant 0 : index
      %13 = vector.load %arg5[%c0_12, %c0_13] : memref<1x1280xf32, #tpu.memory_space<vmem>>, vector<1x1280xf32>
      %14 = vector.broadcast %13 : vector<1x1280xf32> to vector<8x1280xf32>
      %15 = arith.addf %12, %14 : vector<8x1280xf32>
      %16 = arith.negf %15 : vector<8x1280xf32>
      %17 = math.exp %16 : vector<8x1280xf32>
      %cst_14 = arith.constant 1.000000e+00 : f32
      %18 = vector.broadcast %cst_14 : f32 to vector<8x1280xf32>
      %19 = arith.addf %18, %17 : vector<8x1280xf32>
      %20 = arith.divf %18, %19 : vector<8x1280xf32>
      %21 = arith.mulf %15, %20 : vector<8x1280xf32>
      %c0_15 = arith.constant 0 : index
      %c0_16 = arith.constant 0 : index
      %22 = vector.load %arg6[%c0_15, %c0_16] : memref<8x1280xf32, #tpu.memory_space<vmem>>, vector<8x1280xf32>
      tpu.vector_store %arg6[%c0_15, %c0_16], %21 {strides = array<i32>} : memref<8x1280xf32, #tpu.memory_space<vmem>>, vector<8x1280xf32>,
    } else {
    }
    return
  }
  func.func @transform_0(%arg0: i32, %arg1: i32, %arg2: i32) -> (i32, i32) {
    %c0_i32 = arith.constant 0 : i32
    return %arg0, %arg2 : i32, i32
  }
  func.func @transform_1(%arg0: i32, %arg1: i32, %arg2: i32) -> (i32, i32) {
    %c0_i32 = arith.constant 0 : i32
    return %arg2, %arg1 : i32, i32
  }
  func.func @transform_2(%arg0: i32, %arg1: i32, %arg2: i32) -> (i32, i32) {
    %c0_i32 = arith.constant 0 : i32
    %c0_i32_0 = arith.constant 0 : i32
    return %c0_i32, %arg1 : i32, i32
  }
  func.func @transform_3(%arg0: i32, %arg1: i32, %arg2: i32) -> (i32, i32) {
    %c0_i32 = arith.constant 0 : i32
    return %arg0, %arg1 : i32, i32
  }
}

module attributes {stable_mosaic.version = 11 : i64} {
  func.func @_matmul_kernel(%arg0: i32, %arg1: i32, %arg2: i32, %arg3: memref<8x640xbf16, #tpu.memory_space<vmem>>, %arg4: memref<640x384xbf16, #tpu.memory_space<vmem>>, %arg5: memref<1x384xf32, #tpu.memory_space<vmem>>, %arg6: memref<8x384xf32, #tpu.memory_space<vmem>>, %arg7: memref<8x384xf32, #tpu.memory_space<vmem>>) attributes {dimension_semantics = [#tpu.dimension_semantics<parallel>, #tpu.dimension_semantics<parallel>, #tpu.dimension_semantics<arbitrary>], iteration_bounds = array<i64: 1, 1, 2>, scalar_prefetch = 0 : i64, scratch_operands = 1 : i64, tpu.core_type = #tpu.core_type<tc>, window_params = [{transform_indices = @transform_0, window_bounds = array<i64: 8, 640>}, {transform_indices = @transform_1, window_bounds = array<i64: 640, 384>}, {transform_indices = @transform_2, window_bounds = array<i64: 1, 384>}, {transform_indices = @transform_3, window_bounds = array<i64: 8, 384>}]} {
    %c0_i32 = arith.constant 0 : i32
    %0 = arith.cmpi eq, %arg2, %c0_i32 : i32
    %1 = arith.extui %0 : i1 to i32
    %c0_i32_0 = arith.constant 0 : i32
    %2 = arith.cmpi ne, %1, %c0_i32_0 : i32
    scf.if %2 {
      %cst_9 = arith.constant 0.000000e+00 : f32
      %12 = vector.broadcast %cst_9 : f32 to vector<8x384xf32>
      %c0_10 = arith.constant 0 : index
      %c0_11 = arith.constant 0 : index
      %13 = vector.load %arg7[%c0_10, %c0_11] : memref<8x384xf32, #tpu.memory_space<vmem>>, vector<8x384xf32>
      tpu.vector_store %arg7[%c0_10, %c0_11], %12 {strides = array<i32>} : memref<8x384xf32, #tpu.memory_space<vmem>>, vector<8x384xf32>,
    } else {
    }
    %c0 = arith.constant 0 : index
    %c0_1 = arith.constant 0 : index
    %3 = vector.load %arg7[%c0, %c0_1] : memref<8x384xf32, #tpu.memory_space<vmem>>, vector<8x384xf32>
    %c0_2 = arith.constant 0 : index
    %c0_3 = arith.constant 0 : index
    %4 = vector.load %arg3[%c0_2, %c0_3] : memref<8x640xbf16, #tpu.memory_space<vmem>>, vector<8x640xbf16>
    %c0_4 = arith.constant 0 : index
    %c0_5 = arith.constant 0 : index
    %5 = vector.load %arg4[%c0_4, %c0_5] : memref<640x384xbf16, #tpu.memory_space<vmem>>, vector<640x384xbf16>
    %cst = arith.constant dense<0.000000e+00> : vector<8x384xf32>
    %6 = tpu.matmul %4, %5, %cst {dimension_numbers = #tpu.dot_dimension_numbers<[1], [0], [0], [1], [0, 0, 1, 1], [], []>} : vector<8x640xbf16>, vector<640x384xbf16>, vector<8x384xf32> -> vector<8x384xf32>
    %7 = arith.addf %3, %6 : vector<8x384xf32>
    %c0_6 = arith.constant 0 : index
    %c0_7 = arith.constant 0 : index
    %8 = vector.load %arg7[%c0_6, %c0_7] : memref<8x384xf32, #tpu.memory_space<vmem>>, vector<8x384xf32>
    tpu.vector_store %arg7[%c0_6, %c0_7], %7 {strides = array<i32>} : memref<8x384xf32, #tpu.memory_space<vmem>>, vector<8x384xf32>,
    %c1_i32 = arith.constant 1 : i32
    %9 = arith.cmpi eq, %arg2, %c1_i32 : i32
    %10 = arith.extui %9 : i1 to i32
    %c0_i32_8 = arith.constant 0 : i32
    %11 = arith.cmpi ne, %10, %c0_i32_8 : i32
    scf.if %11 {
      %c0_9 = arith.constant 0 : index
      %c0_10 = arith.constant 0 : index
      %12 = vector.load %arg7[%c0_9, %c0_10] : memref<8x384xf32, #tpu.memory_space<vmem>>, vector<8x384xf32>
      %c0_11 = arith.constant 0 : index
      %c0_12 = arith.constant 0 : index
      %13 = vector.load %arg5[%c0_11, %c0_12] : memref<1x384xf32, #tpu.memory_space<vmem>>, vector<1x384xf32>
      %14 = vector.broadcast %13 : vector<1x384xf32> to vector<8x384xf32>
      %15 = arith.addf %12, %14 : vector<8x384xf32>
      %16 = arith.negf %15 : vector<8x384xf32>
      %17 = math.exp %16 : vector<8x384xf32>
      %cst_13 = arith.constant 1.000000e+00 : f32
      %18 = vector.broadcast %cst_13 : f32 to vector<8x384xf32>
      %19 = arith.addf %18, %17 : vector<8x384xf32>
      %20 = arith.divf %18, %19 : vector<8x384xf32>
      %21 = arith.mulf %15, %20 : vector<8x384xf32>
      %c0_14 = arith.constant 0 : index
      %c0_15 = arith.constant 0 : index
      %22 = vector.load %arg6[%c0_14, %c0_15] : memref<8x384xf32, #tpu.memory_space<vmem>>, vector<8x384xf32>
      tpu.vector_store %arg6[%c0_14, %c0_15], %21 {strides = array<i32>} : memref<8x384xf32, #tpu.memory_space<vmem>>, vector<8x384xf32>,
    } else {
    }
    return
  }
  func.func @transform_0(%arg0: i32, %arg1: i32, %arg2: i32) -> (i32, i32) {
    %c0_i32 = arith.constant 0 : i32
    return %arg0, %arg2 : i32, i32
  }
  func.func @transform_1(%arg0: i32, %arg1: i32, %arg2: i32) -> (i32, i32) {
    %c0_i32 = arith.constant 0 : i32
    return %arg2, %arg1 : i32, i32
  }
  func.func @transform_2(%arg0: i32, %arg1: i32, %arg2: i32) -> (i32, i32) {
    %c0_i32 = arith.constant 0 : i32
    %c0_i32_0 = arith.constant 0 : i32
    return %c0_i32, %arg1 : i32, i32
  }
  func.func @transform_3(%arg0: i32, %arg1: i32, %arg2: i32) -> (i32, i32) {
    %c0_i32 = arith.constant 0 : i32
    return %arg0, %arg1 : i32, i32
  }
}

</mosaic_0001>

<llo_original>
// kernel: _time_embedding.3
$region0: #{_time_embedding.3}
  #allocation0 [shape = 'u32[]', space=smem, size = 0x4, offset = 0x4, fixed_abs, tag = 'smem constant byte address 0x4 - core index']
  #allocation1 [shape = 'u32[144,128]{1,0:T(1,128)}', space=vmem, size = 0x12000, scoped, tag = 'internal scratch']
  #allocation2 [shape = 'f32[8,384]{1,0:T(8,128)}', space=vmem, size = 0x3000, scoped, tag = 'scratch operand']
  %s0 = inlined_call_operand.vmem [shape: bf16[8,1280], index: 0, kind: input, shape index: {}]
  %s1 = inlined_call_operand.vmem [shape: bf16[1280,384], index: 1, kind: input, shape index: {}]
  %s2 = inlined_call_operand.vmem [shape: f32[1,384], index: 2, kind: input, shape index: {}]
  %s3 = inlined_call_operand.vmem [shape: f32[8,384], index: 3, kind: output, shape index: {}]
  %s4 = sld [smem:[#allocation0]]
  $region53: #{_time_embedding.3} parent=0
    _
  %s6 = ssub.s32 1, %s4
  %s7 = scalar_select 0, %s6, %s4
  loop: start=0, step=1, limit=4
  $region2: #{_time_embedding.3} parent=0 // loop_pre_header
    _
  $region3: #{_time_embedding.3} parent=0 // loop_header
    %s9 = sphi 0, %s13
    %p10 = scmp.ge.s32.totalorder %s9, 4
    %s16 = sphi 0, %s35
    %s17 = sphi 0, %s31
    %s18 = sphi 0, %s27
    %s19 = sphi 0, %s16
    %s20 = sphi 0, %s17
    %s21 = sphi 0, %s18
    %s22 = sphi 0, %s19
    %s23 = sphi 0, %s20
    %s24 = sphi 0, %s21
    %s40 = sphi 0, %s42
    %s43 = sphi 0, %s40
    %s44 = sphi 0, %s43
    %s60 = sphi 0, %s44
    %s68 = sphi 0, %s70
    %s71 = sphi 0, %s68
    %s72 = sphi 0, %s71
    %s88 = sphi 0, %s72
    %s94 = sphi 0, %s96
    %s97 = sphi 0, %s94
    %s98 = sphi 0, %s97
    %s114 = sphi 0, %s98
    %s122 = sphi 0, %s124
    %s125 = sphi 0, %s122
    %s126 = sphi 0, %s125
    %s142 = sphi 0, %s126
  $region4: #{_time_embedding.3} parent=0 // loop_header_branch
    %12 = sbr.rel (%p10) target = $region8
  $region5: #{_time_embedding.3} parent=0 // loop_body
    %s14 = ssub.s32 %s9, 1
    %s15 = ssub.s32 %s9, 2
    %s25 = sadd.s32 1, %s18
    %p26 = scmp.ge.s32.totalorder %s25, 2
    %s27 = scalar_select %p26, 0, %s25
    %s28 = sadd.s32 1, %s17
    %s29 = scalar_select %p26, %s28, %s17
    %p30 = scmp.ge.s32.totalorder %s29, 1
    %s31 = scalar_select %p30, 0, %s29
    %s32 = sadd.s32 1, %s16
    %s33 = scalar_select %p30, %s32, %s16
    %p34 = scmp.ge.s32.totalorder %s33, 1
    %s35 = scalar_select %p34, 0, %s33
    %s36 = ssub.s32 %s16, %s35
    %s37 = ssub.s32 %s18, %s27
    %s38 = sor.u32 %s36, %s37
    %p39 = scmp.eq.s32.totalorder %s38, 0
    %s41 = sadd.s32 %s40, 1
    %s42 = scalar_select %p39, %s40, %s41
    %p45 = pneg %p39
    %p46 = scmp.eq.s32.totalorder %s9, 1
    %p47 = por %p45, %p46
    %p48 = scmp.ne.s32.totalorder %s40, %s43
    %p49 = scmp.eq.s32.totalorder %s9, 0
    %p50 = por %p48, %p49
    %p51 = scmp.ne.s32.totalorder %s40, %s43
    %p52 = scmp.eq.s32.totalorder %s14, 1
    %p53 = por %p51, %p52
    %p54 = scmp.ne.s32.totalorder %s43, %s44
    %p55 = scmp.eq.s32.totalorder %s14, 0
    %p56 = por %p54, %p55
    %p57 = scmp.ne.s32.totalorder %s43, %s44
    %p58 = scmp.eq.s32.totalorder %s15, 1
    %p59 = por %p57, %p58
    %p61 = scmp.ne.s32.totalorder %s44, %s60
    %p62 = scmp.eq.s32.totalorder %s15, 0
    %p63 = por %p61, %p62
    %s64 = ssub.s32 %s18, %s27
    %s65 = ssub.s32 %s17, %s31
    %s66 = sor.u32 %s64, %s65
    %p67 = scmp.eq.s32.totalorder %s66, 0
    %s69 = sadd.s32 %s68, 1
    %s70 = scalar_select %p67, %s68, %s69
    %p73 = pneg %p67
    %p74 = scmp.eq.s32.totalorder %s9, 1
    %p75 = por %p73, %p74
    %p76 = scmp.ne.s32.totalorder %s68, %s71
    %p77 = scmp.eq.s32.totalorder %s9, 0
    %p78 = por %p76, %p77
    %p79 = scmp.ne.s32.totalorder %s68, %s71
    %p80 = scmp.eq.s32.totalorder %s14, 1
    %p81 = por %p79, %p80
    %p82 = scmp.ne.s32.totalorder %s71, %s72
    %p83 = scmp.eq.s32.totalorder %s14, 0
    %p84 = por %p82, %p83
    %p85 = scmp.ne.s32.totalorder %s71, %s72
    %p86 = scmp.eq.s32.totalorder %s15, 1
    %p87 = por %p85, %p86
    %p89 = scmp.ne.s32.totalorder %s72, %s88
    %p90 = scmp.eq.s32.totalorder %s15, 0
    %p91 = por %p89, %p90
    %s92 = ssub.s32 %s17, %s31
    %p93 = scmp.eq.s32.totalorder %s92, 0
    %s95 = sadd.s32 %s94, 1
    %s96 = scalar_select %p93, %s94, %s95
    %p99 = pneg %p93
    %p100 = scmp.eq.s32.totalorder %s9, 1
    %p101 = por %p99, %p100
    %p102 = scmp.ne.s32.totalorder %s94, %s97
    %p103 = scmp.eq.s32.totalorder %s9, 0
    %p104 = por %p102, %p103
    %p105 = scmp.ne.s32.totalorder %s94, %s97
    %p106 = scmp.eq.s32.totalorder %s14, 1
    %p107 = por %p105, %p106
    %p108 = scmp.ne.s32.totalorder %s97, %s98
    %p109 = scmp.eq.s32.totalorder %s14, 0
    %p110 = por %p108, %p109
    %p111 = scmp.ne.s32.totalorder %s97, %s98
    %p112 = scmp.eq.s32.totalorder %s15, 1
    %p113 = por %p111, %p112
    %p115 = scmp.ne.s32.totalorder %s98, %s114
    %p116 = scmp.eq.s32.totalorder %s15, 0
    %p117 = por %p115, %p116
    %s118 = ssub.s32 %s16, %s35
    %s119 = ssub.s32 %s17, %s31
    %s120 = sor.u32 %s118, %s119
    %p121 = scmp.eq.s32.totalorder %s120, 0
    %s123 = sadd.s32 %s122, 1
    %s124 = scalar_select %p121, %s122, %s123
    %p127 = pneg %p121
    %p128 = scmp.eq.s32.totalorder %s9, 1
    %p129 = por %p127, %p128
    %p130 = scmp.ne.s32.totalorder %s122, %s125
    %p131 = scmp.eq.s32.totalorder %s9, 0
    %p132 = por %p130, %p131
    %p133 = scmp.ne.s32.totalorder %s122, %s125
    %p134 = scmp.eq.s32.totalorder %s14, 1
    %p135 = por %p133, %p134
    %p136 = scmp.ne.s32.totalorder %s125, %s126
    %p137 = scmp.eq.s32.totalorder %s14, 0
    %p138 = por %p136, %p137
    %p139 = scmp.ne.s32.totalorder %s125, %s126
    %p140 = scmp.eq.s32.totalorder %s15, 1
    %p141 = por %p139, %p140
    %p143 = scmp.ne.s32.totalorder %s126, %s142
    %p144 = scmp.eq.s32.totalorder %s15, 0
    %p145 = por %p143, %p144
    %p146 = scmp.le.s32.totalorder 1, %s9
    %p147 = scmp.lt.s32.totalorder %s9, 3
    %p148 = pnand %p146, %p147
    %p149 = pneg %p148
    // Predicated region
    $region9: #{_time_embedding.3} parent=5 // pred_check
      _
    $region10: #{_time_embedding.3} parent=5 // pred_check_branch
      %151 = sbr.rel (%p148) target = $region12
    $region11: #{_time_embedding.3} parent=5 // pred_region
      %s152 = ssub.s32 %s9, 1
      // Predicated region
      $region13: #{_time_embedding.3} parent=11 // pred_check
        %p153 = pneg %p110
      $region14: #{_time_embedding.3} parent=11 // pred_check_branch
        %155 = sbr.rel (%p153) target = $region16
      $region15: #{_time_embedding.3} parent=11 // pred_region
        %s156 = smul.u32 3, %s20
        %p157 = scmp.lt.s32.totalorder %s156, 2
        %s158 = scalar_select %p157, %s156, 2
        %s159 = scalar_lea.vmem %s2, %s158
        %s160 = smul.u32 3, %s20
      $region16: #{_time_embedding.3} parent=11 // pred_fallthru
        _
    $region12: #{_time_embedding.3} parent=5 // pred_fallthru
      _
    %p161 = scmp.lt.s32.totalorder %s9, 2
    // Predicated region
    $region17: #{_time_embedding.3} parent=5 // pred_check
      %p162 = pneg %p161
    $region18: #{_time_embedding.3} parent=5 // pred_check_branch
      %164 = sbr.rel (%p162) target = $region20
    $region19: #{_time_embedding.3} parent=5 // pred_region
      // Predicated region
      $region21: #{_time_embedding.3} parent=19 // pred_check
        %p165 = pneg %p50
      $region22: #{_time_embedding.3} parent=19 // pred_check_branch
        %167 = sbr.rel (%p165) target = $region24
      $region23: #{_time_embedding.3} parent=19 // pred_region
        %s168 = smul.u32 5, %s18
        %p169 = scmp.lt.s32.totalorder %s16, 0
        %s170 = scalar_select %p169, %s16, 0
        %p171 = scmp.lt.s32.totalorder %s168, 9
        %s172 = scalar_select %p171, %s168, 9
        %s173 = smul.addr %s170, 10
        %s174 = sadd.s32 %s172, %s173
        %s175 = smul.addr %s174, 4
        %s176 = scalar_lea.vmem %s0, %s175
        %s177 = smul.u32 5, %s18
      $region24: #{_time_embedding.3} parent=19 // pred_fallthru
        _
      // Predicated region
      $region25: #{_time_embedding.3} parent=19 // pred_check
        %p178 = pneg %p78
      $region26: #{_time_embedding.3} parent=19 // pred_check_branch
        %180 = sbr.rel (%p178) target = $region28
      $region27: #{_time_embedding.3} parent=19 // pred_region
        %s181 = smul.u32 80, %s18
        %s182 = smul.u32 3, %s17
        %p183 = scmp.lt.s32.totalorder %s181, 159
        %s184 = scalar_select %p183, %s181, 159
        %p185 = scmp.lt.s32.totalorder %s182, 2
        %s186 = scalar_select %p185, %s182, 2
        %s187 = smul.addr %s184, 3
        %s188 = sadd.s32 %s186, %s187
        %s189 = smul.addr %s188, 4
        %s190 = scalar_lea.vmem %s1, %s189
        %s191 = smul.u32 80, %s18
        %s192 = smul.u32 3, %s17
      $region28: #{_time_embedding.3} parent=19 // pred_fallthru
        _
    $region20: #{_time_embedding.3} parent=5 // pred_fallthru
      _
    %p193 = scmp.le.s32.totalorder 1, %s9
    %p194 = scmp.lt.s32.totalorder %s9, 3
    %p195 = pnand %p193, %p194
    %p196 = pneg %p195
    // Predicated region
    $region29: #{_time_embedding.3} parent=5 // pred_check
      _
    $region30: #{_time_embedding.3} parent=5 // pred_check_branch
      %198 = sbr.rel (%p195) target = $region32
    $region31: #{_time_embedding.3} parent=5 // pred_region
      %s199 = ssub.s32 %s9, 1
      %s200 = smul.u32 5, %s21
      %p201 = scmp.lt.s32.totalorder %s19, 0
      %s202 = scalar_select %p201, %s19, 0
      %p203 = scmp.lt.s32.totalorder %s200, 9
      %s204 = scalar_select %p203, %s200, 9
      %s205 = smul.addr %s202, 10
      %s206 = sadd.s32 %s204, %s205
      %s207 = smul.addr %s206, 4
      %s208 = scalar_lea.vmem %s0, %s207
      %p209 = pneg %p56
      %p210 = pneg %p53
      %s211 = smul.u32 80, %s21
      %s212 = smul.u32 3, %s20
      %p213 = scmp.lt.s32.totalorder %s211, 159
      %s214 = scalar_select %p213, %s211, 159
      %p215 = scmp.lt.s32.totalorder %s212, 2
      %s216 = scalar_select %p215, %s212, 2
      %s217 = smul.addr %s214, 3
      %s218 = sadd.s32 %s216, %s217
      %s219 = smul.addr %s218, 4
      %s220 = scalar_lea.vmem %s1, %s219
      %p221 = pneg %p84
      %p222 = pneg %p81
      %s223 = smul.u32 3, %s20
      %p224 = scmp.lt.s32.totalorder %s223, 2
      %s225 = scalar_select %p224, %s223, 2
      %s226 = scalar_lea.vmem %s2, %s225
      %p227 = pneg %p110
      %p228 = pneg %p107
      %p229 = pneg %p138
      %p230 = pneg %p135
      %s231 = smul.u32 3, %s20
      %p232 = scmp.lt.s32.totalorder %s19, 0
      %s233 = scalar_select %p232, %s19, 0
      %p234 = scmp.lt.s32.totalorder %s231, 2
      %s235 = scalar_select %p234, %s231, 2
      %s236 = smul.addr %s233, 3
      %s237 = sadd.s32 %s235, %s236
      %s238 = smul.addr %s237, 8
      %s239 = scalar_lea.vmem %s3, %s238
      %s240 = smul.u32 5, %s21
      %p241 = scmp.lt.s32.totalorder %s19, 0
      %s242 = scalar_select %p241, %s19, 0
      %p243 = scmp.lt.s32.totalorder %s240, 9
      %s244 = scalar_select %p243, %s240, 9
      %s245 = smul.addr %s242, 10
      %s246 = sadd.s32 %s244, %s245
      %s247 = smul.addr %s246, 4
      %s248 = scalar_lea.vmem %s0, %s247
      %s249 = smul.u32 5, %s21
      %s250 = smul.u32 80, %s21
      %s251 = smul.u32 3, %s20
      %p252 = scmp.lt.s32.totalorder %s250, 159
      %s253 = scalar_select %p252, %s250, 159
      %p254 = scmp.lt.s32.totalorder %s251, 2
      %s255 = scalar_select %p254, %s251, 2
      %s256 = smul.addr %s253, 3
      %s257 = sadd.s32 %s255, %s256
      %s258 = smul.addr %s257, 4
      %s259 = scalar_lea.vmem %s1, %s258
      %s260 = smul.u32 80, %s21
      %s261 = smul.u32 3, %s20
      %s262 = smul.u32 3, %s20
      %p263 = scmp.lt.s32.totalorder %s262, 2
      %s264 = scalar_select %p263, %s262, 2
      %s265 = scalar_lea.vmem %s2, %s264
      %s266 = smul.u32 3, %s20
      %s267 = smul.u32 3, %s20
      %p268 = scmp.lt.s32.totalorder %s19, 0
      %s269 = scalar_select %p268, %s19, 0
      %p270 = scmp.lt.s32.totalorder %s267, 2
      %s271 = scalar_select %p270, %s267, 2
      %s272 = smul.addr %s269, 3
      %s273 = sadd.s32 %s271, %s272
      %s274 = smul.addr %s273, 8
      %s275 = scalar_lea.vmem %s3, %s274
      %s276 = smul.u32 3, %s20
      %p278 = scmp.eq.s32.totalorder %s21, 0
      // Predicated region
      $region33: #{_time_embedding.3} parent=31 // pred_check
        %p279 = pneg %p278
      $region34: #{_time_embedding.3} parent=31 // pred_check_branch
        %281 = sbr.rel (%p279) target = $region36
      $region35: #{_time_embedding.3} parent=31 // pred_region
        %282 = vst [vmem:[#allocation2] sm:$0xff] 0.0
        %283 = vst [vmem:[#allocation2 + $0x8] sm:$0xff] 0.0
        %284 = vst [vmem:[#allocation2 + $0x10] sm:$0xff] 0.0
      $region36: #{_time_embedding.3} parent=31 // pred_fallthru
        _
      %v285 = vld [vmem:[#allocation2] sm:$0xff]
      %v286 = vld [vmem:[#allocation2 + $0x8] sm:$0xff]
      %v287 = vld [vmem:[#allocation2 + $0x10] sm:$0xff]
      %v288 = vld [vmem:[%s248] sm:$0xff]
      %v289 = vld [vmem:[%s248 + $0x8] sm:$0xff]
      %v290 = vld [vmem:[%s248 + $0x10] sm:$0xf]
      %v291 = vld [vmem:[%s259] sm:$0xff]
      %v292 = vld [vmem:[%s259 + $0x8] sm:$0xf]
      %v293 = vld [vmem:[%s259 + $0xc] sm:$0xff]
      %v294 = vld [vmem:[%s259 + $0x14] sm:$0xf]
      %v295 = vld [vmem:[%s259 + $0x18] sm:$0xff]
      %v296 = vld [vmem:[%s259 + $0x20] sm:$0xf]
      %v297 = vld [vmem:[%s259 + $0x24] sm:$0xff]
      %v298 = vld [vmem:[%s259 + $0x2c] sm:$0xf]
      %v299 = vld [vmem:[%s259 + $0x30] sm:$0xff]
      %v300 = vld [vmem:[%s259 + $0x38] sm:$0xf]
      %v301 = vld [vmem:[%s259 + $0x3c] sm:$0xff]
      %v302 = vld [vmem:[%s259 + $0x44] sm:$0xf]
      %v303 = vld [vmem:[%s259 + $0x48] sm:$0xff]
      %v304 = vld [vmem:[%s259 + $0x50] sm:$0xf]
      %v305 = vld [vmem:[%s259 + $0x54] sm:$0xff]
      %v306 = vld [vmem:[%s259 + $0x5c] sm:$0xf]
      %v307 = vld [vmem:[%s259 + $0x60] sm:$0xff]
      %v308 = vld [vmem:[%s259 + $0x68] sm:$0xf]
      %v309 = vld [vmem:[%s259 + $0x6c] sm:$0xff]
      %v310 = vld [vmem:[%s259 + $0x74] sm:$0xf]
      %v311 = vld [vmem:[%s259 + $0x78] sm:$0xff]
      %v312 = vld [vmem:[%s259 + $0x80] sm:$0xf]
      %v313 = vld [vmem:[%s259 + $0x84] sm:$0xff]
      %v314 = vld [vmem:[%s259 + $0x8c] sm:$0xf]
      %v315 = vld [vmem:[%s259 + $0x90] sm:$0xff]
      %v316 = vld [vmem:[%s259 + $0x98] sm:$0xf]
      %v317 = vld [vmem:[%s259 + $0x9c] sm:$0xff]
      %v318 = vld [vmem:[%s259 + $0xa4] sm:$0xf]
      %v319 = vld [vmem:[%s259 + $0xa8] sm:$0xff]
      %v320 = vld [vmem:[%s259 + $0xb0] sm:$0xf]
      %v321 = vld [vmem:[%s259 + $0xb4] sm:$0xff]
      %v322 = vld [vmem:[%s259 + $0xbc] sm:$0xf]
      %v323 = vld [vmem:[%s259 + $0xc0] sm:$0xff]
      %v324 = vld [vmem:[%s259 + $0xc8] sm:$0xf]
      %v325 = vld [vmem:[%s259 + $0xcc] sm:$0xff]
      %v326 = vld [vmem:[%s259 + $0xd4] sm:$0xf]
      %v327 = vld [vmem:[%s259 + $0xd8] sm:$0xff]
      %v328 = vld [vmem:[%s259 + $0xe0] sm:$0xf]
      %v329 = vld [vmem:[%s259 + $0xe4] sm:$0xff]
      %v330 = vld [vmem:[%s259 + $0xec] sm:$0xf]
      %v331 = vld [vmem:[%s259 + $0xf0] sm:$0xff]
      %v332 = vld [vmem:[%s259 + $0xf8] sm:$0xf]
      %v333 = vld [vmem:[%s259 + $0xfc] sm:$0xff]
      %v334 = vld [vmem:[%s259 + $0x104] sm:$0xf]
      %v335 = vld [vmem:[%s259 + $0x108] sm:$0xff]
      %v336 = vld [vmem:[%s259 + $0x110] sm:$0xf]
      %v337 = vld [vmem:[%s259 + $0x114] sm:$0xff]
      %v338 = vld [vmem:[%s259 + $0x11c] sm:$0xf]
      %v339 = vld [vmem:[%s259 + $0x120] sm:$0xff]
      %v340 = vld [vmem:[%s259 + $0x128] sm:$0xf]
      %v341 = vld [vmem:[%s259 + $0x12c] sm:$0xff]
      %v342 = vld [vmem:[%s259 + $0x134] sm:$0xf]
      %v343 = vld [vmem:[%s259 + $0x138] sm:$0xff]
      %v344 = vld [vmem:[%s259 + $0x140] sm:$0xf]
      %v345 = vld [vmem:[%s259 + $0x144] sm:$0xff]
      %v346 = vld [vmem:[%s259 + $0x14c] sm:$0xf]
      %v347 = vld [vmem:[%s259 + $0x150] sm:$0xff]
      %v348 = vld [vmem:[%s259 + $0x158] sm:$0xf]
      %v349 = vld [vmem:[%s259 + $0x15c] sm:$0xff]
      %v350 = vld [vmem:[%s259 + $0x164] sm:$0xf]
      %v351 = vld [vmem:[%s259 + $0x168] sm:$0xff]
      %v352 = vld [vmem:[%s259 + $0x170] sm:$0xf]
      %v353 = vld [vmem:[%s259 + $0x174] sm:$0xff]
      %v354 = vld [vmem:[%s259 + $0x17c] sm:$0xf]
      %v355 = vld [vmem:[%s259 + $0x180] sm:$0xff]
      %v356 = vld [vmem:[%s259 + $0x188] sm:$0xf]
      %v357 = vld [vmem:[%s259 + $0x18c] sm:$0xff]
      %v358 = vld [vmem:[%s259 + $0x194] sm:$0xf]
      %v359 = vld [vmem:[%s259 + $0x198] sm:$0xff]
      %v360 = vld [vmem:[%s259 + $0x1a0] sm:$0xf]
      %v361 = vld [vmem:[%s259 + $0x1a4] sm:$0xff]
      %v362 = vld [vmem:[%s259 + $0x1ac] sm:$0xf]
      %v363 = vld [vmem:[%s259 + $0x1b0] sm:$0xff]
      %v364 = vld [vmem:[%s259 + $0x1b8] sm:$0xf]
      %v365 = vld [vmem:[%s259 + $0x1bc] sm:$0xff]
      %v366 = vld [vmem:[%s259 + $0x1c4] sm:$0xf]
      %v367 = vld [vmem:[%s259 + $0x1c8] sm:$0xff]
      %v368 = vld [vmem:[%s259 + $0x1d0] sm:$0xf]
      %v369 = vld [vmem:[%s259 + $0x1d4] sm:$0xff]
      %v370 = vld [vmem:[%s259 + $0x1dc] sm:$0xf]
      %v371 = vld [vmem:[%s259 + $0x1e0] sm:$0xff]
      %v372 = vld [vmem:[%s259 + $0x1e8] sm:$0xf]
      %v373 = vld [vmem:[%s259 + $0x1ec] sm:$0xff]
      %v374 = vld [vmem:[%s259 + $0x1f4] sm:$0xf]
      %v375 = vld [vmem:[%s259 + $0x1f8] sm:$0xff]
      %v376 = vld [vmem:[%s259 + $0x200] sm:$0xf]
      %v377 = vld [vmem:[%s259 + $0x204] sm:$0xff]
      %v378 = vld [vmem:[%s259 + $0x20c] sm:$0xf]
      %v379 = vld [vmem:[%s259 + $0x210] sm:$0xff]
      %v380 = vld [vmem:[%s259 + $0x218] sm:$0xf]
      %v381 = vld [vmem:[%s259 + $0x21c] sm:$0xff]
      %v382 = vld [vmem:[%s259 + $0x224] sm:$0xf]
      %v383 = vld [vmem:[%s259 + $0x228] sm:$0xff]
      %v384 = vld [vmem:[%s259 + $0x230] sm:$0xf]
      %v385 = vld [vmem:[%s259 + $0x234] sm:$0xff]
      %v386 = vld [vmem:[%s259 + $0x23c] sm:$0xf]
      %v387 = vld [vmem:[%s259 + $0x240] sm:$0xff]
      %v388 = vld [vmem:[%s259 + $0x248] sm:$0xf]
      %v389 = vld [vmem:[%s259 + $0x24c] sm:$0xff]
      %v390 = vld [vmem:[%s259 + $0x254] sm:$0xf]
      %v391 = vld [vmem:[%s259 + $0x258] sm:$0xff]
      %v392 = vld [vmem:[%s259 + $0x260] sm:$0xf]
      %v393 = vld [vmem:[%s259 + $0x264] sm:$0xff]
      %v394 = vld [vmem:[%s259 + $0x26c] sm:$0xf]
      %v395 = vld [vmem:[%s259 + $0x270] sm:$0xff]
      %v396 = vld [vmem:[%s259 + $0x278] sm:$0xf]
      %v397 = vld [vmem:[%s259 + $0x27c] sm:$0xff]
      %v398 = vld [vmem:[%s259 + $0x284] sm:$0xf]
      %v399 = vld [vmem:[%s259 + $0x288] sm:$0xff]
      %v400 = vld [vmem:[%s259 + $0x290] sm:$0xf]
      %v401 = vld [vmem:[%s259 + $0x294] sm:$0xff]
      %v402 = vld [vmem:[%s259 + $0x29c] sm:$0xf]
      %v403 = vld [vmem:[%s259 + $0x2a0] sm:$0xff]
      %v404 = vld [vmem:[%s259 + $0x2a8] sm:$0xf]
      %v405 = vld [vmem:[%s259 + $0x2ac] sm:$0xff]
      %v406 = vld [vmem:[%s259 + $0x2b4] sm:$0xf]
      %v407 = vld [vmem:[%s259 + $0x2b8] sm:$0xff]
      %v408 = vld [vmem:[%s259 + $0x2c0] sm:$0xf]
      %v409 = vld [vmem:[%s259 + $0x2c4] sm:$0xff]
      %v410 = vld [vmem:[%s259 + $0x2cc] sm:$0xf]
      %v411 = vld [vmem:[%s259 + $0x2d0] sm:$0xff]
      %v412 = vld [vmem:[%s259 + $0x2d8] sm:$0xf]
      %v413 = vld [vmem:[%s259 + $0x2dc] sm:$0xff]
      %v414 = vld [vmem:[%s259 + $0x2e4] sm:$0xf]
      %v415 = vld [vmem:[%s259 + $0x2e8] sm:$0xff]
      %v416 = vld [vmem:[%s259 + $0x2f0] sm:$0xf]
      %v417 = vld [vmem:[%s259 + $0x2f4] sm:$0xff]
      %v418 = vld [vmem:[%s259 + $0x2fc] sm:$0xf]
      %v419 = vld [vmem:[%s259 + $0x300] sm:$0xff]
      %v420 = vld [vmem:[%s259 + $0x308] sm:$0xf]
      %v421 = vld [vmem:[%s259 + $0x30c] sm:$0xff]
      %v422 = vld [vmem:[%s259 + $0x314] sm:$0xf]
      %v423 = vld [vmem:[%s259 + $0x318] sm:$0xff]
      %v424 = vld [vmem:[%s259 + $0x320] sm:$0xf]
      %v425 = vld [vmem:[%s259 + $0x324] sm:$0xff]
      %v426 = vld [vmem:[%s259 + $0x32c] sm:$0xf]
      %v427 = vld [vmem:[%s259 + $0x330] sm:$0xff]
      %v428 = vld [vmem:[%s259 + $0x338] sm:$0xf]
      %v429 = vld [vmem:[%s259 + $0x33c] sm:$0xff]
      %v430 = vld [vmem:[%s259 + $0x344] sm:$0xf]
      %v431 = vld [vmem:[%s259 + $0x348] sm:$0xff]
      %v432 = vld [vmem:[%s259 + $0x350] sm:$0xf]
      %v433 = vld [vmem:[%s259 + $0x354] sm:$0xff]
      %v434 = vld [vmem:[%s259 + $0x35c] sm:$0xf]
      %v435 = vld [vmem:[%s259 + $0x360] sm:$0xff]
      %v436 = vld [vmem:[%s259 + $0x368] sm:$0xf]
      %v437 = vld [vmem:[%s259 + $0x36c] sm:$0xff]
      %v438 = vld [vmem:[%s259 + $0x374] sm:$0xf]
      %v439 = vld [vmem:[%s259 + $0x378] sm:$0xff]
      %v440 = vld [vmem:[%s259 + $0x380] sm:$0xf]
      %v441 = vld [vmem:[%s259 + $0x384] sm:$0xff]
      %v442 = vld [vmem:[%s259 + $0x38c] sm:$0xf]
      %v443 = vld [vmem:[%s259 + $0x390] sm:$0xff]
      %v444 = vld [vmem:[%s259 + $0x398] sm:$0xf]
      %v445 = vld [vmem:[%s259 + $0x39c] sm:$0xff]
      %v446 = vld [vmem:[%s259 + $0x3a4] sm:$0xf]
      %v447 = vld [vmem:[%s259 + $0x3a8] sm:$0xff]
      %v448 = vld [vmem:[%s259 + $0x3b0] sm:$0xf]
      %v449 = vld [vmem:[%s259 + $0x3b4] sm:$0xff]
      %v450 = vld [vmem:[%s259 + $0x3bc] sm:$0xf]
      %v454 = vunpack.c.l.b16 %v288
      %v455 = vunpack.c.h.b16 %v288
      %v456 = vunpack.c.l.b16 %v289
      %v457 = vunpack.c.h.b16 %v289
      %v458 = vunpack.c.l.b16 %v290
      %v459 = vpack.c.b16 %v454, %v454
      %v460 = vpack.c.b16 %v455, %v455
      %v461 = vpack.c.b16 %v456, %v456
      %v462 = vpack.c.b16 %v457, %v457
      %v463 = vpack.c.b16 %v458, %v458
      %v629 = vunpack.c.l.b16 %v291
      %v630 = vunpack.c.h.b16 %v291
      %v631 = vunpack.c.l.b16 %v292
      %v632 = vunpack.c.l.b16 %v293
      %v633 = vunpack.c.h.b16 %v293
      %v634 = vunpack.c.l.b16 %v294
      %v635 = vunpack.c.l.b16 %v295
      %v636 = vunpack.c.h.b16 %v295
      %v637 = vunpack.c.l.b16 %v296
      %v638 = vunpack.c.l.b16 %v297
      %v639 = vunpack.c.h.b16 %v297
      %v640 = vunpack.c.l.b16 %v298
      %v641 = vunpack.c.l.b16 %v299
      %v642 = vunpack.c.h.b16 %v299
      %v643 = vunpack.c.l.b16 %v300
      %v644 = vunpack.c.l.b16 %v301
      %v645 = vunpack.c.h.b16 %v301
      %v646 = vunpack.c.l.b16 %v302
      %v647 = vunpack.c.l.b16 %v303
      %v648 = vunpack.c.h.b16 %v303
      %v649 = vunpack.c.l.b16 %v304
      %v650 = vunpack.c.l.b16 %v305
      %v651 = vunpack.c.h.b16 %v305
      %v652 = vunpack.c.l.b16 %v306
      %v653 = vunpack.c.l.b16 %v307
      %v654 = vunpack.c.h.b16 %v307
      %v655 = vunpack.c.l.b16 %v308
      %v656 = vunpack.c.l.b16 %v309
      %v657 = vunpack.c.h.b16 %v309
      %v658 = vunpack.c.l.b16 %v310
      %v659 = vunpack.c.l.b16 %v311
      %v660 = vunpack.c.h.b16 %v311
      %v661 = vunpack.c.l.b16 %v312
      %v662 = vunpack.c.l.b16 %v313
      %v663 = vunpack.c.h.b16 %v313
      %v664 = vunpack.c.l.b16 %v314
      %v665 = vunpack.c.l.b16 %v315
      %v666 = vunpack.c.h.b16 %v315
      %v667 = vunpack.c.l.b16 %v316
      %v668 = vunpack.c.l.b16 %v317
      %v669 = vunpack.c.h.b16 %v317
      %v670 = vunpack.c.l.b16 %v318
      %v671 = vunpack.c.l.b16 %v319
      %v672 = vunpack.c.h.b16 %v319
      %v673 = vunpack.c.l.b16 %v320
      %v674 = vunpack.c.l.b16 %v321
      %v675 = vunpack.c.h.b16 %v321
      %v676 = vunpack.c.l.b16 %v322
      %v677 = vunpack.c.l.b16 %v323
      %v678 = vunpack.c.h.b16 %v323
      %v679 = vunpack.c.l.b16 %v324
      %v680 = vunpack.c.l.b16 %v325
      %v681 = vunpack.c.h.b16 %v325
      %v682 = vunpack.c.l.b16 %v326
      %v683 = vunpack.c.l.b16 %v327
      %v684 = vunpack.c.h.b16 %v327
      %v685 = vunpack.c.l.b16 %v328
      %v686 = vunpack.c.l.b16 %v329
      %v687 = vunpack.c.h.b16 %v329
      %v688 = vunpack.c.l.b16 %v330
      %v689 = vunpack.c.l.b16 %v331
      %v690 = vunpack.c.h.b16 %v331
      %v691 = vunpack.c.l.b16 %v332
      %v692 = vunpack.c.l.b16 %v333
      %v693 = vunpack.c.h.b16 %v333
      %v694 = vunpack.c.l.b16 %v334
      %v695 = vunpack.c.l.b16 %v335
      %v696 = vunpack.c.h.b16 %v335
      %v697 = vunpack.c.l.b16 %v336
      %v698 = vunpack.c.l.b16 %v337
      %v699 = vunpack.c.h.b16 %v337
      %v700 = vunpack.c.l.b16 %v338
      %v701 = vunpack.c.l.b16 %v339
      %v702 = vunpack.c.h.b16 %v339
      %v703 = vunpack.c.l.b16 %v340
      %v704 = vunpack.c.l.b16 %v341
      %v705 = vunpack.c.h.b16 %v341
      %v706 = vunpack.c.l.b16 %v342
      %v707 = vunpack.c.l.b16 %v343
      %v708 = vunpack.c.h.b16 %v343
      %v709 = vunpack.c.l.b16 %v344
      %v710 = vunpack.c.l.b16 %v345
      %v711 = vunpack.c.h.b16 %v345
      %v712 = vunpack.c.l.b16 %v346
      %v713 = vunpack.c.l.b16 %v347
      %v714 = vunpack.c.h.b16 %v347
      %v715 = vunpack.c.l.b16 %v348
      %v716 = vunpack.c.l.b16 %v349
      %v717 = vunpack.c.h.b16 %v349
      %v718 = vunpack.c.l.b16 %v350
      %v719 = vunpack.c.l.b16 %v351
      %v720 = vunpack.c.h.b16 %v351
      %v721 = vunpack.c.l.b16 %v352
      %v722 = vunpack.c.l.b16 %v353
      %v723 = vunpack.c.h.b16 %v353
      %v724 = vunpack.c.l.b16 %v354
      %v725 = vunpack.c.l.b16 %v355
      %v726 = vunpack.c.h.b16 %v355
      %v727 = vunpack.c.l.b16 %v356
      %v728 = vunpack.c.l.b16 %v357
      %v729 = vunpack.c.h.b16 %v357
      %v730 = vunpack.c.l.b16 %v358
      %v731 = vunpack.c.l.b16 %v359
      %v732 = vunpack.c.h.b16 %v359
      %v733 = vunpack.c.l.b16 %v360
      %v734 = vunpack.c.l.b16 %v361
      %v735 = vunpack.c.h.b16 %v361
      %v736 = vunpack.c.l.b16 %v362
      %v737 = vunpack.c.l.b16 %v363
      %v738 = vunpack.c.h.b16 %v363
      %v739 = vunpack.c.l.b16 %v364
      %v740 = vunpack.c.l.b16 %v365
      %v741 = vunpack.c.h.b16 %v365
      %v742 = vunpack.c.l.b16 %v366
      %v743 = vunpack.c.l.b16 %v367
      %v744 = vunpack.c.h.b16 %v367
      %v745 = vunpack.c.l.b16 %v368
      %v746 = vunpack.c.l.b16 %v369
      %v747 = vunpack.c.h.b16 %v369
      %v748 = vunpack.c.l.b16 %v370
      %v749 = vunpack.c.l.b16 %v371
      %v750 = vunpack.c.h.b16 %v371
      %v751 = vunpack.c.l.b16 %v372
      %v752 = vunpack.c.l.b16 %v373
      %v753 = vunpack.c.h.b16 %v373
      %v754 = vunpack.c.l.b16 %v374
      %v755 = vunpack.c.l.b16 %v375
      %v756 = vunpack.c.h.b16 %v375
      %v757 = vunpack.c.l.b16 %v376
      %v758 = vunpack.c.l.b16 %v377
      %v759 = vunpack.c.h.b16 %v377
      %v760 = vunpack.c.l.b16 %v378
      %v761 = vunpack.c.l.b16 %v379
      %v762 = vunpack.c.h.b16 %v379
      %v763 = vunpack.c.l.b16 %v380
      %v764 = vunpack.c.l.b16 %v381
      %v765 = vunpack.c.h.b16 %v381
      %v766 = vunpack.c.l.b16 %v382
      %v767 = vunpack.c.l.b16 %v383
      %v768 = vunpack.c.h.b16 %v383
      %v769 = vunpack.c.l.b16 %v384
      %v770 = vunpack.c.l.b16 %v385
      %v771 = vunpack.c.h.b16 %v385
      %v772 = vunpack.c.l.b16 %v386
      %v773 = vunpack.c.l.b16 %v387
      %v774 = vunpack.c.h.b16 %v387
      %v775 = vunpack.c.l.b16 %v388
      %v776 = vunpack.c.l.b16 %v389
      %v777 = vunpack.c.h.b16 %v389
      %v778 = vunpack.c.l.b16 %v390
      %v779 = vunpack.c.l.b16 %v391
      %v780 = vunpack.c.h.b16 %v391
      %v781 = vunpack.c.l.b16 %v392
      %v782 = vunpack.c.l.b16 %v393
      %v783 = vunpack.c.h.b16 %v393
      %v784 = vunpack.c.l.b16 %v394
      %v785 = vunpack.c.l.b16 %v395
      %v786 = vunpack.c.h.b16 %v395
      %v787 = vunpack.c.l.b16 %v396
      %v788 = vunpack.c.l.b16 %v397
      %v789 = vunpack.c.h.b16 %v397
      %v790 = vunpack.c.l.b16 %v398
      %v791 = vunpack.c.l.b16 %v399
      %v792 = vunpack.c.h.b16 %v399
      %v793 = vunpack.c.l.b16 %v400
      %v794 = vunpack.c.l.b16 %v401
      %v795 = vunpack.c.h.b16 %v401
      %v796 = vunpack.c.l.b16 %v402
      %v797 = vunpack.c.l.b16 %v403
      %v798 = vunpack.c.h.b16 %v403
      %v799 = vunpack.c.l.b16 %v404
      %v800 = vunpack.c.l.b16 %v405
      %v801 = vunpack.c.h.b16 %v405
      %v802 = vunpack.c.l.b16 %v406
      %v803 = vunpack.c.l.b16 %v407
      %v804 = vunpack.c.h.b16 %v407
      %v805 = vunpack.c.l.b16 %v408
      %v806 = vunpack.c.l.b16 %v409
      %v807 = vunpack.c.h.b16 %v409
      %v808 = vunpack.c.l.b16 %v410
      %v809 = vunpack.c.l.b16 %v411
      %v810 = vunpack.c.h.b16 %v411
      %v811 = vunpack.c.l.b16 %v412
      %v812 = vunpack.c.l.b16 %v413
      %v813 = vunpack.c.h.b16 %v413
      %v814 = vunpack.c.l.b16 %v414
      %v815 = vunpack.c.l.b16 %v415
      %v816 = vunpack.c.h.b16 %v415
      %v817 = vunpack.c.l.b16 %v416
      %v818 = vunpack.c.l.b16 %v417
      %v819 = vunpack.c.h.b16 %v417
      %v820 = vunpack.c.l.b16 %v418
      %v821 = vunpack.c.l.b16 %v419
      %v822 = vunpack.c.h.b16 %v419
      %v823 = vunpack.c.l.b16 %v420
      %v824 = vunpack.c.l.b16 %v421
      %v825 = vunpack.c.h.b16 %v421
      %v826 = vunpack.c.l.b16 %v422
      %v827 = vunpack.c.l.b16 %v423
      %v828 = vunpack.c.h.b16 %v423
      %v829 = vunpack.c.l.b16 %v424
      %v830 = vunpack.c.l.b16 %v425
      %v831 = vunpack.c.h.b16 %v425
      %v832 = vunpack.c.l.b16 %v426
      %v833 = vunpack.c.l.b16 %v427
      %v834 = vunpack.c.h.b16 %v427
      %v835 = vunpack.c.l.b16 %v428
      %v836 = vunpack.c.l.b16 %v429
      %v837 = vunpack.c.h.b16 %v429
      %v838 = vunpack.c.l.b16 %v430
      %v839 = vunpack.c.l.b16 %v431
      %v840 = vunpack.c.h.b16 %v431
      %v841 = vunpack.c.l.b16 %v432
      %v842 = vunpack.c.l.b16 %v433
      %v843 = vunpack.c.h.b16 %v433
      %v844 = vunpack.c.l.b16 %v434
      %v845 = vunpack.c.l.b16 %v435
      %v846 = vunpack.c.h.b16 %v435
      %v847 = vunpack.c.l.b16 %v436
      %v848 = vunpack.c.l.b16 %v437
      %v849 = vunpack.c.h.b16 %v437
      %v850 = vunpack.c.l.b16 %v438
      %v851 = vunpack.c.l.b16 %v439
      %v852 = vunpack.c.h.b16 %v439
      %v853 = vunpack.c.l.b16 %v440
      %v854 = vunpack.c.l.b16 %v441
      %v855 = vunpack.c.h.b16 %v441
      %v856 = vunpack.c.l.b16 %v442
      %v857 = vunpack.c.l.b16 %v443
      %v858 = vunpack.c.h.b16 %v443
      %v859 = vunpack.c.l.b16 %v444
      %v860 = vunpack.c.l.b16 %v445
      %v861 = vunpack.c.h.b16 %v445
      %v862 = vunpack.c.l.b16 %v446
      %v863 = vunpack.c.l.b16 %v447
      %v864 = vunpack.c.h.b16 %v447
      %v865 = vunpack.c.l.b16 %v448
      %v866 = vunpack.c.l.b16 %v449
      %v867 = vunpack.c.h.b16 %v449
      %v868 = vunpack.c.l.b16 %v450
      %v869 = vpack.c.b16 %v632, %v629
      %v870 = vpack.c.b16 %v633, %v630
      %v871 = vpack.c.b16 %v634, %v631
      %v872 = vpack.c.b16 %v638, %v635
      %v873 = vpack.c.b16 %v639, %v636
      %v874 = vpack.c.b16 %v640, %v637
      %v875 = vpack.c.b16 %v644, %v641
      %v876 = vpack.c.b16 %v645, %v642
      %v877 = vpack.c.b16 %v646, %v643
      %v878 = vpack.c.b16 %v650, %v647
      %v879 = vpack.c.b16 %v651, %v648
      %v880 = vpack.c.b16 %v652, %v649
      %v881 = vpack.c.b16 %v656, %v653
      %v882 = vpack.c.b16 %v657, %v654
      %v883 = vpack.c.b16 %v658, %v655
      %v884 = vpack.c.b16 %v662, %v659
      %v885 = vpack.c.b16 %v663, %v660
      %v886 = vpack.c.b16 %v664, %v661
      %v887 = vpack.c.b16 %v668, %v665
      %v888 = vpack.c.b16 %v669, %v666
      %v889 = vpack.c.b16 %v670, %v667
      %v890 = vpack.c.b16 %v674, %v671
      %v891 = vpack.c.b16 %v675, %v672
      %v892 = vpack.c.b16 %v676, %v673
      %v893 = vpack.c.b16 %v680, %v677
      %v894 = vpack.c.b16 %v681, %v678
      %v895 = vpack.c.b16 %v682, %v679
      %v896 = vpack.c.b16 %v686, %v683
      %v897 = vpack.c.b16 %v687, %v684
      %v898 = vpack.c.b16 %v688, %v685
      %v899 = vpack.c.b16 %v692, %v689
      %v900 = vpack.c.b16 %v693, %v690
      %v901 = vpack.c.b16 %v694, %v691
      %v902 = vpack.c.b16 %v698, %v695
      %v903 = vpack.c.b16 %v699, %v696
      %v904 = vpack.c.b16 %v700, %v697
      %v905 = vpack.c.b16 %v704, %v701
      %v906 = vpack.c.b16 %v705, %v702
      %v907 = vpack.c.b16 %v706, %v703
      %v908 = vpack.c.b16 %v710, %v707
      %v909 = vpack.c.b16 %v711, %v708
      %v910 = vpack.c.b16 %v712, %v709
      %v911 = vpack.c.b16 %v716, %v713
      %v912 = vpack.c.b16 %v717, %v714
      %v913 = vpack.c.b16 %v718, %v715
      %v914 = vpack.c.b16 %v722, %v719
      %v915 = vpack.c.b16 %v723, %v720
      %v916 = vpack.c.b16 %v724, %v721
      %v917 = vpack.c.b16 %v728, %v725
      %v918 = vpack.c.b16 %v729, %v726
      %v919 = vpack.c.b16 %v730, %v727
      %v920 = vpack.c.b16 %v734, %v731
      %v921 = vpack.c.b16 %v735, %v732
      %v922 = vpack.c.b16 %v736, %v733
      %v923 = vpack.c.b16 %v740, %v737
      %v924 = vpack.c.b16 %v741, %v738
      %v925 = vpack.c.b16 %v742, %v739
      %v926 = vpack.c.b16 %v746, %v743
      %v927 = vpack.c.b16 %v747, %v744
      %v928 = vpack.c.b16 %v748, %v745
      %v929 = vpack.c.b16 %v752, %v749
      %v930 = vpack.c.b16 %v753, %v750
      %v931 = vpack.c.b16 %v754, %v751
      %v932 = vpack.c.b16 %v758, %v755
      %v933 = vpack.c.b16 %v759, %v756
      %v934 = vpack.c.b16 %v760, %v757
      %v935 = vpack.c.b16 %v764, %v761
      %v936 = vpack.c.b16 %v765, %v762
      %v937 = vpack.c.b16 %v766, %v763
      %v938 = vpack.c.b16 %v770, %v767
      %v939 = vpack.c.b16 %v771, %v768
      %v940 = vpack.c.b16 %v772, %v769
      %v941 = vpack.c.b16 %v776, %v773
      %v942 = vpack.c.b16 %v777, %v774
      %v943 = vpack.c.b16 %v778, %v775
      %v944 = vpack.c.b16 %v782, %v779
      %v945 = vpack.c.b16 %v783, %v780
      %v946 = vpack.c.b16 %v784, %v781
      %v947 = vpack.c.b16 %v788, %v785
      %v948 = vpack.c.b16 %v789, %v786
      %v949 = vpack.c.b16 %v790, %v787
      %v950 = vpack.c.b16 %v794, %v791
      %v951 = vpack.c.b16 %v795, %v792
      %v952 = vpack.c.b16 %v796, %v793
      %v953 = vpack.c.b16 %v800, %v797
      %v954 = vpack.c.b16 %v801, %v798
      %v955 = vpack.c.b16 %v802, %v799
      %v956 = vpack.c.b16 %v806, %v803
      %v957 = vpack.c.b16 %v807, %v804
      %v958 = vpack.c.b16 %v808, %v805
      %v959 = vpack.c.b16 %v812, %v809
      %v960 = vpack.c.b16 %v813, %v810
      %v961 = vpack.c.b16 %v814, %v811
      %v962 = vpack.c.b16 %v818, %v815
      %v963 = vpack.c.b16 %v819, %v816
      %v964 = vpack.c.b16 %v820, %v817
      %v965 = vpack.c.b16 %v824, %v821
      %v966 = vpack.c.b16 %v825, %v822
      %v967 = vpack.c.b16 %v826, %v823
      %v968 = vpack.c.b16 %v830, %v827
      %v969 = vpack.c.b16 %v831, %v828
      %v970 = vpack.c.b16 %v832, %v829
      %v971 = vpack.c.b16 %v836, %v833
      %v972 = vpack.c.b16 %v837, %v834
      %v973 = vpack.c.b16 %v838, %v835
      %v974 = vpack.c.b16 %v842, %v839
      %v975 = vpack.c.b16 %v843, %v840
      %v976 = vpack.c.b16 %v844, %v841
      %v977 = vpack.c.b16 %v848, %v845
      %v978 = vpack.c.b16 %v849, %v846
      %v979 = vpack.c.b16 %v850, %v847
      %v980 = vpack.c.b16 %v854, %v851
      %v981 = vpack.c.b16 %v855, %v852
      %v982 = vpack.c.b16 %v856, %v853
      %v983 = vpack.c.b16 %v860, %v857
      %v984 = vpack.c.b16 %v861, %v858
      %v985 = vpack.c.b16 %v862, %v859
      %v986 = vpack.c.b16 %v866, %v863
      %v987 = vpack.c.b16 %v867, %v864
      %v988 = vpack.c.b16 %v868, %v865
      %1109 = vmatprep.subr.bf16.mxu0 %v891
      %1110 = vmatpush1.bf16.msra.mxu0 %v890
      %1111 = vmatprep.subr.bf16.mxu0 %v888
      %1112 = vmatpush1.bf16.msra.mxu0 %v887
      %1113 = vmatprep.subr.bf16.mxu0 %v885
      %1114 = vmatpush1.bf16.msra.mxu0 %v884
      %1115 = vmatprep.subr.bf16.mxu0 %v882
      %1116 = vmatpush1.bf16.msra.mxu0 %v881
      %1117 = vmatprep.subr.bf16.mxu0 %v879
      %1118 = vmatpush1.bf16.msra.mxu0 %v878
      %1119 = vmatprep.subr.bf16.mxu0 %v876
      %1120 = vmatpush1.bf16.msra.mxu0 %v875
      %1121 = vmatprep.subr.bf16.mxu0 %v873
      %1122 = vmatpush1.bf16.msra.mxu0 %v872
      %1123 = vmatprep.subr.bf16.mxu0 %v870
      %1124 = vmatpush1.bf16.msra.mxu0 %v869
      %1125 = vmatprep.subr.bf16.mxu0 %v915
      %1126 = vmatpush2.bf16.msra.mxu0 %v914
      %1127 = vmatprep.subr.bf16.mxu0 %v912
      %1128 = vmatpush2.bf16.msra.mxu0 %v911
      %1129 = vmatprep.subr.bf16.mxu0 %v909
      %1130 = vmatpush2.bf16.msra.mxu0 %v908
      %1131 = vmatprep.subr.bf16.mxu0 %v906
      %1132 = vmatpush2.bf16.msra.mxu0 %v905
      %1133 = vmatprep.subr.bf16.mxu0 %v903
      %1134 = vmatpush2.bf16.msra.mxu0 %v902
      %1135 = vmatprep.subr.bf16.mxu0 %v900
      %1136 = vmatpush2.bf16.msra.mxu0 %v899
      %1137 = vmatprep.subr.bf16.mxu0 %v897
      %1138 = vmatpush2.bf16.msra.mxu0 %v896
      %1139 = vmatprep.subr.bf16.mxu0 %v894
      %1140 = vmatpush2.bf16.msra.mxu0 %v893
      %1141 = vmatprep.mubr.bf16.mxu0 %v460
      %1142 = vmatmul.mubr.bf16.gmra.mxu0 %v459
      %v1143 = vpop.f32.mrf.mxu0
      %v1144 = vadd.f32 0.0, %v1143
      %v1145 = vpop.f32.mrf.mxu0
      %v1146 = vadd.f32 0.0, %v1145
      %v1147 = vpop.f32.mrf.mxu0
      %v1148 = vpop.f32.mrf.mxu0
      %1149 = vdwg.mxu0
      %1150 = vmatprep.subr.bf16.mxu0 %v939
      %1151 = vmatpush1.bf16.msra.mxu0 %v938
      %1152 = vmatprep.subr.bf16.mxu0 %v936
      %1153 = vmatpush1.bf16.msra.mxu0 %v935
      %1154 = vmatprep.subr.bf16.mxu0 %v933
      %1155 = vmatpush1.bf16.msra.mxu0 %v932
      %1156 = vmatprep.subr.bf16.mxu0 %v930
      %1157 = vmatpush1.bf16.msra.mxu0 %v929
      %1158 = vmatprep.subr.bf16.mxu0 %v927
      %1159 = vmatpush1.bf16.msra.mxu0 %v926
      %1160 = vmatprep.subr.bf16.mxu0 %v924
      %1161 = vmatpush1.bf16.msra.mxu0 %v923
      %1162 = vmatprep.subr.bf16.mxu0 %v921
      %1163 = vmatpush1.bf16.msra.mxu0 %v920
      %1164 = vmatprep.subr.bf16.mxu0 %v918
      %1165 = vmatpush1.bf16.msra.mxu0 %v917
      %1166 = vmatprep.subr.bf16.mxu0 %v963
      %1167 = vmatpush2.bf16.msra.mxu0 %v962
      %1168 = vmatprep.subr.bf16.mxu0 %v960
      %1169 = vmatpush2.bf16.msra.mxu0 %v959
      %1170 = vmatprep.subr.bf16.mxu0 %v957
      %1171 = vmatpush2.bf16.msra.mxu0 %v956
      %1172 = vmatprep.subr.bf16.mxu0 %v954
      %1173 = vmatpush2.bf16.msra.mxu0 %v953
      %1174 = vmatprep.subr.bf16.mxu0 %v951
      %1175 = vmatpush2.bf16.msra.mxu0 %v950
      %1176 = vmatprep.subr.bf16.mxu0 %v948
      %1177 = vmatpush2.bf16.msra.mxu0 %v947
      %1178 = vmatprep.subr.bf16.mxu0 %v945
      %1179 = vmatpush2.bf16.msra.mxu0 %v944
      %1180 = vmatprep.subr.bf16.mxu0 %v942
      %1181 = vmatpush2.bf16.msra.mxu0 %v941
      %1182 = vmatprep.mubr.bf16.mxu0 %v462
      %1183 = vmatmul.mubr.bf16.gmra.mxu0 %v461
      %v1184 = vpop.f32.mrf.mxu0
      %v1185 = vadd.f32 %v1144, %v1184
      %v1186 = vpop.f32.mrf.mxu0
      %v1187 = vadd.f32 %v1146, %v1186
      %v1188 = vpop.f32.mrf.mxu0
      %v1189 = vpop.f32.mrf.mxu0
      %1190 = vdwg.mxu0
      %1191 = vmatprep.subr.bf16.mxu0 %v987
      %1192 = vmatpush1.bf16.msra.mxu0 %v986
      %1193 = vmatprep.subr.bf16.mxu0 %v984
      %1194 = vmatpush1.bf16.msra.mxu0 %v983
      %1195 = vmatprep.subr.bf16.mxu0 %v981
      %1196 = vmatpush1.bf16.msra.mxu0 %v980
      %1197 = vmatprep.subr.bf16.mxu0 %v978
      %1198 = vmatpush1.bf16.msra.mxu0 %v977
      %1199 = vmatprep.subr.bf16.mxu0 %v975
      %1200 = vmatpush1.bf16.msra.mxu0 %v974
      %1201 = vmatprep.subr.bf16.mxu0 %v972
      %1202 = vmatpush1.bf16.msra.mxu0 %v971
      %1203 = vmatprep.subr.bf16.mxu0 %v969
      %1204 = vmatpush1.bf16.msra.mxu0 %v968
      %1205 = vmatprep.subr.bf16.mxu0 %v966
      %1206 = vmatpush1.bf16.msra.mxu0 %v965
      %1207 = vmatprep.subr.bf16.mxu0 0
      %1208 = vmatpush2.bf16.msra.mxu0 0
      %1209 = vmatprep.subr.bf16.mxu0 0
      %1210 = vmatpush2.bf16.msra.mxu0 0
      %1211 = vmatprep.subr.bf16.mxu0 0
      %1212 = vmatpush2.bf16.msra.mxu0 0
      %1213 = vmatprep.subr.bf16.mxu0 0
      %1214 = vmatpush2.bf16.msra.mxu0 0
      %1215 = vmatprep.subr.bf16.mxu0 0
      %1216 = vmatpush2.bf16.msra.mxu0 0
      %1217 = vmatprep.subr.bf16.mxu0 0
      %1218 = vmatpush2.bf16.msra.mxu0 0
      %1219 = vmatprep.subr.bf16.mxu0 0
      %1220 = vmatpush2.bf16.msra.mxu0 0
      %1221 = vmatprep.subr.bf16.mxu0 0
      %1222 = vmatpush2.bf16.msra.mxu0 0
      %1223 = vmatprep.mubr.bf16.mxu0 0
      %1224 = vmatmul.mubr.bf16.gmra.mxu0 %v463
      %v1225 = vpop.f32.mrf.mxu0
      %v1226 = vadd.f32 %v1185, %v1225
      %v1227 = vpop.f32.mrf.mxu0
      %v1228 = vadd.f32 %v1187, %v1227
      %v1229 = vpop.f32.mrf.mxu0
      %v1230 = vpop.f32.mrf.mxu0
      %1231 = vdwg.mxu0
      %1232 = vmatprep.subr.bf16.mxu0 0
      %1233 = vmatpush1.bf16.msra.mxu0 %v892
      %1234 = vmatprep.subr.bf16.mxu0 0
      %1235 = vmatpush1.bf16.msra.mxu0 %v889
      %1236 = vmatprep.subr.bf16.mxu0 0
      %1237 = vmatpush1.bf16.msra.mxu0 %v886
      %1238 = vmatprep.subr.bf16.mxu0 0
      %1239 = vmatpush1.bf16.msra.mxu0 %v883
      %1240 = vmatprep.subr.bf16.mxu0 0
      %1241 = vmatpush1.bf16.msra.mxu0 %v880
      %1242 = vmatprep.subr.bf16.mxu0 0
      %1243 = vmatpush1.bf16.msra.mxu0 %v877
      %1244 = vmatprep.subr.bf16.mxu0 0
      %1245 = vmatpush1.bf16.msra.mxu0 %v874
      %1246 = vmatprep.subr.bf16.mxu0 0
      %1247 = vmatpush1.bf16.msra.mxu0 %v871
      %1248 = vmatprep.subr.bf16.mxu0 0
      %1249 = vmatpush2.bf16.msra.mxu0 %v916
      %1250 = vmatprep.subr.bf16.mxu0 0
      %1251 = vmatpush2.bf16.msra.mxu0 %v913
      %1252 = vmatprep.subr.bf16.mxu0 0
      %1253 = vmatpush2.bf16.msra.mxu0 %v910
      %1254 = vmatprep.subr.bf16.mxu0 0
      %1255 = vmatpush2.bf16.msra.mxu0 %v907
      %1256 = vmatprep.subr.bf16.mxu0 0
      %1257 = vmatpush2.bf16.msra.mxu0 %v904
      %1258 = vmatprep.subr.bf16.mxu0 0
      %1259 = vmatpush2.bf16.msra.mxu0 %v901
      %1260 = vmatprep.subr.bf16.mxu0 0
      %1261 = vmatpush2.bf16.msra.mxu0 %v898
      %1262 = vmatprep.subr.bf16.mxu0 0
      %1263 = vmatpush2.bf16.msra.mxu0 %v895
      %1264 = vmatprep.mubr.bf16.mxu0 %v460
      %1265 = vmatmul.mubr.bf16.gmra.mxu0 %v459
      %v1266 = vpop.f32.mrf.mxu0
      %v1267 = vadd.f32 0.0, %v1266
      %v1268 = vpop.f32.mrf.mxu0
      %v1269 = vpop.f32.mrf.mxu0
      %v1270 = vpop.f32.mrf.mxu0
      %1271 = vdwg.mxu0
      %1272 = vmatprep.subr.bf16.mxu0 0
      %1273 = vmatpush1.bf16.msra.mxu0 %v940
      %1274 = vmatprep.subr.bf16.mxu0 0
      %1275 = vmatpush1.bf16.msra.mxu0 %v937
      %1276 = vmatprep.subr.bf16.mxu0 0
      %1277 = vmatpush1.bf16.msra.mxu0 %v934
      %1278 = vmatprep.subr.bf16.mxu0 0
      %1279 = vmatpush1.bf16.msra.mxu0 %v931
      %1280 = vmatprep.subr.bf16.mxu0 0
      %1281 = vmatpush1.bf16.msra.mxu0 %v928
      %1282 = vmatprep.subr.bf16.mxu0 0
      %1283 = vmatpush1.bf16.msra.mxu0 %v925
      %1284 = vmatprep.subr.bf16.mxu0 0
      %1285 = vmatpush1.bf16.msra.mxu0 %v922
      %1286 = vmatprep.subr.bf16.mxu0 0
      %1287 = vmatpush1.bf16.msra.mxu0 %v919
      %1288 = vmatprep.subr.bf16.mxu0 0
      %1289 = vmatpush2.bf16.msra.mxu0 %v964
      %1290 = vmatprep.subr.bf16.mxu0 0
      %1291 = vmatpush2.bf16.msra.mxu0 %v961
      %1292 = vmatprep.subr.bf16.mxu0 0
      %1293 = vmatpush2.bf16.msra.mxu0 %v958
      %1294 = vmatprep.subr.bf16.mxu0 0
      %1295 = vmatpush2.bf16.msra.mxu0 %v955
      %1296 = vmatprep.subr.bf16.mxu0 0
      %1297 = vmatpush2.bf16.msra.mxu0 %v952
      %1298 = vmatprep.subr.bf16.mxu0 0
      %1299 = vmatpush2.bf16.msra.mxu0 %v949
      %1300 = vmatprep.subr.bf16.mxu0 0
      %1301 = vmatpush2.bf16.msra.mxu0 %v946
      %1302 = vmatprep.subr.bf16.mxu0 0
      %1303 = vmatpush2.bf16.msra.mxu0 %v943
      %1304 = vmatprep.mubr.bf16.mxu0 %v462
      %1305 = vmatmul.mubr.bf16.gmra.mxu0 %v461
      %v1306 = vpop.f32.mrf.mxu0
      %v1307 = vadd.f32 %v1267, %v1306
      %v1308 = vpop.f32.mrf.mxu0
      %v1309 = vpop.f32.mrf.mxu0
      %v1310 = vpop.f32.mrf.mxu0
      %1311 = vdwg.mxu0
      %1312 = vmatprep.subr.bf16.mxu0 0
      %1313 = vmatpush1.bf16.msra.mxu0 %v988
      %1314 = vmatprep.subr.bf16.mxu0 0
      %1315 = vmatpush1.bf16.msra.mxu0 %v985
      %1316 = vmatprep.subr.bf16.mxu0 0
      %1317 = vmatpush1.bf16.msra.mxu0 %v982
      %1318 = vmatprep.subr.bf16.mxu0 0
      %1319 = vmatpush1.bf16.msra.mxu0 %v979
      %1320 = vmatprep.subr.bf16.mxu0 0
      %1321 = vmatpush1.bf16.msra.mxu0 %v976
      %1322 = vmatprep.subr.bf16.mxu0 0
      %1323 = vmatpush1.bf16.msra.mxu0 %v973
      %1324 = vmatprep.subr.bf16.mxu0 0
      %1325 = vmatpush1.bf16.msra.mxu0 %v970
      %1326 = vmatprep.subr.bf16.mxu0 0
      %1327 = vmatpush1.bf16.msra.mxu0 %v967
      %1328 = vmatprep.subr.bf16.mxu0 0
      %1329 = vmatpush2.bf16.msra.mxu0 0
      %1330 = vmatprep.subr.bf16.mxu0 0
      %1331 = vmatpush2.bf16.msra.mxu0 0
      %1332 = vmatprep.subr.bf16.mxu0 0
      %1333 = vmatpush2.bf16.msra.mxu0 0
      %1334 = vmatprep.subr.bf16.mxu0 0
      %1335 = vmatpush2.bf16.msra.mxu0 0
      %1336 = vmatprep.subr.bf16.mxu0 0
      %1337 = vmatpush2.bf16.msra.mxu0 0
      %1338 = vmatprep.subr.bf16.mxu0 0
      %1339 = vmatpush2.bf16.msra.mxu0 0
      %1340 = vmatprep.subr.bf16.mxu0 0
      %1341 = vmatpush2.bf16.msra.mxu0 0
      %1342 = vmatprep.subr.bf16.mxu0 0
      %1343 = vmatpush2.bf16.msra.mxu0 0
      %1344 = vmatprep.mubr.bf16.mxu0 0
      %1345 = vmatmul.mubr.bf16.gmra.mxu0 %v463
      %v1346 = vpop.f32.mrf.mxu0
      %v1347 = vadd.f32 %v1307, %v1346
      %v1348 = vpop.f32.mrf.mxu0
      %v1349 = vpop.f32.mrf.mxu0
      %v1350 = vpop.f32.mrf.mxu0
      %1351 = vdwg.mxu0
      %v1352 = vadd.f32 %v285, %v1226
      %v1353 = vadd.f32 %v286, %v1228
      %v1354 = vadd.f32 %v287, %v1347
      %1355 = vst [vmem:[#allocation2] sm:$0xff] %v1352
      %1356 = vst [vmem:[#allocation2 + $0x8] sm:$0xff] %v1353
      %1357 = vst [vmem:[#allocation2 + $0x10] sm:$0xff] %v1354
      %p1358 = scmp.eq.s32.totalorder %s21, 1
      // Predicated region
      $region37: #{_time_embedding.3} parent=31 // pred_check
        %p1359 = pneg %p1358
      $region38: #{_time_embedding.3} parent=31 // pred_check_branch
        %1361 = sbr.rel (%p1359) target = $region40
      $region39: #{_time_embedding.3} parent=31 // pred_region
        %v1362 = vld [vmem:[#allocation2] sm:$0xff]
        %v1363 = vld [vmem:[#allocation2 + $0x8] sm:$0xff]
        %v1364 = vld [vmem:[#allocation2 + $0x10] sm:$0xff]
        %v1365 = vld [vmem:[%s265] sm:$0x7]
        %v1367 = vlaneseq
        %v1368 = vshrl.u32 %v1367, 7
        %v1369 = vsub.s32 0, %v1368
        %v1370 = vrot.slane %v1365, %v1369
        %v1371 = vlaneseq
        %v1372 = vshrl.u32 %v1371, 7
        %v1373 = vsub.s32 1, %v1372
        %v1374 = vrot.slane %v1365, %v1373
        %v1375 = vlaneseq
        %v1376 = vshrl.u32 %v1375, 7
        %v1377 = vsub.s32 2, %v1376
        %v1378 = vrot.slane %v1365, %v1377
        %v1382 = vadd.f32 %v1362, %v1370
        %v1383 = vadd.f32 %v1363, %v1374
        %v1384 = vadd.f32 %v1364, %v1378
        %v1385 = vxor.u32 %v1382, 2147483648
        %v1386 = vxor.u32 %v1383, 2147483648
        %v1387 = vxor.u32 %v1384, 2147483648
        %v1388 = vmul.f32 %v1385, 1.442695
        %v1389 = vpow.pop %v1388
        %v1390 = vmul.f32 %v1386, 1.442695
        %v1391 = vpow.pop %v1390
        %v1392 = vmul.f32 %v1387, 1.442695
        %v1393 = vpow.pop %v1392
        %v1394 = vadd.f32 %v1389, 1.0
        %v1395 = vadd.f32 %v1391, 1.0
        %v1396 = vadd.f32 %v1393, 1.0
        %v1397 = vrcp.pop %v1394
        %v1398 = vmul.f32 1.0, %v1397
        %v1399 = vrcp.pop %v1395
        %v1400 = vmul.f32 1.0, %v1399
        %v1401 = vrcp.pop %v1396
        %v1402 = vmul.f32 1.0, %v1401
        %v1403 = vmul.f32 %v1382, %v1398
        %v1404 = vmul.f32 %v1383, %v1400
        %v1405 = vmul.f32 %v1384, %v1402
        %1406 = vst [vmem:[%s275] sm:$0xff] %v1403
        %1407 = vst [vmem:[%s275 + $0x8] sm:$0xff] %v1404
        %1408 = vst [vmem:[%s275 + $0x10] sm:$0xff] %v1405
      $region40: #{_time_embedding.3} parent=31 // pred_fallthru
        _
      %s1409 = smul.u32 3, %s20
      %p1410 = scmp.lt.s32.totalorder %s19, 0
      %s1411 = scalar_select %p1410, %s19, 0
      %p1412 = scmp.lt.s32.totalorder %s1409, 2
      %s1413 = scalar_select %p1412, %s1409, 2
      %s1414 = smul.addr %s1411, 3
      %s1415 = sadd.s32 %s1413, %s1414
      %s1416 = smul.addr %s1415, 8
      %s1417 = scalar_lea.vmem %s3, %s1416
      // Predicated region
      $region41: #{_time_embedding.3} parent=31 // pred_check
        %p1418 = pneg %p135
      $region42: #{_time_embedding.3} parent=31 // pred_check_branch
        %1420 = sbr.rel (%p1418) target = $region44
      $region43: #{_time_embedding.3} parent=31 // pred_region
        %s1421 = smul.u32 3, %s20
      $region44: #{_time_embedding.3} parent=31 // pred_fallthru
        _
      // Predicated region
      $region45: #{_time_embedding.3} parent=31 // pred_check
        %p1422 = pneg %p135
      $region46: #{_time_embedding.3} parent=31 // pred_check_branch
        %1424 = sbr.rel (%p1422) target = $region48
      $region47: #{_time_embedding.3} parent=31 // pred_region
        %s1425 = smul.u32 3, %s20
        %p1426 = scmp.lt.s32.totalorder %s19, 0
        %s1427 = scalar_select %p1426, %s19, 0
        %p1428 = scmp.lt.s32.totalorder %s1425, 2
        %s1429 = scalar_select %p1428, %s1425, 2
        %s1430 = smul.addr %s1427, 3
        %s1431 = sadd.s32 %s1429, %s1430
        %s1432 = smul.addr %s1431, 8
        %s1433 = scalar_lea.vmem %s3, %s1432
      $region48: #{_time_embedding.3} parent=31 // pred_fallthru
        _
    $region32: #{_time_embedding.3} parent=5 // pred_fallthru
      _
    %p1434 = scmp.le.s32.totalorder 2, %s9
    // Predicated region
    $region49: #{_time_embedding.3} parent=5 // pred_check
      %p1435 = pneg %p1434
    $region50: #{_time_embedding.3} parent=5 // pred_check_branch
      %1437 = sbr.rel (%p1435) target = $region52
    $region51: #{_time_embedding.3} parent=5 // pred_region
      %s1438 = ssub.s32 %s9, 2
    $region52: #{_time_embedding.3} parent=5 // pred_fallthru
      _
  $region6: #{_time_embedding.3} parent=0 // loop_footer
    %s13 = sadd.s32 1, %s9
  $region7: #{_time_embedding.3} parent=0 // loop_footer_branch
    %8 = sbr.rel target = $region3
  $region8: #{_time_embedding.3} parent=0 // loop_exit
    _

// kernel: _time_embedding.2
$region0: #{_time_embedding.2}
  #allocation0 [shape = 'u32[]', space=smem, size = 0x4, offset = 0x4, fixed_abs, tag = 'smem constant byte address 0x4 - core index']
  #allocation1 [shape = 'u32[144,128]{1,0:T(1,128)}', space=vmem, size = 0x12000, scoped, tag = 'internal scratch']
  #allocation2 [shape = 'f32[8,1280]{1,0:T(8,128)}', space=vmem, size = 0xa000, scoped, tag = 'scratch operand']
  %s0 = inlined_call_operand.vmem [shape: bf16[8,384], index: 0, kind: input, shape index: {}]
  %s1 = inlined_call_operand.hbm [shape: bf16[384,1280], index: 1, kind: input, shape index: {}]
  %s2 = inlined_call_operand.vmem [shape: f32[1,1280], index: 2, kind: input, shape index: {}]
  %s3 = inlined_call_operand.vmem [shape: f32[8,1280], index: 3, kind: output, shape index: {}]
  %s4 = sld [smem:[#allocation0]]
  $region34: #{_time_embedding.2} parent=0
    _
  %s6 = ssub.s32 1, %s4
  %s7 = scalar_select 0, %s6, %s4
  $region1: #{_time_embedding.2} parent=0
    #allocation3 [shape = 'u8[983040]{0}', space=vmem, size = 0xf0000, scoped, tag = 'input window, operand 1, single buffered']
    #allocation4 [shape = 's32[1]{0}', space=sflag, size = 0x4, scoped, tag = 'scoped memory for _time_embedding.2']
    %8 = vsyncpa [#allocation4], 0
    // Predicated region
    $region2: #{_time_embedding.2} parent=1 // pred_check
      _
    $region3: #{_time_embedding.2} parent=1 // pred_check_branch
      %10 = sbr.rel (0) target = $region5
    $region4: #{_time_embedding.2} parent=1 // pred_region
      _
    $region5: #{_time_embedding.2} parent=1 // pred_fallthru
      _
    // Predicated region
    $region6: #{_time_embedding.2} parent=1 // pred_check
      _
    $region7: #{_time_embedding.2} parent=1 // pred_check_branch
      %12 = sbr.rel (0) target = $region9
    $region8: #{_time_embedding.2} parent=1 // pred_region
      %s14 = ssub.s32 30720, 30720
      %15 = vsyncadd [#allocation4], %s14
      %s16 = sshll.u32 [#allocation3], 4
      %s17 = int_to_ptr.vmem [resolvable:$true] %s16
      %22 = dma.hbm_to_vmem [thread:$0]  %s1, 30720, %s17, [#allocation4], 640, 640, 40
    $region9: #{_time_embedding.2} parent=1 // pred_fallthru
      _
    // Predicated region
    $region10: #{_time_embedding.2} parent=1 // pred_check
      _
    $region11: #{_time_embedding.2} parent=1 // pred_check_branch
      %24 = sbr.rel (0) target = $region13
    $region12: #{_time_embedding.2} parent=1 // pred_region
      _
    $region13: #{_time_embedding.2} parent=1 // pred_fallthru
      _
    // Predicated region
    $region14: #{_time_embedding.2} parent=1 // pred_check
      _
    $region15: #{_time_embedding.2} parent=1 // pred_check_branch
      %26 = sbr.rel (0) target = $region17
    $region16: #{_time_embedding.2} parent=1 // pred_region
      %27 = dma.done [#allocation4], 30720
    $region17: #{_time_embedding.2} parent=1 // pred_fallthru
      _
    %p29 = scmp.eq.s32.totalorder 0, 0
    // Predicated region
    $region18: #{_time_embedding.2} parent=1 // pred_check
      %p30 = pneg %p29
    $region19: #{_time_embedding.2} parent=1 // pred_check_branch
      %32 = sbr.rel (%p30) target = $region21
    $region20: #{_time_embedding.2} parent=1 // pred_region
      %33 = vst [vmem:[#allocation2] sm:$0xff] 0.0
      %34 = vst [vmem:[#allocation2 + $0x8] sm:$0xff] 0.0
      %35 = vst [vmem:[#allocation2 + $0x10] sm:$0xff] 0.0
      %36 = vst [vmem:[#allocation2 + $0x18] sm:$0xff] 0.0
      %37 = vst [vmem:[#allocation2 + $0x20] sm:$0xff] 0.0
      %38 = vst [vmem:[#allocation2 + $0x28] sm:$0xff] 0.0
      %39 = vst [vmem:[#allocation2 + $0x30] sm:$0xff] 0.0
      %40 = vst [vmem:[#allocation2 + $0x38] sm:$0xff] 0.0
      %41 = vst [vmem:[#allocation2 + $0x40] sm:$0xff] 0.0
      %42 = vst [vmem:[#allocation2 + $0x48] sm:$0xff] 0.0
    $region21: #{_time_embedding.2} parent=1 // pred_fallthru
      _
    %v43 = vld [vmem:[#allocation2] sm:$0xff]
    %v44 = vld [vmem:[#allocation2 + $0x8] sm:$0xff]
    %v45 = vld [vmem:[#allocation2 + $0x10] sm:$0xff]
    %v46 = vld [vmem:[#allocation2 + $0x18] sm:$0xff]
    %v47 = vld [vmem:[#allocation2 + $0x20] sm:$0xff]
    %v48 = vld [vmem:[#allocation2 + $0x28] sm:$0xff]
    %v49 = vld [vmem:[#allocation2 + $0x30] sm:$0xff]
    %v50 = vld [vmem:[#allocation2 + $0x38] sm:$0xff]
    %v51 = vld [vmem:[#allocation2 + $0x40] sm:$0xff]
    %v52 = vld [vmem:[#allocation2 + $0x48] sm:$0xff]
    %v53 = vld [vmem:[%s0] sm:$0xff]
    %v54 = vld [vmem:[%s0 + $0x8] sm:$0xf]
    %v55 = vld [vmem:[#allocation3] sm:$0xff]
    %v56 = vld [vmem:[#allocation3 + $0x8] sm:$0xff]
    %v57 = vld [vmem:[#allocation3 + $0x10] sm:$0xff]
    %v58 = vld [vmem:[#allocation3 + $0x18] sm:$0xff]
    %v59 = vld [vmem:[#allocation3 + $0x20] sm:$0xff]
    %v60 = vld [vmem:[#allocation3 + $0x28] sm:$0xff]
    %v61 = vld [vmem:[#allocation3 + $0x30] sm:$0xff]
    %v62 = vld [vmem:[#allocation3 + $0x38] sm:$0xff]
    %v63 = vld [vmem:[#allocation3 + $0x40] sm:$0xff]
    %v64 = vld [vmem:[#allocation3 + $0x48] sm:$0xff]
    %v65 = vld [vmem:[#allocation3 + $0x50] sm:$0xff]
    %v66 = vld [vmem:[#allocation3 + $0x58] sm:$0xff]
    %v67 = vld [vmem:[#allocation3 + $0x60] sm:$0xff]
    %v68 = vld [vmem:[#allocation3 + $0x68] sm:$0xff]
    %v69 = vld [vmem:[#allocation3 + $0x70] sm:$0xff]
    %v70 = vld [vmem:[#allocation3 + $0x78] sm:$0xff]
    %v71 = vld [vmem:[#allocation3 + $0x80] sm:$0xff]
    %v72 = vld [vmem:[#allocation3 + $0x88] sm:$0xff]
    %v73 = vld [vmem:[#allocation3 + $0x90] sm:$0xff]
    %v74 = vld [vmem:[#allocation3 + $0x98] sm:$0xff]
    %v75 = vld [vmem:[#allocation3 + $0xa0] sm:$0xff]
    %v76 = vld [vmem:[#allocation3 + $0xa8] sm:$0xff]
    %v77 = vld [vmem:[#allocation3 + $0xb0] sm:$0xff]
    %v78 = vld [vmem:[#allocation3 + $0xb8] sm:$0xff]
    %v79 = vld [vmem:[#allocation3 + $0xc0] sm:$0xff]
    %v80 = vld [vmem:[#allocation3 + $0xc8] sm:$0xff]
    %v81 = vld [vmem:[#allocation3 + $0xd0] sm:$0xff]
    %v82 = vld [vmem:[#allocation3 + $0xd8] sm:$0xff]
    %v83 = vld [vmem:[#allocation3 + $0xe0] sm:$0xff]
    %v84 = vld [vmem:[#allocation3 + $0xe8] sm:$0xff]
    %v85 = vld [vmem:[#allocation3 + $0xf0] sm:$0xff]
    %v86 = vld [vmem:[#allocation3 + $0xf8] sm:$0xff]
    %v87 = vld [vmem:[#allocation3 + $0x100] sm:$0xff]
    %v88 = vld [vmem:[#allocation3 + $0x108] sm:$0xff]
    %v89 = vld [vmem:[#allocation3 + $0x110] sm:$0xff]
    %v90 = vld [vmem:[#allocation3 + $0x118] sm:$0xff]
    %v91 = vld [vmem:[#allocation3 + $0x120] sm:$0xff]
    %v92 = vld [vmem:[#allocation3 + $0x128] sm:$0xff]
    %v93 = vld [vmem:[#allocation3 + $0x130] sm:$0xff]
    %v94 = vld [vmem:[#allocation3 + $0x138] sm:$0xff]
    %v95 = vld [vmem:[#allocation3 + $0x140] sm:$0xff]
    %v96 = vld [vmem:[#allocation3 + $0x148] sm:$0xff]
    %v97 = vld [vmem:[#allocation3 + $0x150] sm:$0xff]
    %v98 = vld [vmem:[#allocation3 + $0x158] sm:$0xff]
    %v99 = vld [vmem:[#allocation3 + $0x160] sm:$0xff]
    %v100 = vld [vmem:[#allocation3 + $0x168] sm:$0xff]
    %v101 = vld [vmem:[#allocation3 + $0x170] sm:$0xff]
    %v102 = vld [vmem:[#allocation3 + $0x178] sm:$0xff]
    %v103 = vld [vmem:[#allocation3 + $0x180] sm:$0xff]
    %v104 = vld [vmem:[#allocation3 + $0x188] sm:$0xff]
    %v105 = vld [vmem:[#allocation3 + $0x190] sm:$0xff]
    %v106 = vld [vmem:[#allocation3 + $0x198] sm:$0xff]
    %v107 = vld [vmem:[#allocation3 + $0x1a0] sm:$0xff]
    %v108 = vld [vmem:[#allocation3 + $0x1a8] sm:$0xff]
    %v109 = vld [vmem:[#allocation3 + $0x1b0] sm:$0xff]
    %v110 = vld [vmem:[#allocation3 + $0x1b8] sm:$0xff]
    %v111 = vld [vmem:[#allocation3 + $0x1c0] sm:$0xff]
    %v112 = vld [vmem:[#allocation3 + $0x1c8] sm:$0xff]
    %v113 = vld [vmem:[#allocation3 + $0x1d0] sm:$0xff]
    %v114 = vld [vmem:[#allocation3 + $0x1d8] sm:$0xff]
    %v115 = vld [vmem:[#allocation3 + $0x1e0] sm:$0xff]
    %v116 = vld [vmem:[#allocation3 + $0x1e8] sm:$0xff]
    %v117 = vld [vmem:[#allocation3 + $0x1f0] sm:$0xff]
    %v118 = vld [vmem:[#allocation3 + $0x1f8] sm:$0xff]
    %v119 = vld [vmem:[#allocation3 + $0x200] sm:$0xff]
    %v120 = vld [vmem:[#allocation3 + $0x208] sm:$0xff]
    %v121 = vld [vmem:[#allocation3 + $0x210] sm:$0xff]
    %v122 = vld [vmem:[#allocation3 + $0x218] sm:$0xff]
    %v123 = vld [vmem:[#allocation3 + $0x220] sm:$0xff]
    %v124 = vld [vmem:[#allocation3 + $0x228] sm:$0xff]
    %v125 = vld [vmem:[#allocation3 + $0x230] sm:$0xff]
    %v126 = vld [vmem:[#allocation3 + $0x238] sm:$0xff]
    %v127 = vld [vmem:[#allocation3 + $0x240] sm:$0xff]
    %v128 = vld [vmem:[#allocation3 + $0x248] sm:$0xff]
    %v129 = vld [vmem:[#allocation3 + $0x250] sm:$0xff]
    %v130 = vld [vmem:[#allocation3 + $0x258] sm:$0xff]
    %v131 = vld [vmem:[#allocation3 + $0x260] sm:$0xff]
    %v132 = vld [vmem:[#allocation3 + $0x268] sm:$0xff]
    %v133 = vld [vmem:[#allocation3 + $0x270] sm:$0xff]
    %v134 = vld [vmem:[#allocation3 + $0x278] sm:$0xff]
    %v135 = vld [vmem:[#allocation3 + $0x280] sm:$0xff]
    %v136 = vld [vmem:[#allocation3 + $0x288] sm:$0xff]
    %v137 = vld [vmem:[#allocation3 + $0x290] sm:$0xff]
    %v138 = vld [vmem:[#allocation3 + $0x298] sm:$0xff]
    %v139 = vld [vmem:[#allocation3 + $0x2a0] sm:$0xff]
    %v140 = vld [vmem:[#allocation3 + $0x2a8] sm:$0xff]
    %v141 = vld [vmem:[#allocation3 + $0x2b0] sm:$0xff]
    %v142 = vld [vmem:[#allocation3 + $0x2b8] sm:$0xff]
    %v143 = vld [vmem:[#allocation3 + $0x2c0] sm:$0xff]
    %v144 = vld [vmem:[#allocation3 + $0x2c8] sm:$0xff]
    %v145 = vld [vmem:[#allocation3 + $0x2d0] sm:$0xff]
    %v146 = vld [vmem:[#allocation3 + $0x2d8] sm:$0xff]
    %v147 = vld [vmem:[#allocation3 + $0x2e0] sm:$0xff]
    %v148 = vld [vmem:[#allocation3 + $0x2e8] sm:$0xff]
    %v149 = vld [vmem:[#allocation3 + $0x2f0] sm:$0xff]
    %v150 = vld [vmem:[#allocation3 + $0x2f8] sm:$0xff]
    %v151 = vld [vmem:[#allocation3 + $0x300] sm:$0xff]
    %v152 = vld [vmem:[#allocation3 + $0x308] sm:$0xff]
    %v153 = vld [vmem:[#allocation3 + $0x310] sm:$0xff]
    %v154 = vld [vmem:[#allocation3 + $0x318] sm:$0xff]
    %v155 = vld [vmem:[#allocation3 + $0x320] sm:$0xff]
    %v156 = vld [vmem:[#allocation3 + $0x328] sm:$0xff]
    %v157 = vld [vmem:[#allocation3 + $0x330] sm:$0xff]
    %v158 = vld [vmem:[#allocation3 + $0x338] sm:$0xff]
    %v159 = vld [vmem:[#allocation3 + $0x340] sm:$0xff]
    %v160 = vld [vmem:[#allocation3 + $0x348] sm:$0xff]
    %v161 = vld [vmem:[#allocation3 + $0x350] sm:$0xff]
    %v162 = vld [vmem:[#allocation3 + $0x358] sm:$0xff]
    %v163 = vld [vmem:[#allocation3 + $0x360] sm:$0xff]
    %v164 = vld [vmem:[#allocation3 + $0x368] sm:$0xff]
    %v165 = vld [vmem:[#allocation3 + $0x370] sm:$0xff]
    %v166 = vld [vmem:[#allocation3 + $0x378] sm:$0xff]
    %v167 = vld [vmem:[#allocation3 + $0x380] sm:$0xff]
    %v168 = vld [vmem:[#allocation3 + $0x388] sm:$0xff]
    %v169 = vld [vmem:[#allocation3 + $0x390] sm:$0xff]
    %v170 = vld [vmem:[#allocation3 + $0x398] sm:$0xff]
    %v171 = vld [vmem:[#allocation3 + $0x3a0] sm:$0xff]
    %v172 = vld [vmem:[#allocation3 + $0x3a8] sm:$0xff]
    %v173 = vld [vmem:[#allocation3 + $0x3b0] sm:$0xff]
    %v174 = vld [vmem:[#allocation3 + $0x3b8] sm:$0xff]
    %v175 = vld [vmem:[#allocation3 + $0x3c0] sm:$0xff]
    %v176 = vld [vmem:[#allocation3 + $0x3c8] sm:$0xff]
    %v177 = vld [vmem:[#allocation3 + $0x3d0] sm:$0xff]
    %v178 = vld [vmem:[#allocation3 + $0x3d8] sm:$0xff]
    %v179 = vld [vmem:[#allocation3 + $0x3e0] sm:$0xff]
    %v180 = vld [vmem:[#allocation3 + $0x3e8] sm:$0xff]
    %v181 = vld [vmem:[#allocation3 + $0x3f0] sm:$0xff]
    %v182 = vld [vmem:[#allocation3 + $0x3f8] sm:$0xff]
    %v183 = vld [vmem:[#allocation3 + $0x400] sm:$0xff]
    %v184 = vld [vmem:[#allocation3 + $0x408] sm:$0xff]
    %v185 = vld [vmem:[#allocation3 + $0x410] sm:$0xff]
    %v186 = vld [vmem:[#allocation3 + $0x418] sm:$0xff]
    %v187 = vld [vmem:[#allocation3 + $0x420] sm:$0xff]
    %v188 = vld [vmem:[#allocation3 + $0x428] sm:$0xff]
    %v189 = vld [vmem:[#allocation3 + $0x430] sm:$0xff]
    %v190 = vld [vmem:[#allocation3 + $0x438] sm:$0xff]
    %v191 = vld [vmem:[#allocation3 + $0x440] sm:$0xff]
    %v192 = vld [vmem:[#allocation3 + $0x448] sm:$0xff]
    %v193 = vld [vmem:[#allocation3 + $0x450] sm:$0xff]
    %v194 = vld [vmem:[#allocation3 + $0x458] sm:$0xff]
    %v195 = vld [vmem:[#allocation3 + $0x460] sm:$0xff]
    %v196 = vld [vmem:[#allocation3 + $0x468] sm:$0xff]
    %v197 = vld [vmem:[#allocation3 + $0x470] sm:$0xff]
    %v198 = vld [vmem:[#allocation3 + $0x478] sm:$0xff]
    %v199 = vld [vmem:[#allocation3 + $0x480] sm:$0xff]
    %v200 = vld [vmem:[#allocation3 + $0x488] sm:$0xff]
    %v201 = vld [vmem:[#allocation3 + $0x490] sm:$0xff]
    %v202 = vld [vmem:[#allocation3 + $0x498] sm:$0xff]
    %v203 = vld [vmem:[#allocation3 + $0x4a0] sm:$0xff]
    %v204 = vld [vmem:[#allocation3 + $0x4a8] sm:$0xff]
    %v205 = vld [vmem:[#allocation3 + $0x4b0] sm:$0xff]
    %v206 = vld [vmem:[#allocation3 + $0x4b8] sm:$0xff]
    %v207 = vld [vmem:[#allocation3 + $0x4c0] sm:$0xff]
    %v208 = vld [vmem:[#allocation3 + $0x4c8] sm:$0xff]
    %v209 = vld [vmem:[#allocation3 + $0x4d0] sm:$0xff]
    %v210 = vld [vmem:[#allocation3 + $0x4d8] sm:$0xff]
    %v211 = vld [vmem:[#allocation3 + $0x4e0] sm:$0xff]
    %v212 = vld [vmem:[#allocation3 + $0x4e8] sm:$0xff]
    %v213 = vld [vmem:[#allocation3 + $0x4f0] sm:$0xff]
    %v214 = vld [vmem:[#allocation3 + $0x4f8] sm:$0xff]
    %v215 = vld [vmem:[#allocation3 + $0x500] sm:$0xff]
    %v216 = vld [vmem:[#allocation3 + $0x508] sm:$0xff]
    %v217 = vld [vmem:[#allocation3 + $0x510] sm:$0xff]
    %v218 = vld [vmem:[#allocation3 + $0x518] sm:$0xff]
    %v219 = vld [vmem:[#allocation3 + $0x520] sm:$0xff]
    %v220 = vld [vmem:[#allocation3 + $0x528] sm:$0xff]
    %v221 = vld [vmem:[#allocation3 + $0x530] sm:$0xff]
    %v222 = vld [vmem:[#allocation3 + $0x538] sm:$0xff]
    %v223 = vld [vmem:[#allocation3 + $0x540] sm:$0xff]
    %v224 = vld [vmem:[#allocation3 + $0x548] sm:$0xff]
    %v225 = vld [vmem:[#allocation3 + $0x550] sm:$0xff]
    %v226 = vld [vmem:[#allocation3 + $0x558] sm:$0xff]
    %v227 = vld [vmem:[#allocation3 + $0x560] sm:$0xff]
    %v228 = vld [vmem:[#allocation3 + $0x568] sm:$0xff]
    %v229 = vld [vmem:[#allocation3 + $0x570] sm:$0xff]
    %v230 = vld [vmem:[#allocation3 + $0x578] sm:$0xff]
    %v231 = vld [vmem:[#allocation3 + $0x580] sm:$0xff]
    %v232 = vld [vmem:[#allocation3 + $0x588] sm:$0xff]
    %v233 = vld [vmem:[#allocation3 + $0x590] sm:$0xff]
    %v234 = vld [vmem:[#allocation3 + $0x598] sm:$0xff]
    %v235 = vld [vmem:[#allocation3 + $0x5a0] sm:$0xff]
    %v236 = vld [vmem:[#allocation3 + $0x5a8] sm:$0xff]
    %v237 = vld [vmem:[#allocation3 + $0x5b0] sm:$0xff]
    %v238 = vld [vmem:[#allocation3 + $0x5b8] sm:$0xff]
    %v239 = vld [vmem:[#allocation3 + $0x5c0] sm:$0xff]
    %v240 = vld [vmem:[#allocation3 + $0x5c8] sm:$0xff]
    %v241 = vld [vmem:[#allocation3 + $0x5d0] sm:$0xff]
    %v242 = vld [vmem:[#allocation3 + $0x5d8] sm:$0xff]
    %v243 = vld [vmem:[#allocation3 + $0x5e0] sm:$0xff]
    %v244 = vld [vmem:[#allocation3 + $0x5e8] sm:$0xff]
    %v245 = vld [vmem:[#allocation3 + $0x5f0] sm:$0xff]
    %v246 = vld [vmem:[#allocation3 + $0x5f8] sm:$0xff]
    %v247 = vld [vmem:[#allocation3 + $0x600] sm:$0xff]
    %v248 = vld [vmem:[#allocation3 + $0x608] sm:$0xff]
    %v249 = vld [vmem:[#allocation3 + $0x610] sm:$0xff]
    %v250 = vld [vmem:[#allocation3 + $0x618] sm:$0xff]
    %v251 = vld [vmem:[#allocation3 + $0x620] sm:$0xff]
    %v252 = vld [vmem:[#allocation3 + $0x628] sm:$0xff]
    %v253 = vld [vmem:[#allocation3 + $0x630] sm:$0xff]
    %v254 = vld [vmem:[#allocation3 + $0x638] sm:$0xff]
    %v255 = vld [vmem:[#allocation3 + $0x640] sm:$0xff]
    %v256 = vld [vmem:[#allocation3 + $0x648] sm:$0xff]
    %v257 = vld [vmem:[#allocation3 + $0x650] sm:$0xff]
    %v258 = vld [vmem:[#allocation3 + $0x658] sm:$0xff]
    %v259 = vld [vmem:[#allocation3 + $0x660] sm:$0xff]
    %v260 = vld [vmem:[#allocation3 + $0x668] sm:$0xff]
    %v261 = vld [vmem:[#allocation3 + $0x670] sm:$0xff]
    %v262 = vld [vmem:[#allocation3 + $0x678] sm:$0xff]
    %v263 = vld [vmem:[#allocation3 + $0x680] sm:$0xff]
    %v264 = vld [vmem:[#allocation3 + $0x688] sm:$0xff]
    %v265 = vld [vmem:[#allocation3 + $0x690] sm:$0xff]
    %v266 = vld [vmem:[#allocation3 + $0x698] sm:$0xff]
    %v267 = vld [vmem:[#allocation3 + $0x6a0] sm:$0xff]
    %v268 = vld [vmem:[#allocation3 + $0x6a8] sm:$0xff]
    %v269 = vld [vmem:[#allocation3 + $0x6b0] sm:$0xff]
    %v270 = vld [vmem:[#allocation3 + $0x6b8] sm:$0xff]
    %v271 = vld [vmem:[#allocation3 + $0x6c0] sm:$0xff]
    %v272 = vld [vmem:[#allocation3 + $0x6c8] sm:$0xff]
    %v273 = vld [vmem:[#allocation3 + $0x6d0] sm:$0xff]
    %v274 = vld [vmem:[#allocation3 + $0x6d8] sm:$0xff]
    %v275 = vld [vmem:[#allocation3 + $0x6e0] sm:$0xff]
    %v276 = vld [vmem:[#allocation3 + $0x6e8] sm:$0xff]
    %v277 = vld [vmem:[#allocation3 + $0x6f0] sm:$0xff]
    %v278 = vld [vmem:[#allocation3 + $0x6f8] sm:$0xff]
    %v279 = vld [vmem:[#allocation3 + $0x700] sm:$0xff]
    %v280 = vld [vmem:[#allocation3 + $0x708] sm:$0xff]
    %v281 = vld [vmem:[#allocation3 + $0x710] sm:$0xff]
    %v282 = vld [vmem:[#allocation3 + $0x718] sm:$0xff]
    %v283 = vld [vmem:[#allocation3 + $0x720] sm:$0xff]
    %v284 = vld [vmem:[#allocation3 + $0x728] sm:$0xff]
    %v285 = vld [vmem:[#allocation3 + $0x730] sm:$0xff]
    %v286 = vld [vmem:[#allocation3 + $0x738] sm:$0xff]
    %v287 = vld [vmem:[#allocation3 + $0x740] sm:$0xff]
    %v288 = vld [vmem:[#allocation3 + $0x748] sm:$0xff]
    %v289 = vld [vmem:[#allocation3 + $0x750] sm:$0xff]
    %v290 = vld [vmem:[#allocation3 + $0x758] sm:$0xff]
    %v291 = vld [vmem:[#allocation3 + $0x760] sm:$0xff]
    %v292 = vld [vmem:[#allocation3 + $0x768] sm:$0xff]
    %v293 = vld [vmem:[#allocation3 + $0x770] sm:$0xff]
    %v294 = vld [vmem:[#allocation3 + $0x778] sm:$0xff]
    %v297 = vunpack.c.l.b16 %v53
    %v298 = vunpack.c.h.b16 %v53
    %v299 = vunpack.c.l.b16 %v54
    %v300 = vpack.c.b16 %v297, %v297
    %v301 = vpack.c.b16 %v298, %v298
    %v302 = vpack.c.b16 %v299, %v299
    %v546 = vunpack.c.l.b16 %v55
    %v547 = vunpack.c.h.b16 %v55
    %v548 = vunpack.c.l.b16 %v56
    %v549 = vunpack.c.h.b16 %v56
    %v550 = vunpack.c.l.b16 %v57
    %v551 = vunpack.c.h.b16 %v57
    %v552 = vunpack.c.l.b16 %v58
    %v553 = vunpack.c.h.b16 %v58
    %v554 = vunpack.c.l.b16 %v59
    %v555 = vunpack.c.h.b16 %v59
    %v556 = vunpack.c.l.b16 %v60
    %v557 = vunpack.c.h.b16 %v60
    %v558 = vunpack.c.l.b16 %v61
    %v559 = vunpack.c.h.b16 %v61
    %v560 = vunpack.c.l.b16 %v62
    %v561 = vunpack.c.h.b16 %v62
    %v562 = vunpack.c.l.b16 %v63
    %v563 = vunpack.c.h.b16 %v63
    %v564 = vunpack.c.l.b16 %v64
    %v565 = vunpack.c.h.b16 %v64
    %v566 = vunpack.c.l.b16 %v65
    %v567 = vunpack.c.h.b16 %v65
    %v568 = vunpack.c.l.b16 %v66
    %v569 = vunpack.c.h.b16 %v66
    %v570 = vunpack.c.l.b16 %v67
    %v571 = vunpack.c.h.b16 %v67
    %v572 = vunpack.c.l.b16 %v68
    %v573 = vunpack.c.h.b16 %v68
    %v574 = vunpack.c.l.b16 %v69
    %v575 = vunpack.c.h.b16 %v69
    %v576 = vunpack.c.l.b16 %v70
    %v577 = vunpack.c.h.b16 %v70
    %v578 = vunpack.c.l.b16 %v71
    %v579 = vunpack.c.h.b16 %v71
    %v580 = vunpack.c.l.b16 %v72
    %v581 = vunpack.c.h.b16 %v72
    %v582 = vunpack.c.l.b16 %v73
    %v583 = vunpack.c.h.b16 %v73
    %v584 = vunpack.c.l.b16 %v74
    %v585 = vunpack.c.h.b16 %v74
    %v586 = vunpack.c.l.b16 %v75
    %v587 = vunpack.c.h.b16 %v75
    %v588 = vunpack.c.l.b16 %v76
    %v589 = vunpack.c.h.b16 %v76
    %v590 = vunpack.c.l.b16 %v77
    %v591 = vunpack.c.h.b16 %v77
    %v592 = vunpack.c.l.b16 %v78
    %v593 = vunpack.c.h.b16 %v78
    %v594 = vunpack.c.l.b16 %v79
    %v595 = vunpack.c.h.b16 %v79
    %v596 = vunpack.c.l.b16 %v80
    %v597 = vunpack.c.h.b16 %v80
    %v598 = vunpack.c.l.b16 %v81
    %v599 = vunpack.c.h.b16 %v81
    %v600 = vunpack.c.l.b16 %v82
    %v601 = vunpack.c.h.b16 %v82
    %v602 = vunpack.c.l.b16 %v83
    %v603 = vunpack.c.h.b16 %v83
    %v604 = vunpack.c.l.b16 %v84
    %v605 = vunpack.c.h.b16 %v84
    %v606 = vunpack.c.l.b16 %v85
    %v607 = vunpack.c.h.b16 %v85
    %v608 = vunpack.c.l.b16 %v86
    %v609 = vunpack.c.h.b16 %v86
    %v610 = vunpack.c.l.b16 %v87
    %v611 = vunpack.c.h.b16 %v87
    %v612 = vunpack.c.l.b16 %v88
    %v613 = vunpack.c.h.b16 %v88
    %v614 = vunpack.c.l.b16 %v89
    %v615 = vunpack.c.h.b16 %v89
    %v616 = vunpack.c.l.b16 %v90
    %v617 = vunpack.c.h.b16 %v90
    %v618 = vunpack.c.l.b16 %v91
    %v619 = vunpack.c.h.b16 %v91
    %v620 = vunpack.c.l.b16 %v92
    %v621 = vunpack.c.h.b16 %v92
    %v622 = vunpack.c.l.b16 %v93
    %v623 = vunpack.c.h.b16 %v93
    %v624 = vunpack.c.l.b16 %v94
    %v625 = vunpack.c.h.b16 %v94
    %v626 = vunpack.c.l.b16 %v95
    %v627 = vunpack.c.h.b16 %v95
    %v628 = vunpack.c.l.b16 %v96
    %v629 = vunpack.c.h.b16 %v96
    %v630 = vunpack.c.l.b16 %v97
    %v631 = vunpack.c.h.b16 %v97
    %v632 = vunpack.c.l.b16 %v98
    %v633 = vunpack.c.h.b16 %v98
    %v634 = vunpack.c.l.b16 %v99
    %v635 = vunpack.c.h.b16 %v99
    %v636 = vunpack.c.l.b16 %v100
    %v637 = vunpack.c.h.b16 %v100
    %v638 = vunpack.c.l.b16 %v101
    %v639 = vunpack.c.h.b16 %v101
    %v640 = vunpack.c.l.b16 %v102
    %v641 = vunpack.c.h.b16 %v102
    %v642 = vunpack.c.l.b16 %v103
    %v643 = vunpack.c.h.b16 %v103
    %v644 = vunpack.c.l.b16 %v104
    %v645 = vunpack.c.h.b16 %v104
    %v646 = vunpack.c.l.b16 %v105
    %v647 = vunpack.c.h.b16 %v105
    %v648 = vunpack.c.l.b16 %v106
    %v649 = vunpack.c.h.b16 %v106
    %v650 = vunpack.c.l.b16 %v107
    %v651 = vunpack.c.h.b16 %v107
    %v652 = vunpack.c.l.b16 %v108
    %v653 = vunpack.c.h.b16 %v108
    %v654 = vunpack.c.l.b16 %v109
    %v655 = vunpack.c.h.b16 %v109
    %v656 = vunpack.c.l.b16 %v110
    %v657 = vunpack.c.h.b16 %v110
    %v658 = vunpack.c.l.b16 %v111
    %v659 = vunpack.c.h.b16 %v111
    %v660 = vunpack.c.l.b16 %v112
    %v661 = vunpack.c.h.b16 %v112
    %v662 = vunpack.c.l.b16 %v113
    %v663 = vunpack.c.h.b16 %v113
    %v664 = vunpack.c.l.b16 %v114
    %v665 = vunpack.c.h.b16 %v114
    %v666 = vunpack.c.l.b16 %v115
    %v667 = vunpack.c.h.b16 %v115
    %v668 = vunpack.c.l.b16 %v116
    %v669 = vunpack.c.h.b16 %v116
    %v670 = vunpack.c.l.b16 %v117
    %v671 = vunpack.c.h.b16 %v117
    %v672 = vunpack.c.l.b16 %v118
    %v673 = vunpack.c.h.b16 %v118
    %v674 = vunpack.c.l.b16 %v119
    %v675 = vunpack.c.h.b16 %v119
    %v676 = vunpack.c.l.b16 %v120
    %v677 = vunpack.c.h.b16 %v120
    %v678 = vunpack.c.l.b16 %v121
    %v679 = vunpack.c.h.b16 %v121
    %v680 = vunpack.c.l.b16 %v122
    %v681 = vunpack.c.h.b16 %v122
    %v682 = vunpack.c.l.b16 %v123
    %v683 = vunpack.c.h.b16 %v123
    %v684 = vunpack.c.l.b16 %v124
    %v685 = vunpack.c.h.b16 %v124
    %v686 = vunpack.c.l.b16 %v125
    %v687 = vunpack.c.h.b16 %v125
    %v688 = vunpack.c.l.b16 %v126
    %v689 = vunpack.c.h.b16 %v126
    %v690 = vunpack.c.l.b16 %v127
    %v691 = vunpack.c.h.b16 %v127
    %v692 = vunpack.c.l.b16 %v128
    %v693 = vunpack.c.h.b16 %v128
    %v694 = vunpack.c.l.b16 %v129
    %v695 = vunpack.c.h.b16 %v129
    %v696 = vunpack.c.l.b16 %v130
    %v697 = vunpack.c.h.b16 %v130
    %v698 = vunpack.c.l.b16 %v131
    %v699 = vunpack.c.h.b16 %v131
    %v700 = vunpack.c.l.b16 %v132
    %v701 = vunpack.c.h.b16 %v132
    %v702 = vunpack.c.l.b16 %v133
    %v703 = vunpack.c.h.b16 %v133
    %v704 = vunpack.c.l.b16 %v134
    %v705 = vunpack.c.h.b16 %v134
    %v706 = vunpack.c.l.b16 %v135
    %v707 = vunpack.c.h.b16 %v135
    %v708 = vunpack.c.l.b16 %v136
    %v709 = vunpack.c.h.b16 %v136
    %v710 = vunpack.c.l.b16 %v137
    %v711 = vunpack.c.h.b16 %v137
    %v712 = vunpack.c.l.b16 %v138
    %v713 = vunpack.c.h.b16 %v138
    %v714 = vunpack.c.l.b16 %v139
    %v715 = vunpack.c.h.b16 %v139
    %v716 = vunpack.c.l.b16 %v140
    %v717 = vunpack.c.h.b16 %v140
    %v718 = vunpack.c.l.b16 %v141
    %v719 = vunpack.c.h.b16 %v141
    %v720 = vunpack.c.l.b16 %v142
    %v721 = vunpack.c.h.b16 %v142
    %v722 = vunpack.c.l.b16 %v143
    %v723 = vunpack.c.h.b16 %v143
    %v724 = vunpack.c.l.b16 %v144
    %v725 = vunpack.c.h.b16 %v144
    %v726 = vunpack.c.l.b16 %v145
    %v727 = vunpack.c.h.b16 %v145
    %v728 = vunpack.c.l.b16 %v146
    %v729 = vunpack.c.h.b16 %v146
    %v730 = vunpack.c.l.b16 %v147
    %v731 = vunpack.c.h.b16 %v147
    %v732 = vunpack.c.l.b16 %v148
    %v733 = vunpack.c.h.b16 %v148
    %v734 = vunpack.c.l.b16 %v149
    %v735 = vunpack.c.h.b16 %v149
    %v736 = vunpack.c.l.b16 %v150
    %v737 = vunpack.c.h.b16 %v150
    %v738 = vunpack.c.l.b16 %v151
    %v739 = vunpack.c.h.b16 %v151
    %v740 = vunpack.c.l.b16 %v152
    %v741 = vunpack.c.h.b16 %v152
    %v742 = vunpack.c.l.b16 %v153
    %v743 = vunpack.c.h.b16 %v153
    %v744 = vunpack.c.l.b16 %v154
    %v745 = vunpack.c.h.b16 %v154
    %v746 = vunpack.c.l.b16 %v155
    %v747 = vunpack.c.h.b16 %v155
    %v748 = vunpack.c.l.b16 %v156
    %v749 = vunpack.c.h.b16 %v156
    %v750 = vunpack.c.l.b16 %v157
    %v751 = vunpack.c.h.b16 %v157
    %v752 = vunpack.c.l.b16 %v158
    %v753 = vunpack.c.h.b16 %v158
    %v754 = vunpack.c.l.b16 %v159
    %v755 = vunpack.c.h.b16 %v159
    %v756 = vunpack.c.l.b16 %v160
    %v757 = vunpack.c.h.b16 %v160
    %v758 = vunpack.c.l.b16 %v161
    %v759 = vunpack.c.h.b16 %v161
    %v760 = vunpack.c.l.b16 %v162
    %v761 = vunpack.c.h.b16 %v162
    %v762 = vunpack.c.l.b16 %v163
    %v763 = vunpack.c.h.b16 %v163
    %v764 = vunpack.c.l.b16 %v164
    %v765 = vunpack.c.h.b16 %v164
    %v766 = vunpack.c.l.b16 %v165
    %v767 = vunpack.c.h.b16 %v165
    %v768 = vunpack.c.l.b16 %v166
    %v769 = vunpack.c.h.b16 %v166
    %v770 = vunpack.c.l.b16 %v167
    %v771 = vunpack.c.h.b16 %v167
    %v772 = vunpack.c.l.b16 %v168
    %v773 = vunpack.c.h.b16 %v168
    %v774 = vunpack.c.l.b16 %v169
    %v775 = vunpack.c.h.b16 %v169
    %v776 = vunpack.c.l.b16 %v170
    %v777 = vunpack.c.h.b16 %v170
    %v778 = vunpack.c.l.b16 %v171
    %v779 = vunpack.c.h.b16 %v171
    %v780 = vunpack.c.l.b16 %v172
    %v781 = vunpack.c.h.b16 %v172
    %v782 = vunpack.c.l.b16 %v173
    %v783 = vunpack.c.h.b16 %v173
    %v784 = vunpack.c.l.b16 %v174
    %v785 = vunpack.c.h.b16 %v174
    %v786 = vunpack.c.l.b16 %v175
    %v787 = vunpack.c.h.b16 %v175
    %v788 = vunpack.c.l.b16 %v176
    %v789 = vunpack.c.h.b16 %v176
    %v790 = vunpack.c.l.b16 %v177
    %v791 = vunpack.c.h.b16 %v177
    %v792 = vunpack.c.l.b16 %v178
    %v793 = vunpack.c.h.b16 %v178
    %v794 = vunpack.c.l.b16 %v179
    %v795 = vunpack.c.h.b16 %v179
    %v796 = vunpack.c.l.b16 %v180
    %v797 = vunpack.c.h.b16 %v180
    %v798 = vunpack.c.l.b16 %v181
    %v799 = vunpack.c.h.b16 %v181
    %v800 = vunpack.c.l.b16 %v182
    %v801 = vunpack.c.h.b16 %v182
    %v802 = vunpack.c.l.b16 %v183
    %v803 = vunpack.c.h.b16 %v183
    %v804 = vunpack.c.l.b16 %v184
    %v805 = vunpack.c.h.b16 %v184
    %v806 = vunpack.c.l.b16 %v185
    %v807 = vunpack.c.h.b16 %v185
    %v808 = vunpack.c.l.b16 %v186
    %v809 = vunpack.c.h.b16 %v186
    %v810 = vunpack.c.l.b16 %v187
    %v811 = vunpack.c.h.b16 %v187
    %v812 = vunpack.c.l.b16 %v188
    %v813 = vunpack.c.h.b16 %v188
    %v814 = vunpack.c.l.b16 %v189
    %v815 = vunpack.c.h.b16 %v189
    %v816 = vunpack.c.l.b16 %v190
    %v817 = vunpack.c.h.b16 %v190
    %v818 = vunpack.c.l.b16 %v191
    %v819 = vunpack.c.h.b16 %v191
    %v820 = vunpack.c.l.b16 %v192
    %v821 = vunpack.c.h.b16 %v192
    %v822 = vunpack.c.l.b16 %v193
    %v823 = vunpack.c.h.b16 %v193
    %v824 = vunpack.c.l.b16 %v194
    %v825 = vunpack.c.h.b16 %v194
    %v826 = vunpack.c.l.b16 %v195
    %v827 = vunpack.c.h.b16 %v195
    %v828 = vunpack.c.l.b16 %v196
    %v829 = vunpack.c.h.b16 %v196
    %v830 = vunpack.c.l.b16 %v197
    %v831 = vunpack.c.h.b16 %v197
    %v832 = vunpack.c.l.b16 %v198
    %v833 = vunpack.c.h.b16 %v198
    %v834 = vunpack.c.l.b16 %v199
    %v835 = vunpack.c.h.b16 %v199
    %v836 = vunpack.c.l.b16 %v200
    %v837 = vunpack.c.h.b16 %v200
    %v838 = vunpack.c.l.b16 %v201
    %v839 = vunpack.c.h.b16 %v201
    %v840 = vunpack.c.l.b16 %v202
    %v841 = vunpack.c.h.b16 %v202
    %v842 = vunpack.c.l.b16 %v203
    %v843 = vunpack.c.h.b16 %v203
    %v844 = vunpack.c.l.b16 %v204
    %v845 = vunpack.c.h.b16 %v204
    %v846 = vunpack.c.l.b16 %v205
    %v847 = vunpack.c.h.b16 %v205
    %v848 = vunpack.c.l.b16 %v206
    %v849 = vunpack.c.h.b16 %v206
    %v850 = vunpack.c.l.b16 %v207
    %v851 = vunpack.c.h.b16 %v207
    %v852 = vunpack.c.l.b16 %v208
    %v853 = vunpack.c.h.b16 %v208
    %v854 = vunpack.c.l.b16 %v209
    %v855 = vunpack.c.h.b16 %v209
    %v856 = vunpack.c.l.b16 %v210
    %v857 = vunpack.c.h.b16 %v210
    %v858 = vunpack.c.l.b16 %v211
    %v859 = vunpack.c.h.b16 %v211
    %v860 = vunpack.c.l.b16 %v212
    %v861 = vunpack.c.h.b16 %v212
    %v862 = vunpack.c.l.b16 %v213
    %v863 = vunpack.c.h.b16 %v213
    %v864 = vunpack.c.l.b16 %v214
    %v865 = vunpack.c.h.b16 %v214
    %v866 = vunpack.c.l.b16 %v215
    %v867 = vunpack.c.h.b16 %v215
    %v868 = vunpack.c.l.b16 %v216
    %v869 = vunpack.c.h.b16 %v216
    %v870 = vunpack.c.l.b16 %v217
    %v871 = vunpack.c.h.b16 %v217
    %v872 = vunpack.c.l.b16 %v218
    %v873 = vunpack.c.h.b16 %v218
    %v874 = vunpack.c.l.b16 %v219
    %v875 = vunpack.c.h.b16 %v219
    %v876 = vunpack.c.l.b16 %v220
    %v877 = vunpack.c.h.b16 %v220
    %v878 = vunpack.c.l.b16 %v221
    %v879 = vunpack.c.h.b16 %v221
    %v880 = vunpack.c.l.b16 %v222
    %v881 = vunpack.c.h.b16 %v222
    %v882 = vunpack.c.l.b16 %v223
    %v883 = vunpack.c.h.b16 %v223
    %v884 = vunpack.c.l.b16 %v224
    %v885 = vunpack.c.h.b16 %v224
    %v886 = vunpack.c.l.b16 %v225
    %v887 = vunpack.c.h.b16 %v225
    %v888 = vunpack.c.l.b16 %v226
    %v889 = vunpack.c.h.b16 %v226
    %v890 = vunpack.c.l.b16 %v227
    %v891 = vunpack.c.h.b16 %v227
    %v892 = vunpack.c.l.b16 %v228
    %v893 = vunpack.c.h.b16 %v228
    %v894 = vunpack.c.l.b16 %v229
    %v895 = vunpack.c.h.b16 %v229
    %v896 = vunpack.c.l.b16 %v230
    %v897 = vunpack.c.h.b16 %v230
    %v898 = vunpack.c.l.b16 %v231
    %v899 = vunpack.c.h.b16 %v231
    %v900 = vunpack.c.l.b16 %v232
    %v901 = vunpack.c.h.b16 %v232
    %v902 = vunpack.c.l.b16 %v233
    %v903 = vunpack.c.h.b16 %v233
    %v904 = vunpack.c.l.b16 %v234
    %v905 = vunpack.c.h.b16 %v234
    %v906 = vunpack.c.l.b16 %v235
    %v907 = vunpack.c.h.b16 %v235
    %v908 = vunpack.c.l.b16 %v236
    %v909 = vunpack.c.h.b16 %v236
    %v910 = vunpack.c.l.b16 %v237
    %v911 = vunpack.c.h.b16 %v237
    %v912 = vunpack.c.l.b16 %v238
    %v913 = vunpack.c.h.b16 %v238
    %v914 = vunpack.c.l.b16 %v239
    %v915 = vunpack.c.h.b16 %v239
    %v916 = vunpack.c.l.b16 %v240
    %v917 = vunpack.c.h.b16 %v240
    %v918 = vunpack.c.l.b16 %v241
    %v919 = vunpack.c.h.b16 %v241
    %v920 = vunpack.c.l.b16 %v242
    %v921 = vunpack.c.h.b16 %v242
    %v922 = vunpack.c.l.b16 %v243
    %v923 = vunpack.c.h.b16 %v243
    %v924 = vunpack.c.l.b16 %v244
    %v925 = vunpack.c.h.b16 %v244
    %v926 = vunpack.c.l.b16 %v245
    %v927 = vunpack.c.h.b16 %v245
    %v928 = vunpack.c.l.b16 %v246
    %v929 = vunpack.c.h.b16 %v246
    %v930 = vunpack.c.l.b16 %v247
    %v931 = vunpack.c.h.b16 %v247
    %v932 = vunpack.c.l.b16 %v248
    %v933 = vunpack.c.h.b16 %v248
    %v934 = vunpack.c.l.b16 %v249
    %v935 = vunpack.c.h.b16 %v249
    %v936 = vunpack.c.l.b16 %v250
    %v937 = vunpack.c.h.b16 %v250
    %v938 = vunpack.c.l.b16 %v251
    %v939 = vunpack.c.h.b16 %v251
    %v940 = vunpack.c.l.b16 %v252
    %v941 = vunpack.c.h.b16 %v252
    %v942 = vunpack.c.l.b16 %v253
    %v943 = vunpack.c.h.b16 %v253
    %v944 = vunpack.c.l.b16 %v254
    %v945 = vunpack.c.h.b16 %v254
    %v946 = vunpack.c.l.b16 %v255
    %v947 = vunpack.c.h.b16 %v255
    %v948 = vunpack.c.l.b16 %v256
    %v949 = vunpack.c.h.b16 %v256
    %v950 = vunpack.c.l.b16 %v257
    %v951 = vunpack.c.h.b16 %v257
    %v952 = vunpack.c.l.b16 %v258
    %v953 = vunpack.c.h.b16 %v258
    %v954 = vunpack.c.l.b16 %v259
    %v955 = vunpack.c.h.b16 %v259
    %v956 = vunpack.c.l.b16 %v260
    %v957 = vunpack.c.h.b16 %v260
    %v958 = vunpack.c.l.b16 %v261
    %v959 = vunpack.c.h.b16 %v261
    %v960 = vunpack.c.l.b16 %v262
    %v961 = vunpack.c.h.b16 %v262
    %v962 = vunpack.c.l.b16 %v263
    %v963 = vunpack.c.h.b16 %v263
    %v964 = vunpack.c.l.b16 %v264
    %v965 = vunpack.c.h.b16 %v264
    %v966 = vunpack.c.l.b16 %v265
    %v967 = vunpack.c.h.b16 %v265
    %v968 = vunpack.c.l.b16 %v266
    %v969 = vunpack.c.h.b16 %v266
    %v970 = vunpack.c.l.b16 %v267
    %v971 = vunpack.c.h.b16 %v267
    %v972 = vunpack.c.l.b16 %v268
    %v973 = vunpack.c.h.b16 %v268
    %v974 = vunpack.c.l.b16 %v269
    %v975 = vunpack.c.h.b16 %v269
    %v976 = vunpack.c.l.b16 %v270
    %v977 = vunpack.c.h.b16 %v270
    %v978 = vunpack.c.l.b16 %v271
    %v979 = vunpack.c.h.b16 %v271
    %v980 = vunpack.c.l.b16 %v272
    %v981 = vunpack.c.h.b16 %v272
    %v982 = vunpack.c.l.b16 %v273
    %v983 = vunpack.c.h.b16 %v273
    %v984 = vunpack.c.l.b16 %v274
    %v985 = vunpack.c.h.b16 %v274
    %v986 = vunpack.c.l.b16 %v275
    %v987 = vunpack.c.h.b16 %v275
    %v988 = vunpack.c.l.b16 %v276
    %v989 = vunpack.c.h.b16 %v276
    %v990 = vunpack.c.l.b16 %v277
    %v991 = vunpack.c.h.b16 %v277
    %v992 = vunpack.c.l.b16 %v278
    %v993 = vunpack.c.h.b16 %v278
    %v994 = vunpack.c.l.b16 %v279
    %v995 = vunpack.c.h.b16 %v279
    %v996 = vunpack.c.l.b16 %v280
    %v997 = vunpack.c.h.b16 %v280
    %v998 = vunpack.c.l.b16 %v281
    %v999 = vunpack.c.h.b16 %v281
    %v1000 = vunpack.c.l.b16 %v282
    %v1001 = vunpack.c.h.b16 %v282
    %v1002 = vunpack.c.l.b16 %v283
    %v1003 = vunpack.c.h.b16 %v283
    %v1004 = vunpack.c.l.b16 %v284
    %v1005 = vunpack.c.h.b16 %v284
    %v1006 = vunpack.c.l.b16 %v285
    %v1007 = vunpack.c.h.b16 %v285
    %v1008 = vunpack.c.l.b16 %v286
    %v1009 = vunpack.c.h.b16 %v286
    %v1010 = vunpack.c.l.b16 %v287
    %v1011 = vunpack.c.h.b16 %v287
    %v1012 = vunpack.c.l.b16 %v288
    %v1013 = vunpack.c.h.b16 %v288
    %v1014 = vunpack.c.l.b16 %v289
    %v1015 = vunpack.c.h.b16 %v289
    %v1016 = vunpack.c.l.b16 %v290
    %v1017 = vunpack.c.h.b16 %v290
    %v1018 = vunpack.c.l.b16 %v291
    %v1019 = vunpack.c.h.b16 %v291
    %v1020 = vunpack.c.l.b16 %v292
    %v1021 = vunpack.c.h.b16 %v292
    %v1022 = vunpack.c.l.b16 %v293
    %v1023 = vunpack.c.h.b16 %v293
    %v1024 = vunpack.c.l.b16 %v294
    %v1025 = vunpack.c.h.b16 %v294
    %v1026 = vpack.c.b16 %v556, %v546
    %v1027 = vpack.c.b16 %v557, %v547
    %v1028 = vpack.c.b16 %v558, %v548
    %v1029 = vpack.c.b16 %v559, %v549
    %v1030 = vpack.c.b16 %v560, %v550
    %v1031 = vpack.c.b16 %v561, %v551
    %v1032 = vpack.c.b16 %v562, %v552
    %v1033 = vpack.c.b16 %v563, %v553
    %v1034 = vpack.c.b16 %v564, %v554
    %v1035 = vpack.c.b16 %v565, %v555
    %v1036 = vpack.c.b16 %v576, %v566
    %v1037 = vpack.c.b16 %v577, %v567
    %v1038 = vpack.c.b16 %v578, %v568
    %v1039 = vpack.c.b16 %v579, %v569
    %v1040 = vpack.c.b16 %v580, %v570
    %v1041 = vpack.c.b16 %v581, %v571
    %v1042 = vpack.c.b16 %v582, %v572
    %v1043 = vpack.c.b16 %v583, %v573
    %v1044 = vpack.c.b16 %v584, %v574
    %v1045 = vpack.c.b16 %v585, %v575
    %v1046 = vpack.c.b16 %v596, %v586
    %v1047 = vpack.c.b16 %v597, %v587
    %v1048 = vpack.c.b16 %v598, %v588
    %v1049 = vpack.c.b16 %v599, %v589
    %v1050 = vpack.c.b16 %v600, %v590
    %v1051 = vpack.c.b16 %v601, %v591
    %v1052 = vpack.c.b16 %v602, %v592
    %v1053 = vpack.c.b16 %v603, %v593
    %v1054 = vpack.c.b16 %v604, %v594
    %v1055 = vpack.c.b16 %v605, %v595
    %v1056 = vpack.c.b16 %v616, %v606
    %v1057 = vpack.c.b16 %v617, %v607
    %v1058 = vpack.c.b16 %v618, %v608
    %v1059 = vpack.c.b16 %v619, %v609
    %v1060 = vpack.c.b16 %v620, %v610
    %v1061 = vpack.c.b16 %v621, %v611
    %v1062 = vpack.c.b16 %v622, %v612
    %v1063 = vpack.c.b16 %v623, %v613
    %v1064 = vpack.c.b16 %v624, %v614
    %v1065 = vpack.c.b16 %v625, %v615
    %v1066 = vpack.c.b16 %v636, %v626
    %v1067 = vpack.c.b16 %v637, %v627
    %v1068 = vpack.c.b16 %v638, %v628
    %v1069 = vpack.c.b16 %v639, %v629
    %v1070 = vpack.c.b16 %v640, %v630
    %v1071 = vpack.c.b16 %v641, %v631
    %v1072 = vpack.c.b16 %v642, %v632
    %v1073 = vpack.c.b16 %v643, %v633
    %v1074 = vpack.c.b16 %v644, %v634
    %v1075 = vpack.c.b16 %v645, %v635
    %v1076 = vpack.c.b16 %v656, %v646
    %v1077 = vpack.c.b16 %v657, %v647
    %v1078 = vpack.c.b16 %v658, %v648
    %v1079 = vpack.c.b16 %v659, %v649
    %v1080 = vpack.c.b16 %v660, %v650
    %v1081 = vpack.c.b16 %v661, %v651
    %v1082 = vpack.c.b16 %v662, %v652
    %v1083 = vpack.c.b16 %v663, %v653
    %v1084 = vpack.c.b16 %v664, %v654
    %v1085 = vpack.c.b16 %v665, %v655
    %v1086 = vpack.c.b16 %v676, %v666
    %v1087 = vpack.c.b16 %v677, %v667
    %v1088 = vpack.c.b16 %v678, %v668
    %v1089 = vpack.c.b16 %v679, %v669
    %v1090 = vpack.c.b16 %v680, %v670
    %v1091 = vpack.c.b16 %v681, %v671
    %v1092 = vpack.c.b16 %v682, %v672
    %v1093 = vpack.c.b16 %v683, %v673
    %v1094 = vpack.c.b16 %v684, %v674
    %v1095 = vpack.c.b16 %v685, %v675
    %v1096 = vpack.c.b16 %v696, %v686
    %v1097 = vpack.c.b16 %v697, %v687
    %v1098 = vpack.c.b16 %v698, %v688
    %v1099 = vpack.c.b16 %v699, %v689
    %v1100 = vpack.c.b16 %v700, %v690
    %v1101 = vpack.c.b16 %v701, %v691
    %v1102 = vpack.c.b16 %v702, %v692
    %v1103 = vpack.c.b16 %v703, %v693
    %v1104 = vpack.c.b16 %v704, %v694
    %v1105 = vpack.c.b16 %v705, %v695
    %v1106 = vpack.c.b16 %v716, %v706
    %v1107 = vpack.c.b16 %v717, %v707
    %v1108 = vpack.c.b16 %v718, %v708
    %v1109 = vpack.c.b16 %v719, %v709
    %v1110 = vpack.c.b16 %v720, %v710
    %v1111 = vpack.c.b16 %v721, %v711
    %v1112 = vpack.c.b16 %v722, %v712
    %v1113 = vpack.c.b16 %v723, %v713
    %v1114 = vpack.c.b16 %v724, %v714
    %v1115 = vpack.c.b16 %v725, %v715
    %v1116 = vpack.c.b16 %v736, %v726
    %v1117 = vpack.c.b16 %v737, %v727
    %v1118 = vpack.c.b16 %v738, %v728
    %v1119 = vpack.c.b16 %v739, %v729
    %v1120 = vpack.c.b16 %v740, %v730
    %v1121 = vpack.c.b16 %v741, %v731
    %v1122 = vpack.c.b16 %v742, %v732
    %v1123 = vpack.c.b16 %v743, %v733
    %v1124 = vpack.c.b16 %v744, %v734
    %v1125 = vpack.c.b16 %v745, %v735
    %v1126 = vpack.c.b16 %v756, %v746
    %v1127 = vpack.c.b16 %v757, %v747
    %v1128 = vpack.c.b16 %v758, %v748
    %v1129 = vpack.c.b16 %v759, %v749
    %v1130 = vpack.c.b16 %v760, %v750
    %v1131 = vpack.c.b16 %v761, %v751
    %v1132 = vpack.c.b16 %v762, %v752
    %v1133 = vpack.c.b16 %v763, %v753
    %v1134 = vpack.c.b16 %v764, %v754
    %v1135 = vpack.c.b16 %v765, %v755
    %v1136 = vpack.c.b16 %v776, %v766
    %v1137 = vpack.c.b16 %v777, %v767
    %v1138 = vpack.c.b16 %v778, %v768
    %v1139 = vpack.c.b16 %v779, %v769
    %v1140 = vpack.c.b16 %v780, %v770
    %v1141 = vpack.c.b16 %v781, %v771
    %v1142 = vpack.c.b16 %v782, %v772
    %v1143 = vpack.c.b16 %v783, %v773
    %v1144 = vpack.c.b16 %v784, %v774
    %v1145 = vpack.c.b16 %v785, %v775
    %v1146 = vpack.c.b16 %v796, %v786
    %v1147 = vpack.c.b16 %v797, %v787
    %v1148 = vpack.c.b16 %v798, %v788
    %v1149 = vpack.c.b16 %v799, %v789
    %v1150 = vpack.c.b16 %v800, %v790
    %v1151 = vpack.c.b16 %v801, %v791
    %v1152 = vpack.c.b16 %v802, %v792
    %v1153 = vpack.c.b16 %v803, %v793
    %v1154 = vpack.c.b16 %v804, %v794
    %v1155 = vpack.c.b16 %v805, %v795
    %v1156 = vpack.c.b16 %v816, %v806
    %v1157 = vpack.c.b16 %v817, %v807
    %v1158 = vpack.c.b16 %v818, %v808
    %v1159 = vpack.c.b16 %v819, %v809
    %v1160 = vpack.c.b16 %v820, %v810
    %v1161 = vpack.c.b16 %v821, %v811
    %v1162 = vpack.c.b16 %v822, %v812
    %v1163 = vpack.c.b16 %v823, %v813
    %v1164 = vpack.c.b16 %v824, %v814
    %v1165 = vpack.c.b16 %v825, %v815
    %v1166 = vpack.c.b16 %v836, %v826
    %v1167 = vpack.c.b16 %v837, %v827
    %v1168 = vpack.c.b16 %v838, %v828
    %v1169 = vpack.c.b16 %v839, %v829
    %v1170 = vpack.c.b16 %v840, %v830
    %v1171 = vpack.c.b16 %v841, %v831
    %v1172 = vpack.c.b16 %v842, %v832
    %v1173 = vpack.c.b16 %v843, %v833
    %v1174 = vpack.c.b16 %v844, %v834
    %v1175 = vpack.c.b16 %v845, %v835
    %v1176 = vpack.c.b16 %v856, %v846
    %v1177 = vpack.c.b16 %v857, %v847
    %v1178 = vpack.c.b16 %v858, %v848
    %v1179 = vpack.c.b16 %v859, %v849
    %v1180 = vpack.c.b16 %v860, %v850
    %v1181 = vpack.c.b16 %v861, %v851
    %v1182 = vpack.c.b16 %v862, %v852
    %v1183 = vpack.c.b16 %v863, %v853
    %v1184 = vpack.c.b16 %v864, %v854
    %v1185 = vpack.c.b16 %v865, %v855
    %v1186 = vpack.c.b16 %v876, %v866
    %v1187 = vpack.c.b16 %v877, %v867
    %v1188 = vpack.c.b16 %v878, %v868
    %v1189 = vpack.c.b16 %v879, %v869
    %v1190 = vpack.c.b16 %v880, %v870
    %v1191 = vpack.c.b16 %v881, %v871
    %v1192 = vpack.c.b16 %v882, %v872
    %v1193 = vpack.c.b16 %v883, %v873
    %v1194 = vpack.c.b16 %v884, %v874
    %v1195 = vpack.c.b16 %v885, %v875
    %v1196 = vpack.c.b16 %v896, %v886
    %v1197 = vpack.c.b16 %v897, %v887
    %v1198 = vpack.c.b16 %v898, %v888
    %v1199 = vpack.c.b16 %v899, %v889
    %v1200 = vpack.c.b16 %v900, %v890
    %v1201 = vpack.c.b16 %v901, %v891
    %v1202 = vpack.c.b16 %v902, %v892
    %v1203 = vpack.c.b16 %v903, %v893
    %v1204 = vpack.c.b16 %v904, %v894
    %v1205 = vpack.c.b16 %v905, %v895
    %v1206 = vpack.c.b16 %v916, %v906
    %v1207 = vpack.c.b16 %v917, %v907
    %v1208 = vpack.c.b16 %v918, %v908
    %v1209 = vpack.c.b16 %v919, %v909
    %v1210 = vpack.c.b16 %v920, %v910
    %v1211 = vpack.c.b16 %v921, %v911
    %v1212 = vpack.c.b16 %v922, %v912
    %v1213 = vpack.c.b16 %v923, %v913
    %v1214 = vpack.c.b16 %v924, %v914
    %v1215 = vpack.c.b16 %v925, %v915
    %v1216 = vpack.c.b16 %v936, %v926
    %v1217 = vpack.c.b16 %v937, %v927
    %v1218 = vpack.c.b16 %v938, %v928
    %v1219 = vpack.c.b16 %v939, %v929
    %v1220 = vpack.c.b16 %v940, %v930
    %v1221 = vpack.c.b16 %v941, %v931
    %v1222 = vpack.c.b16 %v942, %v932
    %v1223 = vpack.c.b16 %v943, %v933
    %v1224 = vpack.c.b16 %v944, %v934
    %v1225 = vpack.c.b16 %v945, %v935
    %v1226 = vpack.c.b16 %v956, %v946
    %v1227 = vpack.c.b16 %v957, %v947
    %v1228 = vpack.c.b16 %v958, %v948
    %v1229 = vpack.c.b16 %v959, %v949
    %v1230 = vpack.c.b16 %v960, %v950
    %v1231 = vpack.c.b16 %v961, %v951
    %v1232 = vpack.c.b16 %v962, %v952
    %v1233 = vpack.c.b16 %v963, %v953
    %v1234 = vpack.c.b16 %v964, %v954
    %v1235 = vpack.c.b16 %v965, %v955
    %v1236 = vpack.c.b16 %v976, %v966
    %v1237 = vpack.c.b16 %v977, %v967
    %v1238 = vpack.c.b16 %v978, %v968
    %v1239 = vpack.c.b16 %v979, %v969
    %v1240 = vpack.c.b16 %v980, %v970
    %v1241 = vpack.c.b16 %v981, %v971
    %v1242 = vpack.c.b16 %v982, %v972
    %v1243 = vpack.c.b16 %v983, %v973
    %v1244 = vpack.c.b16 %v984, %v974
    %v1245 = vpack.c.b16 %v985, %v975
    %v1246 = vpack.c.b16 %v996, %v986
    %v1247 = vpack.c.b16 %v997, %v987
    %v1248 = vpack.c.b16 %v998, %v988
    %v1249 = vpack.c.b16 %v999, %v989
    %v1250 = vpack.c.b16 %v1000, %v990
    %v1251 = vpack.c.b16 %v1001, %v991
    %v1252 = vpack.c.b16 %v1002, %v992
    %v1253 = vpack.c.b16 %v1003, %v993
    %v1254 = vpack.c.b16 %v1004, %v994
    %v1255 = vpack.c.b16 %v1005, %v995
    %v1256 = vpack.c.b16 %v1016, %v1006
    %v1257 = vpack.c.b16 %v1017, %v1007
    %v1258 = vpack.c.b16 %v1018, %v1008
    %v1259 = vpack.c.b16 %v1019, %v1009
    %v1260 = vpack.c.b16 %v1020, %v1010
    %v1261 = vpack.c.b16 %v1021, %v1011
    %v1262 = vpack.c.b16 %v1022, %v1012
    %v1263 = vpack.c.b16 %v1023, %v1013
    %v1264 = vpack.c.b16 %v1024, %v1014
    %v1265 = vpack.c.b16 %v1025, %v1015
    %1506 = vmatprep.subr.bf16.mxu0 %v1097
    %1507 = vmatpush1.bf16.msra.mxu0 %v1096
    %1508 = vmatprep.subr.bf16.mxu0 %v1087
    %1509 = vmatpush1.bf16.msra.mxu0 %v1086
    %1510 = vmatprep.subr.bf16.mxu0 %v1077
    %1511 = vmatpush1.bf16.msra.mxu0 %v1076
    %1512 = vmatprep.subr.bf16.mxu0 %v1067
    %1513 = vmatpush1.bf16.msra.mxu0 %v1066
    %1514 = vmatprep.subr.bf16.mxu0 %v1057
    %1515 = vmatpush1.bf16.msra.mxu0 %v1056
    %1516 = vmatprep.subr.bf16.mxu0 %v1047
    %1517 = vmatpush1.bf16.msra.mxu0 %v1046
    %1518 = vmatprep.subr.bf16.mxu0 %v1037
    %1519 = vmatpush1.bf16.msra.mxu0 %v1036
    %1520 = vmatprep.subr.bf16.mxu0 %v1027
    %1521 = vmatpush1.bf16.msra.mxu0 %v1026
    %1522 = vmatprep.subr.bf16.mxu0 %v1177
    %1523 = vmatpush2.bf16.msra.mxu0 %v1176
    %1524 = vmatprep.subr.bf16.mxu0 %v1167
    %1525 = vmatpush2.bf16.msra.mxu0 %v1166
    %1526 = vmatprep.subr.bf16.mxu0 %v1157
    %1527 = vmatpush2.bf16.msra.mxu0 %v1156
    %1528 = vmatprep.subr.bf16.mxu0 %v1147
    %1529 = vmatpush2.bf16.msra.mxu0 %v1146
    %1530 = vmatprep.subr.bf16.mxu0 %v1137
    %1531 = vmatpush2.bf16.msra.mxu0 %v1136
    %1532 = vmatprep.subr.bf16.mxu0 %v1127
    %1533 = vmatpush2.bf16.msra.mxu0 %v1126
    %1534 = vmatprep.subr.bf16.mxu0 %v1117
    %1535 = vmatpush2.bf16.msra.mxu0 %v1116
    %1536 = vmatprep.subr.bf16.mxu0 %v1107
    %1537 = vmatpush2.bf16.msra.mxu0 %v1106
    %1538 = vmatprep.mubr.bf16.mxu0 %v301
    %1539 = vmatmul.mubr.bf16.gmra.mxu0 %v300
    %v1540 = vpop.f32.mrf.mxu0
    %v1541 = vadd.f32 0.0, %v1540
    %v1542 = vpop.f32.mrf.mxu0
    %v1543 = vadd.f32 0.0, %v1542
    %v1544 = vpop.f32.mrf.mxu0
    %v1545 = vpop.f32.mrf.mxu0
    %1546 = vdwg.mxu0
    %1547 = vmatprep.subr.bf16.mxu0 %v1257
    %1548 = vmatpush1.bf16.msra.mxu0 %v1256
    %1549 = vmatprep.subr.bf16.mxu0 %v1247
    %1550 = vmatpush1.bf16.msra.mxu0 %v1246
    %1551 = vmatprep.subr.bf16.mxu0 %v1237
    %1552 = vmatpush1.bf16.msra.mxu0 %v1236
    %1553 = vmatprep.subr.bf16.mxu0 %v1227
    %1554 = vmatpush1.bf16.msra.mxu0 %v1226
    %1555 = vmatprep.subr.bf16.mxu0 %v1217
    %1556 = vmatpush1.bf16.msra.mxu0 %v1216
    %1557 = vmatprep.subr.bf16.mxu0 %v1207
    %1558 = vmatpush1.bf16.msra.mxu0 %v1206
    %1559 = vmatprep.subr.bf16.mxu0 %v1197
    %1560 = vmatpush1.bf16.msra.mxu0 %v1196
    %1561 = vmatprep.subr.bf16.mxu0 %v1187
    %1562 = vmatpush1.bf16.msra.mxu0 %v1186
    %1563 = vmatprep.subr.bf16.mxu0 0
    %1564 = vmatpush2.bf16.msra.mxu0 0
    %1565 = vmatprep.subr.bf16.mxu0 0
    %1566 = vmatpush2.bf16.msra.mxu0 0
    %1567 = vmatprep.subr.bf16.mxu0 0
    %1568 = vmatpush2.bf16.msra.mxu0 0
    %1569 = vmatprep.subr.bf16.mxu0 0
    %1570 = vmatpush2.bf16.msra.mxu0 0
    %1571 = vmatprep.subr.bf16.mxu0 0
    %1572 = vmatpush2.bf16.msra.mxu0 0
    %1573 = vmatprep.subr.bf16.mxu0 0
    %1574 = vmatpush2.bf16.msra.mxu0 0
    %1575 = vmatprep.subr.bf16.mxu0 0
    %1576 = vmatpush2.bf16.msra.mxu0 0
    %1577 = vmatprep.subr.bf16.mxu0 0
    %1578 = vmatpush2.bf16.msra.mxu0 0
    %1579 = vmatprep.mubr.bf16.mxu0 0
    %1580 = vmatmul.mubr.bf16.gmra.mxu0 %v302
    %v1581 = vpop.f32.mrf.mxu0
    %v1582 = vadd.f32 %v1541, %v1581
    %v1583 = vpop.f32.mrf.mxu0
    %v1584 = vadd.f32 %v1543, %v1583
    %v1585 = vpop.f32.mrf.mxu0
    %v1586 = vpop.f32.mrf.mxu0
    %1587 = vdwg.mxu0
    %1588 = vmatprep.subr.bf16.mxu0 %v1099
    %1589 = vmatpush1.bf16.msra.mxu0 %v1098
    %1590 = vmatprep.subr.bf16.mxu0 %v1089
    %1591 = vmatpush1.bf16.msra.mxu0 %v1088
    %1592 = vmatprep.subr.bf16.mxu0 %v1079
    %1593 = vmatpush1.bf16.msra.mxu0 %v1078
    %1594 = vmatprep.subr.bf16.mxu0 %v1069
    %1595 = vmatpush1.bf16.msra.mxu0 %v1068
    %1596 = vmatprep.subr.bf16.mxu0 %v1059
    %1597 = vmatpush1.bf16.msra.mxu0 %v1058
    %1598 = vmatprep.subr.bf16.mxu0 %v1049
    %1599 = vmatpush1.bf16.msra.mxu0 %v1048
    %1600 = vmatprep.subr.bf16.mxu0 %v1039
    %1601 = vmatpush1.bf16.msra.mxu0 %v1038
    %1602 = vmatprep.subr.bf16.mxu0 %v1029
    %1603 = vmatpush1.bf16.msra.mxu0 %v1028
    %1604 = vmatprep.subr.bf16.mxu0 %v1179
    %1605 = vmatpush2.bf16.msra.mxu0 %v1178
    %1606 = vmatprep.subr.bf16.mxu0 %v1169
    %1607 = vmatpush2.bf16.msra.mxu0 %v1168
    %1608 = vmatprep.subr.bf16.mxu0 %v1159
    %1609 = vmatpush2.bf16.msra.mxu0 %v1158
    %1610 = vmatprep.subr.bf16.mxu0 %v1149
    %1611 = vmatpush2.bf16.msra.mxu0 %v1148
    %1612 = vmatprep.subr.bf16.mxu0 %v1139
    %1613 = vmatpush2.bf16.msra.mxu0 %v1138
    %1614 = vmatprep.subr.bf16.mxu0 %v1129
    %1615 = vmatpush2.bf16.msra.mxu0 %v1128
    %1616 = vmatprep.subr.bf16.mxu0 %v1119
    %1617 = vmatpush2.bf16.msra.mxu0 %v1118
    %1618 = vmatprep.subr.bf16.mxu0 %v1109
    %1619 = vmatpush2.bf16.msra.mxu0 %v1108
    %1620 = vmatprep.mubr.bf16.mxu0 %v301
    %1621 = vmatmul.mubr.bf16.gmra.mxu0 %v300
    %v1622 = vpop.f32.mrf.mxu0
    %v1623 = vadd.f32 0.0, %v1622
    %v1624 = vpop.f32.mrf.mxu0
    %v1625 = vadd.f32 0.0, %v1624
    %v1626 = vpop.f32.mrf.mxu0
    %v1627 = vpop.f32.mrf.mxu0
    %1628 = vdwg.mxu0
    %1629 = vmatprep.subr.bf16.mxu0 %v1259
    %1630 = vmatpush1.bf16.msra.mxu0 %v1258
    %1631 = vmatprep.subr.bf16.mxu0 %v1249
    %1632 = vmatpush1.bf16.msra.mxu0 %v1248
    %1633 = vmatprep.subr.bf16.mxu0 %v1239
    %1634 = vmatpush1.bf16.msra.mxu0 %v1238
    %1635 = vmatprep.subr.bf16.mxu0 %v1229
    %1636 = vmatpush1.bf16.msra.mxu0 %v1228
    %1637 = vmatprep.subr.bf16.mxu0 %v1219
    %1638 = vmatpush1.bf16.msra.mxu0 %v1218
    %1639 = vmatprep.subr.bf16.mxu0 %v1209
    %1640 = vmatpush1.bf16.msra.mxu0 %v1208
    %1641 = vmatprep.subr.bf16.mxu0 %v1199
    %1642 = vmatpush1.bf16.msra.mxu0 %v1198
    %1643 = vmatprep.subr.bf16.mxu0 %v1189
    %1644 = vmatpush1.bf16.msra.mxu0 %v1188
    %1645 = vmatprep.subr.bf16.mxu0 0
    %1646 = vmatpush2.bf16.msra.mxu0 0
    %1647 = vmatprep.subr.bf16.mxu0 0
    %1648 = vmatpush2.bf16.msra.mxu0 0
    %1649 = vmatprep.subr.bf16.mxu0 0
    %1650 = vmatpush2.bf16.msra.mxu0 0
    %1651 = vmatprep.subr.bf16.mxu0 0
    %1652 = vmatpush2.bf16.msra.mxu0 0
    %1653 = vmatprep.subr.bf16.mxu0 0
    %1654 = vmatpush2.bf16.msra.mxu0 0
    %1655 = vmatprep.subr.bf16.mxu0 0
    %1656 = vmatpush2.bf16.msra.mxu0 0
    %1657 = vmatprep.subr.bf16.mxu0 0
    %1658 = vmatpush2.bf16.msra.mxu0 0
    %1659 = vmatprep.subr.bf16.mxu0 0
    %1660 = vmatpush2.bf16.msra.mxu0 0
    %1661 = vmatprep.mubr.bf16.mxu0 0
    %1662 = vmatmul.mubr.bf16.gmra.mxu0 %v302
    %v1663 = vpop.f32.mrf.mxu0
    %v1664 = vadd.f32 %v1623, %v1663
    %v1665 = vpop.f32.mrf.mxu0
    %v1666 = vadd.f32 %v1625, %v1665
    %v1667 = vpop.f32.mrf.mxu0
    %v1668 = vpop.f32.mrf.mxu0
    %1669 = vdwg.mxu0
    %1670 = vmatprep.subr.bf16.mxu0 %v1101
    %1671 = vmatpush1.bf16.msra.mxu0 %v1100
    %1672 = vmatprep.subr.bf16.mxu0 %v1091
    %1673 = vmatpush1.bf16.msra.mxu0 %v1090
    %1674 = vmatprep.subr.bf16.mxu0 %v1081
    %1675 = vmatpush1.bf16.msra.mxu0 %v1080
    %1676 = vmatprep.subr.bf16.mxu0 %v1071
    %1677 = vmatpush1.bf16.msra.mxu0 %v1070
    %1678 = vmatprep.subr.bf16.mxu0 %v1061
    %1679 = vmatpush1.bf16.msra.mxu0 %v1060
    %1680 = vmatprep.subr.bf16.mxu0 %v1051
    %1681 = vmatpush1.bf16.msra.mxu0 %v1050
    %1682 = vmatprep.subr.bf16.mxu0 %v1041
    %1683 = vmatpush1.bf16.msra.mxu0 %v1040
    %1684 = vmatprep.subr.bf16.mxu0 %v1031
    %1685 = vmatpush1.bf16.msra.mxu0 %v1030
    %1686 = vmatprep.subr.bf16.mxu0 %v1181
    %1687 = vmatpush2.bf16.msra.mxu0 %v1180
    %1688 = vmatprep.subr.bf16.mxu0 %v1171
    %1689 = vmatpush2.bf16.msra.mxu0 %v1170
    %1690 = vmatprep.subr.bf16.mxu0 %v1161
    %1691 = vmatpush2.bf16.msra.mxu0 %v1160
    %1692 = vmatprep.subr.bf16.mxu0 %v1151
    %1693 = vmatpush2.bf16.msra.mxu0 %v1150
    %1694 = vmatprep.subr.bf16.mxu0 %v1141
    %1695 = vmatpush2.bf16.msra.mxu0 %v1140
    %1696 = vmatprep.subr.bf16.mxu0 %v1131
    %1697 = vmatpush2.bf16.msra.mxu0 %v1130
    %1698 = vmatprep.subr.bf16.mxu0 %v1121
    %1699 = vmatpush2.bf16.msra.mxu0 %v1120
    %1700 = vmatprep.subr.bf16.mxu0 %v1111
    %1701 = vmatpush2.bf16.msra.mxu0 %v1110
    %1702 = vmatprep.mubr.bf16.mxu0 %v301
    %1703 = vmatmul.mubr.bf16.gmra.mxu0 %v300
    %v1704 = vpop.f32.mrf.mxu0
    %v1705 = vadd.f32 0.0, %v1704
    %v1706 = vpop.f32.mrf.mxu0
    %v1707 = vadd.f32 0.0, %v1706
    %v1708 = vpop.f32.mrf.mxu0
    %v1709 = vpop.f32.mrf.mxu0
    %1710 = vdwg.mxu0
    %1711 = vmatprep.subr.bf16.mxu0 %v1261
    %1712 = vmatpush1.bf16.msra.mxu0 %v1260
    %1713 = vmatprep.subr.bf16.mxu0 %v1251
    %1714 = vmatpush1.bf16.msra.mxu0 %v1250
    %1715 = vmatprep.subr.bf16.mxu0 %v1241
    %1716 = vmatpush1.bf16.msra.mxu0 %v1240
    %1717 = vmatprep.subr.bf16.mxu0 %v1231
    %1718 = vmatpush1.bf16.msra.mxu0 %v1230
    %1719 = vmatprep.subr.bf16.mxu0 %v1221
    %1720 = vmatpush1.bf16.msra.mxu0 %v1220
    %1721 = vmatprep.subr.bf16.mxu0 %v1211
    %1722 = vmatpush1.bf16.msra.mxu0 %v1210
    %1723 = vmatprep.subr.bf16.mxu0 %v1201
    %1724 = vmatpush1.bf16.msra.mxu0 %v1200
    %1725 = vmatprep.subr.bf16.mxu0 %v1191
    %1726 = vmatpush1.bf16.msra.mxu0 %v1190
    %1727 = vmatprep.subr.bf16.mxu0 0
    %1728 = vmatpush2.bf16.msra.mxu0 0
    %1729 = vmatprep.subr.bf16.mxu0 0
    %1730 = vmatpush2.bf16.msra.mxu0 0
    %1731 = vmatprep.subr.bf16.mxu0 0
    %1732 = vmatpush2.bf16.msra.mxu0 0
    %1733 = vmatprep.subr.bf16.mxu0 0
    %1734 = vmatpush2.bf16.msra.mxu0 0
    %1735 = vmatprep.subr.bf16.mxu0 0
    %1736 = vmatpush2.bf16.msra.mxu0 0
    %1737 = vmatprep.subr.bf16.mxu0 0
    %1738 = vmatpush2.bf16.msra.mxu0 0
    %1739 = vmatprep.subr.bf16.mxu0 0
    %1740 = vmatpush2.bf16.msra.mxu0 0
    %1741 = vmatprep.subr.bf16.mxu0 0
    %1742 = vmatpush2.bf16.msra.mxu0 0
    %1743 = vmatprep.mubr.bf16.mxu0 0
    %1744 = vmatmul.mubr.bf16.gmra.mxu0 %v302
    %v1745 = vpop.f32.mrf.mxu0
    %v1746 = vadd.f32 %v1705, %v1745
    %v1747 = vpop.f32.mrf.mxu0
    %v1748 = vadd.f32 %v1707, %v1747
    %v1749 = vpop.f32.mrf.mxu0
    %v1750 = vpop.f32.mrf.mxu0
    %1751 = vdwg.mxu0
    %1752 = vmatprep.subr.bf16.mxu0 %v1103
    %1753 = vmatpush1.bf16.msra.mxu0 %v1102
    %1754 = vmatprep.subr.bf16.mxu0 %v1093
    %1755 = vmatpush1.bf16.msra.mxu0 %v1092
    %1756 = vmatprep.subr.bf16.mxu0 %v1083
    %1757 = vmatpush1.bf16.msra.mxu0 %v1082
    %1758 = vmatprep.subr.bf16.mxu0 %v1073
    %1759 = vmatpush1.bf16.msra.mxu0 %v1072
    %1760 = vmatprep.subr.bf16.mxu0 %v1063
    %1761 = vmatpush1.bf16.msra.mxu0 %v1062
    %1762 = vmatprep.subr.bf16.mxu0 %v1053
    %1763 = vmatpush1.bf16.msra.mxu0 %v1052
    %1764 = vmatprep.subr.bf16.mxu0 %v1043
    %1765 = vmatpush1.bf16.msra.mxu0 %v1042
    %1766 = vmatprep.subr.bf16.mxu0 %v1033
    %1767 = vmatpush1.bf16.msra.mxu0 %v1032
    %1768 = vmatprep.subr.bf16.mxu0 %v1183
    %1769 = vmatpush2.bf16.msra.mxu0 %v1182
    %1770 = vmatprep.subr.bf16.mxu0 %v1173
    %1771 = vmatpush2.bf16.msra.mxu0 %v1172
    %1772 = vmatprep.subr.bf16.mxu0 %v1163
    %1773 = vmatpush2.bf16.msra.mxu0 %v1162
    %1774 = vmatprep.subr.bf16.mxu0 %v1153
    %1775 = vmatpush2.bf16.msra.mxu0 %v1152
    %1776 = vmatprep.subr.bf16.mxu0 %v1143
    %1777 = vmatpush2.bf16.msra.mxu0 %v1142
    %1778 = vmatprep.subr.bf16.mxu0 %v1133
    %1779 = vmatpush2.bf16.msra.mxu0 %v1132
    %1780 = vmatprep.subr.bf16.mxu0 %v1123
    %1781 = vmatpush2.bf16.msra.mxu0 %v1122
    %1782 = vmatprep.subr.bf16.mxu0 %v1113
    %1783 = vmatpush2.bf16.msra.mxu0 %v1112
    %1784 = vmatprep.mubr.bf16.mxu0 %v301
    %1785 = vmatmul.mubr.bf16.gmra.mxu0 %v300
    %v1786 = vpop.f32.mrf.mxu0
    %v1787 = vadd.f32 0.0, %v1786
    %v1788 = vpop.f32.mrf.mxu0
    %v1789 = vadd.f32 0.0, %v1788
    %v1790 = vpop.f32.mrf.mxu0
    %v1791 = vpop.f32.mrf.mxu0
    %1792 = vdwg.mxu0
    %1793 = vmatprep.subr.bf16.mxu0 %v1263
    %1794 = vmatpush1.bf16.msra.mxu0 %v1262
    %1795 = vmatprep.subr.bf16.mxu0 %v1253
    %1796 = vmatpush1.bf16.msra.mxu0 %v1252
    %1797 = vmatprep.subr.bf16.mxu0 %v1243
    %1798 = vmatpush1.bf16.msra.mxu0 %v1242
    %1799 = vmatprep.subr.bf16.mxu0 %v1233
    %1800 = vmatpush1.bf16.msra.mxu0 %v1232
    %1801 = vmatprep.subr.bf16.mxu0 %v1223
    %1802 = vmatpush1.bf16.msra.mxu0 %v1222
    %1803 = vmatprep.subr.bf16.mxu0 %v1213
    %1804 = vmatpush1.bf16.msra.mxu0 %v1212
    %1805 = vmatprep.subr.bf16.mxu0 %v1203
    %1806 = vmatpush1.bf16.msra.mxu0 %v1202
    %1807 = vmatprep.subr.bf16.mxu0 %v1193
    %1808 = vmatpush1.bf16.msra.mxu0 %v1192
    %1809 = vmatprep.subr.bf16.mxu0 0
    %1810 = vmatpush2.bf16.msra.mxu0 0
    %1811 = vmatprep.subr.bf16.mxu0 0
    %1812 = vmatpush2.bf16.msra.mxu0 0
    %1813 = vmatprep.subr.bf16.mxu0 0
    %1814 = vmatpush2.bf16.msra.mxu0 0
    %1815 = vmatprep.subr.bf16.mxu0 0
    %1816 = vmatpush2.bf16.msra.mxu0 0
    %1817 = vmatprep.subr.bf16.mxu0 0
    %1818 = vmatpush2.bf16.msra.mxu0 0
    %1819 = vmatprep.subr.bf16.mxu0 0
    %1820 = vmatpush2.bf16.msra.mxu0 0
    %1821 = vmatprep.subr.bf16.mxu0 0
    %1822 = vmatpush2.bf16.msra.mxu0 0
    %1823 = vmatprep.subr.bf16.mxu0 0
    %1824 = vmatpush2.bf16.msra.mxu0 0
    %1825 = vmatprep.mubr.bf16.mxu0 0
    %1826 = vmatmul.mubr.bf16.gmra.mxu0 %v302
    %v1827 = vpop.f32.mrf.mxu0
    %v1828 = vadd.f32 %v1787, %v1827
    %v1829 = vpop.f32.mrf.mxu0
    %v1830 = vadd.f32 %v1789, %v1829
    %v1831 = vpop.f32.mrf.mxu0
    %v1832 = vpop.f32.mrf.mxu0
    %1833 = vdwg.mxu0
    %1834 = vmatprep.subr.bf16.mxu0 %v1105
    %1835 = vmatpush1.bf16.msra.mxu0 %v1104
    %1836 = vmatprep.subr.bf16.mxu0 %v1095
    %1837 = vmatpush1.bf16.msra.mxu0 %v1094
    %1838 = vmatprep.subr.bf16.mxu0 %v1085
    %1839 = vmatpush1.bf16.msra.mxu0 %v1084
    %1840 = vmatprep.subr.bf16.mxu0 %v1075
    %1841 = vmatpush1.bf16.msra.mxu0 %v1074
    %1842 = vmatprep.subr.bf16.mxu0 %v1065
    %1843 = vmatpush1.bf16.msra.mxu0 %v1064
    %1844 = vmatprep.subr.bf16.mxu0 %v1055
    %1845 = vmatpush1.bf16.msra.mxu0 %v1054
    %1846 = vmatprep.subr.bf16.mxu0 %v1045
    %1847 = vmatpush1.bf16.msra.mxu0 %v1044
    %1848 = vmatprep.subr.bf16.mxu0 %v1035
    %1849 = vmatpush1.bf16.msra.mxu0 %v1034
    %1850 = vmatprep.subr.bf16.mxu0 %v1185
    %1851 = vmatpush2.bf16.msra.mxu0 %v1184
    %1852 = vmatprep.subr.bf16.mxu0 %v1175
    %1853 = vmatpush2.bf16.msra.mxu0 %v1174
    %1854 = vmatprep.subr.bf16.mxu0 %v1165
    %1855 = vmatpush2.bf16.msra.mxu0 %v1164
    %1856 = vmatprep.subr.bf16.mxu0 %v1155
    %1857 = vmatpush2.bf16.msra.mxu0 %v1154
    %1858 = vmatprep.subr.bf16.mxu0 %v1145
    %1859 = vmatpush2.bf16.msra.mxu0 %v1144
    %1860 = vmatprep.subr.bf16.mxu0 %v1135
    %1861 = vmatpush2.bf16.msra.mxu0 %v1134
    %1862 = vmatprep.subr.bf16.mxu0 %v1125
    %1863 = vmatpush2.bf16.msra.mxu0 %v1124
    %1864 = vmatprep.subr.bf16.mxu0 %v1115
    %1865 = vmatpush2.bf16.msra.mxu0 %v1114
    %1866 = vmatprep.mubr.bf16.mxu0 %v301
    %1867 = vmatmul.mubr.bf16.gmra.mxu0 %v300
    %v1868 = vpop.f32.mrf.mxu0
    %v1869 = vadd.f32 0.0, %v1868
    %v1870 = vpop.f32.mrf.mxu0
    %v1871 = vadd.f32 0.0, %v1870
    %v1872 = vpop.f32.mrf.mxu0
    %v1873 = vpop.f32.mrf.mxu0
    %1874 = vdwg.mxu0
    %1875 = vmatprep.subr.bf16.mxu0 %v1265
    %1876 = vmatpush1.bf16.msra.mxu0 %v1264
    %1877 = vmatprep.subr.bf16.mxu0 %v1255
    %1878 = vmatpush1.bf16.msra.mxu0 %v1254
    %1879 = vmatprep.subr.bf16.mxu0 %v1245
    %1880 = vmatpush1.bf16.msra.mxu0 %v1244
    %1881 = vmatprep.subr.bf16.mxu0 %v1235
    %1882 = vmatpush1.bf16.msra.mxu0 %v1234
    %1883 = vmatprep.subr.bf16.mxu0 %v1225
    %1884 = vmatpush1.bf16.msra.mxu0 %v1224
    %1885 = vmatprep.subr.bf16.mxu0 %v1215
    %1886 = vmatpush1.bf16.msra.mxu0 %v1214
    %1887 = vmatprep.subr.bf16.mxu0 %v1205
    %1888 = vmatpush1.bf16.msra.mxu0 %v1204
    %1889 = vmatprep.subr.bf16.mxu0 %v1195
    %1890 = vmatpush1.bf16.msra.mxu0 %v1194
    %1891 = vmatprep.subr.bf16.mxu0 0
    %1892 = vmatpush2.bf16.msra.mxu0 0
    %1893 = vmatprep.subr.bf16.mxu0 0
    %1894 = vmatpush2.bf16.msra.mxu0 0
    %1895 = vmatprep.subr.bf16.mxu0 0
    %1896 = vmatpush2.bf16.msra.mxu0 0
    %1897 = vmatprep.subr.bf16.mxu0 0
    %1898 = vmatpush2.bf16.msra.mxu0 0
    %1899 = vmatprep.subr.bf16.mxu0 0
    %1900 = vmatpush2.bf16.msra.mxu0 0
    %1901 = vmatprep.subr.bf16.mxu0 0
    %1902 = vmatpush2.bf16.msra.mxu0 0
    %1903 = vmatprep.subr.bf16.mxu0 0
    %1904 = vmatpush2.bf16.msra.mxu0 0
    %1905 = vmatprep.subr.bf16.mxu0 0
    %1906 = vmatpush2.bf16.msra.mxu0 0
    %1907 = vmatprep.mubr.bf16.mxu0 0
    %1908 = vmatmul.mubr.bf16.gmra.mxu0 %v302
    %v1909 = vpop.f32.mrf.mxu0
    %v1910 = vadd.f32 %v1869, %v1909
    %v1911 = vpop.f32.mrf.mxu0
    %v1912 = vadd.f32 %v1871, %v1911
    %v1913 = vpop.f32.mrf.mxu0
    %v1914 = vpop.f32.mrf.mxu0
    %1915 = vdwg.mxu0
    %v1916 = vadd.f32 %v43, %v1582
    %v1917 = vadd.f32 %v44, %v1584
    %v1918 = vadd.f32 %v45, %v1664
    %v1919 = vadd.f32 %v46, %v1666
    %v1920 = vadd.f32 %v47, %v1746
    %v1921 = vadd.f32 %v48, %v1748
    %v1922 = vadd.f32 %v49, %v1828
    %v1923 = vadd.f32 %v50, %v1830
    %v1924 = vadd.f32 %v51, %v1910
    %v1925 = vadd.f32 %v52, %v1912
    %1926 = vst [vmem:[#allocation2] sm:$0xff] %v1916
    %1927 = vst [vmem:[#allocation2 + $0x8] sm:$0xff] %v1917
    %1928 = vst [vmem:[#allocation2 + $0x10] sm:$0xff] %v1918
    %1929 = vst [vmem:[#allocation2 + $0x18] sm:$0xff] %v1919
    %1930 = vst [vmem:[#allocation2 + $0x20] sm:$0xff] %v1920
    %1931 = vst [vmem:[#allocation2 + $0x28] sm:$0xff] %v1921
    %1932 = vst [vmem:[#allocation2 + $0x30] sm:$0xff] %v1922
    %1933 = vst [vmem:[#allocation2 + $0x38] sm:$0xff] %v1923
    %1934 = vst [vmem:[#allocation2 + $0x40] sm:$0xff] %v1924
    %1935 = vst [vmem:[#allocation2 + $0x48] sm:$0xff] %v1925
    // Predicated region
    $region22: #{_time_embedding.2} parent=1 // pred_check
      %p1936 = pneg %p29
    $region23: #{_time_embedding.2} parent=1 // pred_check_branch
      %1938 = sbr.rel (%p1936) target = $region25
    $region24: #{_time_embedding.2} parent=1 // pred_region
      %v1939 = vld [vmem:[#allocation2] sm:$0xff]
      %v1940 = vld [vmem:[#allocation2 + $0x8] sm:$0xff]
      %v1941 = vld [vmem:[#allocation2 + $0x10] sm:$0xff]
      %v1942 = vld [vmem:[#allocation2 + $0x18] sm:$0xff]
      %v1943 = vld [vmem:[#allocation2 + $0x20] sm:$0xff]
      %v1944 = vld [vmem:[#allocation2 + $0x28] sm:$0xff]
      %v1945 = vld [vmem:[#allocation2 + $0x30] sm:$0xff]
      %v1946 = vld [vmem:[#allocation2 + $0x38] sm:$0xff]
      %v1947 = vld [vmem:[#allocation2 + $0x40] sm:$0xff]
      %v1948 = vld [vmem:[#allocation2 + $0x48] sm:$0xff]
      %v1949 = vld [vmem:[%s2] sm:$0xff]
      %v1950 = vld [vmem:[%s2 + $0x8] sm:$0x3]
      %v1953 = vlaneseq
      %v1954 = vshrl.u32 %v1953, 7
      %v1955 = vsub.s32 0, %v1954
      %v1956 = vrot.slane %v1949, %v1955
      %v1957 = vlaneseq
      %v1958 = vshrl.u32 %v1957, 7
      %v1959 = vsub.s32 1, %v1958
      %v1960 = vrot.slane %v1949, %v1959
      %v1961 = vlaneseq
      %v1962 = vshrl.u32 %v1961, 7
      %v1963 = vsub.s32 2, %v1962
      %v1964 = vrot.slane %v1949, %v1963
      %v1965 = vlaneseq
      %v1966 = vshrl.u32 %v1965, 7
      %v1967 = vsub.s32 3, %v1966
      %v1968 = vrot.slane %v1949, %v1967
      %v1969 = vlaneseq
      %v1970 = vshrl.u32 %v1969, 7
      %v1971 = vsub.s32 4, %v1970
      %v1972 = vrot.slane %v1949, %v1971
      %v1973 = vlaneseq
      %v1974 = vshrl.u32 %v1973, 7
      %v1975 = vsub.s32 5, %v1974
      %v1976 = vrot.slane %v1949, %v1975
      %v1977 = vlaneseq
      %v1978 = vshrl.u32 %v1977, 7
      %v1979 = vsub.s32 6, %v1978
      %v1980 = vrot.slane %v1949, %v1979
      %v1981 = vlaneseq
      %v1982 = vshrl.u32 %v1981, 7
      %v1983 = vsub.s32 7, %v1982
      %v1984 = vrot.slane %v1949, %v1983
      %v1985 = vlaneseq
      %v1986 = vshrl.u32 %v1985, 7
      %v1987 = vsub.s32 0, %v1986
      %v1988 = vrot.slane %v1950, %v1987
      %v1989 = vlaneseq
      %v1990 = vshrl.u32 %v1989, 7
      %v1991 = vsub.s32 1, %v1990
      %v1992 = vrot.slane %v1950, %v1991
      %v2003 = vadd.f32 %v1939, %v1956
      %v2004 = vadd.f32 %v1940, %v1960
      %v2005 = vadd.f32 %v1941, %v1964
      %v2006 = vadd.f32 %v1942, %v1968
      %v2007 = vadd.f32 %v1943, %v1972
      %v2008 = vadd.f32 %v1944, %v1976
      %v2009 = vadd.f32 %v1945, %v1980
      %v2010 = vadd.f32 %v1946, %v1984
      %v2011 = vadd.f32 %v1947, %v1988
      %v2012 = vadd.f32 %v1948, %v1992
      %v2013 = vxor.u32 %v2003, 2147483648
      %v2014 = vxor.u32 %v2004, 2147483648
      %v2015 = vxor.u32 %v2005, 2147483648
      %v2016 = vxor.u32 %v2006, 2147483648
      %v2017 = vxor.u32 %v2007, 2147483648
      %v2018 = vxor.u32 %v2008, 2147483648
      %v2019 = vxor.u32 %v2009, 2147483648
      %v2020 = vxor.u32 %v2010, 2147483648
      %v2021 = vxor.u32 %v2011, 2147483648
      %v2022 = vxor.u32 %v2012, 2147483648
      %v2023 = vmul.f32 %v2013, 1.442695
      %v2024 = vpow.pop %v2023
      %v2025 = vmul.f32 %v2014, 1.442695
      %v2026 = vpow.pop %v2025
      %v2027 = vmul.f32 %v2015, 1.442695
      %v2028 = vpow.pop %v2027
      %v2029 = vmul.f32 %v2016, 1.442695
      %v2030 = vpow.pop %v2029
      %v2031 = vmul.f32 %v2017, 1.442695
      %v2032 = vpow.pop %v2031
      %v2033 = vmul.f32 %v2018, 1.442695
      %v2034 = vpow.pop %v2033
      %v2035 = vmul.f32 %v2019, 1.442695
      %v2036 = vpow.pop %v2035
      %v2037 = vmul.f32 %v2020, 1.442695
      %v2038 = vpow.pop %v2037
      %v2039 = vmul.f32 %v2021, 1.442695
      %v2040 = vpow.pop %v2039
      %v2041 = vmul.f32 %v2022, 1.442695
      %v2042 = vpow.pop %v2041
      %v2043 = vadd.f32 %v2024, 1.0
      %v2044 = vadd.f32 %v2026, 1.0
      %v2045 = vadd.f32 %v2028, 1.0
      %v2046 = vadd.f32 %v2030, 1.0
      %v2047 = vadd.f32 %v2032, 1.0
      %v2048 = vadd.f32 %v2034, 1.0
      %v2049 = vadd.f32 %v2036, 1.0
      %v2050 = vadd.f32 %v2038, 1.0
      %v2051 = vadd.f32 %v2040, 1.0
      %v2052 = vadd.f32 %v2042, 1.0
      %v2053 = vrcp.pop %v2043
      %v2054 = vmul.f32 1.0, %v2053
      %v2055 = vrcp.pop %v2044
      %v2056 = vmul.f32 1.0, %v2055
      %v2057 = vrcp.pop %v2045
      %v2058 = vmul.f32 1.0, %v2057
      %v2059 = vrcp.pop %v2046
      %v2060 = vmul.f32 1.0, %v2059
      %v2061 = vrcp.pop %v2047
      %v2062 = vmul.f32 1.0, %v2061
      %v2063 = vrcp.pop %v2048
      %v2064 = vmul.f32 1.0, %v2063
      %v2065 = vrcp.pop %v2049
      %v2066 = vmul.f32 1.0, %v2065
      %v2067 = vrcp.pop %v2050
      %v2068 = vmul.f32 1.0, %v2067
      %v2069 = vrcp.pop %v2051
      %v2070 = vmul.f32 1.0, %v2069
      %v2071 = vrcp.pop %v2052
      %v2072 = vmul.f32 1.0, %v2071
      %v2073 = vmul.f32 %v2003, %v2054
      %v2074 = vmul.f32 %v2004, %v2056
      %v2075 = vmul.f32 %v2005, %v2058
      %v2076 = vmul.f32 %v2006, %v2060
      %v2077 = vmul.f32 %v2007, %v2062
      %v2078 = vmul.f32 %v2008, %v2064
      %v2079 = vmul.f32 %v2009, %v2066
      %v2080 = vmul.f32 %v2010, %v2068
      %v2081 = vmul.f32 %v2011, %v2070
      %v2082 = vmul.f32 %v2012, %v2072
      %2083 = vst [vmem:[%s3] sm:$0xff] %v2073
      %2084 = vst [vmem:[%s3 + $0x8] sm:$0xff] %v2074
      %2085 = vst [vmem:[%s3 + $0x10] sm:$0xff] %v2075
      %2086 = vst [vmem:[%s3 + $0x18] sm:$0xff] %v2076
      %2087 = vst [vmem:[%s3 + $0x20] sm:$0xff] %v2077
      %2088 = vst [vmem:[%s3 + $0x28] sm:$0xff] %v2078
      %2089 = vst [vmem:[%s3 + $0x30] sm:$0xff] %v2079
      %2090 = vst [vmem:[%s3 + $0x38] sm:$0xff] %v2080
      %2091 = vst [vmem:[%s3 + $0x40] sm:$0xff] %v2081
      %2092 = vst [vmem:[%s3 + $0x48] sm:$0xff] %v2082
    $region25: #{_time_embedding.2} parent=1 // pred_fallthru
      _
    // Predicated region
    $region26: #{_time_embedding.2} parent=1 // pred_check
      _
    $region27: #{_time_embedding.2} parent=1 // pred_check_branch
      %2094 = sbr.rel (0) target = $region29
    $region28: #{_time_embedding.2} parent=1 // pred_region
      _
    $region29: #{_time_embedding.2} parent=1 // pred_fallthru
      _
    // Predicated region
    $region30: #{_time_embedding.2} parent=1 // pred_check
      _
    $region31: #{_time_embedding.2} parent=1 // pred_check_branch
      %2096 = sbr.rel (0) target = $region33
    $region32: #{_time_embedding.2} parent=1 // pred_region
      _
    $region33: #{_time_embedding.2} parent=1 // pred_fallthru
      _
    %2097 = vsyncpa [#allocation4], 1

</llo_original>
